<compile_context>
chip_gen: v7x
topology: tpu7x:2x2x1
jax: 0.10.0
libtpu: 0.0.40
codegen_flags: <defaults>
</compile_context>

<pallas_src>
import functools

import jax
import jax.numpy as jnp
import numpy as np
from jax.experimental import pallas as pl
from jax.experimental.pallas import tpu as pltpu


# ---------------------------------------------------------------------------
# Fused forward kernel (one grid step == one block of B images)
# ---------------------------------------------------------------------------
def _convnet_kernel(x_ref, w1_ref, b1_ref, w2_ref, b2_ref, g1_ref, bf1_ref,
                    wf2_ref, bf2_ref, wf3_ref, bf3_ref, out_ref,
                    c1_ref, p1_ref, c2_ref, f2_ref):
    f32 = jnp.float32
    bf16 = jnp.bfloat16
    B = out_ref.shape[0]                       # images per grid step

    # ---------------- conv1 (banded form) + bias + ReLU + 2x2 max-pool ----------------
    # Input rows are (h, b) pairs: row h*B + b holds image b's row h packed as
    # lane = w*4 + c (c padded 3->4).  Conv output row ho needs input rows ho+kh, so
    # each kh term is one [32B,128]@[128,256] matmul whose result is shifted by kh
    # rows before accumulation.  Output lanes: wq*8 + co for wo = 2*wq (even half,
    # lanes 0:128) and wo = 2*wq+1 (odd half, lanes 128:256).
    xf = x_ref[0]                                                   # [32*B, 128] bf16
    acc1 = None
    for kh in range(5):
        y = jnp.dot(xf, w1_ref[kh], preferred_element_type=f32)     # [32B, 256]
        y = y.reshape(32, B, 256)[kh:kh + 28]                        # row ho <- ho+kh
        acc1 = y if acc1 is None else acc1 + y
    a1 = jnp.maximum(acc1 + b1_ref[...], 0.0)                       # [28, B, 256]
    # W-direction pool: max(even-wo half, odd-wo half); lanes become wq*8 + co.
    c1_ref[...] = jnp.maximum(a1[:, :, 0:128], a1[:, :, 128:256])   # [28, B, 128]
    # H-direction pool: row pairs -> pooled1 rows hp = 0..13.  Rows 14,15 are zeroed
    # every step so the conv2 matmul never touches uninitialized VMEM.
    for hp in range(14):
        p1_ref[hp] = jnp.maximum(c1_ref[2 * hp], c1_ref[2 * hp + 1])
    p1_ref[14] = jnp.zeros((B, 128), f32)
    p1_ref[15] = jnp.zeros((B, 128), f32)

    # ---------------- conv2 (banded form) + bias + ReLU + 2x2 max-pool ----------------
    # pooled1 lane = wp*8 + ci; conv2 output lane = wq*16 + co2 (even / odd halves).
    p1f = p1_ref[...].reshape(16 * B, 128).astype(bf16)
    acc2 = None
    for kh in range(5):
        y = jnp.dot(p1f, w2_ref[kh], preferred_element_type=f32)    # [16B, 256]
        y = y.reshape(16, B, 256)[kh:kh + 10]
        acc2 = y if acc2 is None else acc2 + y
    a2 = jnp.maximum(acc2 + b2_ref[...], 0.0)                       # [10, B, 256]
    c2_ref[...] = jnp.maximum(a2[:, :, 0:128], a2[:, :, 128:256])   # [10, B, 128]
    # H pool + flatten straight into the fc1 layout: f2[b, hq*128 + wq*16 + co2].
    for hq in range(5):
        f2_ref[:, hq * 128:(hq + 1) * 128] = jnp.maximum(
            c2_ref[2 * hq], c2_ref[2 * hq + 1])

    # ---------------- fully-connected stack: real-M matmuls over the image block ----
    # Padded lanes of f2 are exact zeros (zero weight columns + zero bias -> relu(0)=0,
    # recomputed every step) and the matching g1 rows are zero, so padding never leaks.
    x2 = f2_ref[...].astype(bf16)                                   # [B, 640]
    y1 = jnp.maximum(
        jnp.dot(x2, g1_ref[...], preferred_element_type=f32) + bf1_ref[...], 0.0)
    y2 = jnp.maximum(
        jnp.dot(y1.astype(bf16), wf2_ref[...], preferred_element_type=f32)
        + bf2_ref[...], 0.0)
    y3 = (jnp.dot(y2.astype(bf16), wf3_ref[...], preferred_element_type=f32)
          + bf3_ref[...])
    out_ref[...] = y3                                               # [B, 128] (10 valid)


# ---------------------------------------------------------------------------
# One-time parameter packing: banded conv weights (kw folded into columns,
# even/odd wo in separate 128-lane halves), 128-padded FC weights, bf16 casts,
# torch .view(-1, 400) flatten order baked into the fc1 weight.
# ---------------------------------------------------------------------------
def prepare_params(p):
    f32 = np.float32
    conv1_w = np.asarray(p["conv1_w"], f32)     # [6, 3, 5, 5]  (OIHW)
    conv1_b = np.asarray(p["conv1_b"], f32)
    conv2_w = np.asarray(p["conv2_w"], f32)     # [16, 6, 5, 5]
    conv2_b = np.asarray(p["conv2_b"], f32)
    fc1_w = np.asarray(p["fc1_w"], f32)         # [400, 120]  (in, out)
    fc1_b = np.asarray(p["fc1_b"], f32)
    fc2_w = np.asarray(p["fc2_w"], f32)         # [120, 84]
    fc2_b = np.asarray(p["fc2_b"], f32)
    fc3_w = np.asarray(p["fc3_w"], f32)         # [84, 10]
    fc3_b = np.asarray(p["fc3_b"], f32)

    # conv1 banded weights: [5, 128, 256].  Input lane = w*4 + ci, output column
    # = half*128 + wq*8 + co with wo = 2*wq + half.
    w1 = np.zeros((5, 128, 256), f32)
    b1 = np.zeros((1, 256), f32)
    for kh in range(5):
        for half in range(2):
            for wq in range(14):
                wo = 2 * wq + half
                for co in range(6):
                    oc = half * 128 + wq * 8 + co
                    for kw in range(5):
                        w = wo + kw
                        for ci in range(3):
                            w1[kh, w * 4 + ci, oc] = conv1_w[co, ci, kh, kw]
    for half in range(2):
        for wq in range(14):
            for co in range(6):
                b1[0, half * 128 + wq * 8 + co] = conv1_b[co]

    # conv2 banded weights: [5, 128, 256].  Input lane = wp*8 + ci, output column
    # = half*128 + wq*16 + co2 with wo2 = 2*wq + half.
    w2 = np.zeros((5, 128, 256), f32)
    b2 = np.zeros((1, 256), f32)
    for kh in range(5):
        for half in range(2):
            for wq in range(5):
                wo = 2 * wq + half
                for co in range(16):
                    oc = half * 128 + wq * 16 + co
                    for kw in range(5):
                        wp = wo + kw
                        for ci in range(6):
                            w2[kh, wp * 8 + ci, oc] = conv2_w[co, ci, kh, kw]
    for half in range(2):
        for wq in range(5):
            for co in range(16):
                b2[0, half * 128 + wq * 16 + co] = conv2_b[co]

    # fc1: [640, 128], activation index = hq*128 + wq*16 + co2, torch flatten index
    # = co2*25 + hq*5 + wq.
    g1 = np.zeros((640, 128), f32)
    for hq in range(5):
        for wq in range(5):
            for co in range(16):
                g1[hq * 128 + wq * 16 + co, 0:120] = fc1_w[co * 25 + hq * 5 + wq, :]
    bf1 = np.zeros((1, 128), f32)
    bf1[0, :120] = fc1_b

    wf2 = np.zeros((128, 128), f32)
    wf2[:120, :84] = fc2_w
    bf2 = np.zeros((1, 128), f32)
    bf2[0, :84] = fc2_b
    wf3 = np.zeros((128, 128), f32)
    wf3[:84, :10] = fc3_w
    bf3 = np.zeros((1, 128), f32)
    bf3[0, :10] = fc3_b

    bf16 = jnp.bfloat16
    return dict(
        w1=jnp.asarray(w1, bf16), b1=jnp.asarray(b1),
        w2=jnp.asarray(w2, bf16), b2=jnp.asarray(b2),
        g1=jnp.asarray(g1, bf16), bf1=jnp.asarray(bf1),
        wf2=jnp.asarray(wf2, bf16), bf2=jnp.asarray(bf2),
        wf3=jnp.asarray(wf3, bf16), bf3=jnp.asarray(bf3),
    )


# ---------------------------------------------------------------------------
# Fused forward wrapper: ONE pallas_call, batch-blocked grid
# ---------------------------------------------------------------------------
@functools.partial(jax.jit, static_argnames=("block_b",))
def convnet_forward(prep, x, block_b=8):
    # x: [N, 3, 32, 32] NCHW (PyTorch convention) -> logits [N, 10]
    N = x.shape[0]
    assert x.shape[1:] == (3, 32, 32), x.shape
    n_pad = (-N) % block_b
    n_total = N + n_pad
    n_blocks = n_total // block_b

    # Host-side packing: NHWC, C 3->4, lane = w*4 + c, then group B images per block
    # so each grid step reads one contiguous [32*B, 128] bf16 slab (rows = h*B + b).
    xh = jnp.transpose(x, (0, 2, 3, 1))                          # [N, 32, 32, 3]
    xh = jnp.pad(xh, ((0, n_pad), (0, 0), (0, 0), (0, 1)))       # [Nt, 32, 32, 4]
    xp = xh.reshape(n_total, 32, 128).astype(jnp.bfloat16)       # lane = w*4 + c
    xp = xp.reshape(n_blocks, block_b, 32, 128).transpose(0, 2, 1, 3)
    xp = xp.reshape(n_blocks, 32 * block_b, 128)                 # rows = h*B + b

    wspec2 = lambda i: (0, 0)
    wspec3 = lambda i: (0, 0, 0)
    out = pl.pallas_call(
        _convnet_kernel,
        out_shape=jax.ShapeDtypeStruct((n_total, 128), jnp.float32),
        grid=(n_blocks,),
        in_specs=[
            pl.BlockSpec((1, 32 * block_b, 128), lambda i: (i, 0, 0)),  # image block
            pl.BlockSpec((5, 128, 256), wspec3),     # conv1 banded weights
            pl.BlockSpec((1, 256), wspec2),          # conv1 bias (packed lanes)
            pl.BlockSpec((5, 128, 256), wspec3),     # conv2 banded weights
            pl.BlockSpec((1, 256), wspec2),          # conv2 bias
            pl.BlockSpec((640, 128), wspec2),        # fc1 weights (flatten order baked in)
            pl.BlockSpec((1, 128), wspec2),          # fc1 bias
            pl.BlockSpec((128, 128), wspec2),        # fc2 weights
            pl.BlockSpec((1, 128), wspec2),          # fc2 bias
            pl.BlockSpec((128, 128), wspec2),        # fc3 weights
            pl.BlockSpec((1, 128), wspec2),          # fc3 bias
        ],
        out_specs=pl.BlockSpec((block_b, 128), lambda i: (i, 0)),
        scratch_shapes=[
            pltpu.VMEM((28, block_b, 128), jnp.float32),   # conv1, W-pooled
            pltpu.VMEM((16, block_b, 128), jnp.float32),   # pooled1 (rows 14,15 = 0)
            pltpu.VMEM((10, block_b, 128), jnp.float32),   # conv2, W-pooled
            pltpu.VMEM((block_b, 5 * 128), jnp.float32),   # flattened fc1 activations
        ],
        compiler_params=pltpu.CompilerParams(
            dimension_semantics=("parallel",)),
    )(xp, prep["w1"], prep["b1"], prep["w2"], prep["b2"], prep["g1"],
      prep["bf1"], prep["wf2"], prep["bf2"], prep["wf3"], prep["bf3"])
    return out[:N, :10]


# ---------------------------------------------------------------------------
# Parameters (deterministic synthetic init, PyTorch-like U(-1/sqrt(fan_in), ...))
# ---------------------------------------------------------------------------
def init_params(key):
    keys = jax.random.split(key, 10)

    def unif(k, shape, fan_in):
        bound = 1.0 / float(np.sqrt(fan_in))
        return jax.random.uniform(k, shape, jnp.float32, -bound, bound)

    return {
        "conv1_w": unif(keys[0], (6, 3, 5, 5), 3 * 5 * 5),
        "conv1_b": unif(keys[1], (6,), 3 * 5 * 5),
        "conv2_w": unif(keys[2], (16, 6, 5, 5), 6 * 5 * 5),
        "conv2_b": unif(keys[3], (16,), 6 * 5 * 5),
        # Linear weights stored as [in, out] (== torch weight.T)
        "fc1_w": unif(keys[4], (16 * 5 * 5, 120), 16 * 5 * 5),
        "fc1_b": unif(keys[5], (120,), 16 * 5 * 5),
        "fc2_w": unif(keys[6], (120, 84), 120),
        "fc2_b": unif(keys[7], (84,), 120),
        "fc3_w": unif(keys[8], (84, 10), 84),
        "fc3_b": unif(keys[9], (10,), 84),
    }


# ---------------------------------------------------------------------------
# Pure-JAX f32 reference (for correctness check)
# ---------------------------------------------------------------------------
def reference_forward(params, x):
    def conv(x, w, b):
        out = jax.lax.conv_general_dilated(
            x, w, (1, 1), "VALID", dimension_numbers=("NCHW", "OIHW", "NCHW"))
        return jax.nn.relu(out + b[None, :, None, None])

    def pool(x):
        return jax.lax.reduce_window(
            x, -jnp.inf, jax.lax.max, (1, 1, 2, 2), (1, 1, 2, 2), "VALID")

    x = pool(conv(x, params["conv1_w"], params["conv1_b"]))
    x = pool(conv(x, params["conv2_w"], params["conv2_b"]))
    x = x.reshape(x.shape[0], -1)
    x = jax.nn.relu(x @ params["fc1_w"] + params["fc1_b"])
    x = jax.nn.relu(x @ params["fc2_w"] + params["fc2_b"])
    return x @ params["fc3_w"] + params["fc3_b"]


if __name__ == "__main__":
    key = jax.random.PRNGKey(0)
    pkey, xkey = jax.random.split(key)
    params = init_params(pkey)
    prep = prepare_params(params)   # one-time weight packing (banded conv / padded FC)
    # Input spatial size must be 32x32 so the flatten matches fc1's 16*5*5 inputs.
    # N=16 with 8 images per grid step -> grid=(2,) (both v7x TensorCores get work).
    x = jax.random.normal(xkey, (16, 3, 32, 32), jnp.float32)

    out = jax.block_until_ready(convnet_forward(prep, x))
    ref = jax.block_until_ready(reference_forward(params, x))

    assert out.shape == (16, 10), out.shape
    err = np.max(np.abs(np.asarray(out) - np.asarray(ref)))
    assert np.allclose(np.asarray(out), np.asarray(ref), rtol=2e-2, atol=2e-2), err
    print("KERNEL_OK")
</pallas_src>

<mosaic_0001>
module attributes {stable_mosaic.version = 11 : i64} {
  func.func @_convnet_kernel(%arg0: i32, %arg1: memref<1x256x128xbf16, #tpu.memory_space<vmem>>, %arg2: memref<5x128x256xbf16, #tpu.memory_space<vmem>>, %arg3: memref<1x256xf32, #tpu.memory_space<vmem>>, %arg4: memref<5x128x256xbf16, #tpu.memory_space<vmem>>, %arg5: memref<1x256xf32, #tpu.memory_space<vmem>>, %arg6: memref<640x128xbf16, #tpu.memory_space<vmem>>, %arg7: memref<1x128xf32, #tpu.memory_space<vmem>>, %arg8: memref<128x128xbf16, #tpu.memory_space<vmem>>, %arg9: memref<1x128xf32, #tpu.memory_space<vmem>>, %arg10: memref<128x128xbf16, #tpu.memory_space<vmem>>, %arg11: memref<1x128xf32, #tpu.memory_space<vmem>>, %arg12: memref<8x128xf32, #tpu.memory_space<vmem>>, %arg13: memref<28x8x128xf32, #tpu.memory_space<vmem>>, %arg14: memref<16x8x128xf32, #tpu.memory_space<vmem>>, %arg15: memref<10x8x128xf32, #tpu.memory_space<vmem>>, %arg16: memref<8x640xf32, #tpu.memory_space<vmem>>) attributes {dimension_semantics = [#tpu.dimension_semantics<parallel>], iteration_bounds = array<i64: 2>, scalar_prefetch = 0 : i64, scratch_operands = 4 : i64, tpu.core_type = #tpu.core_type<tc>, window_params = [{transform_indices = @transform_0, window_bounds = array<i64: 1, 256, 128>}, {pipeline_mode = #tpu.pipeline_mode<synchronous>, transform_indices = @transform_1, window_bounds = array<i64: 5, 128, 256>}, {pipeline_mode = #tpu.pipeline_mode<synchronous>, transform_indices = @transform_2, window_bounds = array<i64: 1, 256>}, {pipeline_mode = #tpu.pipeline_mode<synchronous>, transform_indices = @transform_3, window_bounds = array<i64: 5, 128, 256>}, {pipeline_mode = #tpu.pipeline_mode<synchronous>, transform_indices = @transform_4, window_bounds = array<i64: 1, 256>}, {pipeline_mode = #tpu.pipeline_mode<synchronous>, transform_indices = @transform_5, window_bounds = array<i64: 640, 128>}, {pipeline_mode = #tpu.pipeline_mode<synchronous>, transform_indices = @transform_6, window_bounds = array<i64: 1, 128>}, {pipeline_mode = #tpu.pipeline_mode<synchronous>, transform_indices = @transform_7, window_bounds = array<i64: 128, 128>}, {pipeline_mode = #tpu.pipeline_mode<synchronous>, transform_indices = @transform_8, window_bounds = array<i64: 1, 128>}, {pipeline_mode = #tpu.pipeline_mode<synchronous>, transform_indices = @transform_9, window_bounds = array<i64: 128, 128>}, {pipeline_mode = #tpu.pipeline_mode<synchronous>, transform_indices = @transform_10, window_bounds = array<i64: 1, 128>}, {transform_indices = @transform_11, window_bounds = array<i64: 8, 128>}]} {
    %c0 = arith.constant 0 : index
    %c0_0 = arith.constant 0 : index
    %c0_1 = arith.constant 0 : index
    %0 = vector.load %arg1[%c0, %c0_0, %c0_1] : memref<1x256x128xbf16, #tpu.memory_space<vmem>>, vector<1x256x128xbf16>
    %1 = vector.shape_cast %0 : vector<1x256x128xbf16> to vector<256x128xbf16>
    %c0_2 = arith.constant 0 : index
    %c0_3 = arith.constant 0 : index
    %c0_4 = arith.constant 0 : index
    %2 = vector.load %arg2[%c0_2, %c0_3, %c0_4] : memref<5x128x256xbf16, #tpu.memory_space<vmem>>, vector<1x128x256xbf16>
    %3 = vector.shape_cast %2 : vector<1x128x256xbf16> to vector<128x256xbf16>
    %cst = arith.constant dense<0.000000e+00> : vector<256x256xf32>
    %4 = tpu.matmul %1, %3, %cst {dimension_numbers = #tpu.dot_dimension_numbers<[1], [0], [0], [1], [0, 0, 1, 1], [], []>} : vector<256x128xbf16>, vector<128x256xbf16>, vector<256x256xf32> -> vector<256x256xf32>
    %5 = vector.shape_cast %4 : vector<256x256xf32> to vector<32x8x256xf32>
    %6 = vector.extract_strided_slice %5 {offsets = [0, 0, 0], sizes = [28, 8, 256], strides = [1, 1, 1]} : vector<32x8x256xf32> to vector<28x8x256xf32>
    %c1 = arith.constant 1 : index
    %c0_5 = arith.constant 0 : index
    %c0_6 = arith.constant 0 : index
    %7 = vector.load %arg2[%c1, %c0_5, %c0_6] : memref<5x128x256xbf16, #tpu.memory_space<vmem>>, vector<1x128x256xbf16>
    %8 = vector.shape_cast %7 : vector<1x128x256xbf16> to vector<128x256xbf16>
    %cst_7 = arith.constant dense<0.000000e+00> : vector<256x256xf32>
    %9 = tpu.matmul %1, %8, %cst_7 {dimension_numbers = #tpu.dot_dimension_numbers<[1], [0], [0], [1], [0, 0, 1, 1], [], []>} : vector<256x128xbf16>, vector<128x256xbf16>, vector<256x256xf32> -> vector<256x256xf32>
    %10 = vector.shape_cast %9 : vector<256x256xf32> to vector<32x8x256xf32>
    %11 = vector.extract_strided_slice %10 {offsets = [1, 0, 0], sizes = [28, 8, 256], strides = [1, 1, 1]} : vector<32x8x256xf32> to vector<28x8x256xf32>
    %12 = arith.addf %6, %11 : vector<28x8x256xf32>
    %c2 = arith.constant 2 : index
    %c0_8 = arith.constant 0 : index
    %c0_9 = arith.constant 0 : index
    %13 = vector.load %arg2[%c2, %c0_8, %c0_9] : memref<5x128x256xbf16, #tpu.memory_space<vmem>>, vector<1x128x256xbf16>
    %14 = vector.shape_cast %13 : vector<1x128x256xbf16> to vector<128x256xbf16>
    %cst_10 = arith.constant dense<0.000000e+00> : vector<256x256xf32>
    %15 = tpu.matmul %1, %14, %cst_10 {dimension_numbers = #tpu.dot_dimension_numbers<[1], [0], [0], [1], [0, 0, 1, 1], [], []>} : vector<256x128xbf16>, vector<128x256xbf16>, vector<256x256xf32> -> vector<256x256xf32>
    %16 = vector.shape_cast %15 : vector<256x256xf32> to vector<32x8x256xf32>
    %17 = vector.extract_strided_slice %16 {offsets = [2, 0, 0], sizes = [28, 8, 256], strides = [1, 1, 1]} : vector<32x8x256xf32> to vector<28x8x256xf32>
    %18 = arith.addf %12, %17 : vector<28x8x256xf32>
    %c3 = arith.constant 3 : index
    %c0_11 = arith.constant 0 : index
    %c0_12 = arith.constant 0 : index
    %19 = vector.load %arg2[%c3, %c0_11, %c0_12] : memref<5x128x256xbf16, #tpu.memory_space<vmem>>, vector<1x128x256xbf16>
    %20 = vector.shape_cast %19 : vector<1x128x256xbf16> to vector<128x256xbf16>
    %cst_13 = arith.constant dense<0.000000e+00> : vector<256x256xf32>
    %21 = tpu.matmul %1, %20, %cst_13 {dimension_numbers = #tpu.dot_dimension_numbers<[1], [0], [0], [1], [0, 0, 1, 1], [], []>} : vector<256x128xbf16>, vector<128x256xbf16>, vector<256x256xf32> -> vector<256x256xf32>
    %22 = vector.shape_cast %21 : vector<256x256xf32> to vector<32x8x256xf32>
    %23 = vector.extract_strided_slice %22 {offsets = [3, 0, 0], sizes = [28, 8, 256], strides = [1, 1, 1]} : vector<32x8x256xf32> to vector<28x8x256xf32>
    %24 = arith.addf %18, %23 : vector<28x8x256xf32>
    %c4 = arith.constant 4 : index
    %c0_14 = arith.constant 0 : index
    %c0_15 = arith.constant 0 : index
    %25 = vector.load %arg2[%c4, %c0_14, %c0_15] : memref<5x128x256xbf16, #tpu.memory_space<vmem>>, vector<1x128x256xbf16>
    %26 = vector.shape_cast %25 : vector<1x128x256xbf16> to vector<128x256xbf16>
    %cst_16 = arith.constant dense<0.000000e+00> : vector<256x256xf32>
    %27 = tpu.matmul %1, %26, %cst_16 {dimension_numbers = #tpu.dot_dimension_numbers<[1], [0], [0], [1], [0, 0, 1, 1], [], []>} : vector<256x128xbf16>, vector<128x256xbf16>, vector<256x256xf32> -> vector<256x256xf32>
    %28 = vector.shape_cast %27 : vector<256x256xf32> to vector<32x8x256xf32>
    %29 = vector.extract_strided_slice %28 {offsets = [4, 0, 0], sizes = [28, 8, 256], strides = [1, 1, 1]} : vector<32x8x256xf32> to vector<28x8x256xf32>
    %30 = arith.addf %24, %29 : vector<28x8x256xf32>
    %c0_17 = arith.constant 0 : index
    %c0_18 = arith.constant 0 : index
    %31 = vector.load %arg3[%c0_17, %c0_18] : memref<1x256xf32, #tpu.memory_space<vmem>>, vector<1x256xf32>
    %32 = vector.shape_cast %31 : vector<1x256xf32> to vector<1x1x256xf32>
    %33 = vector.broadcast %32 : vector<1x1x256xf32> to vector<28x8x256xf32>
    %34 = arith.addf %30, %33 : vector<28x8x256xf32>
    %cst_19 = arith.constant 0.000000e+00 : f32
    %35 = vector.broadcast %cst_19 : f32 to vector<28x8x256xf32>
    %36 = arith.maximumf %34, %35 : vector<28x8x256xf32>
    %37 = vector.extract_strided_slice %36 {offsets = [0, 0, 0], sizes = [28, 8, 128], strides = [1, 1, 1]} : vector<28x8x256xf32> to vector<28x8x128xf32>
    %38 = vector.extract_strided_slice %36 {offsets = [0, 0, 128], sizes = [28, 8, 128], strides = [1, 1, 1]} : vector<28x8x256xf32> to vector<28x8x128xf32>
    %39 = arith.maximumf %37, %38 : vector<28x8x128xf32>
    %c0_20 = arith.constant 0 : index
    %c0_21 = arith.constant 0 : index
    %c0_22 = arith.constant 0 : index
    %40 = vector.load %arg13[%c0_20, %c0_21, %c0_22] : memref<28x8x128xf32, #tpu.memory_space<vmem>>, vector<28x8x128xf32>
    tpu.vector_store %arg13[%c0_20, %c0_21, %c0_22], %39 {strides = array<i32>} : memref<28x8x128xf32, #tpu.memory_space<vmem>>, vector<28x8x128xf32>,
    %c0_23 = arith.constant 0 : index
    %c0_24 = arith.constant 0 : index
    %c0_25 = arith.constant 0 : index
    %41 = vector.load %arg13[%c0_23, %c0_24, %c0_25] : memref<28x8x128xf32, #tpu.memory_space<vmem>>, vector<1x8x128xf32>
    %42 = vector.shape_cast %41 : vector<1x8x128xf32> to vector<8x128xf32>
    %c1_26 = arith.constant 1 : index
    %c0_27 = arith.constant 0 : index
    %c0_28 = arith.constant 0 : index
    %43 = vector.load %arg13[%c1_26, %c0_27, %c0_28] : memref<28x8x128xf32, #tpu.memory_space<vmem>>, vector<1x8x128xf32>
    %44 = vector.shape_cast %43 : vector<1x8x128xf32> to vector<8x128xf32>
    %45 = arith.maximumf %42, %44 : vector<8x128xf32>
    %c0_29 = arith.constant 0 : index
    %c0_30 = arith.constant 0 : index
    %c0_31 = arith.constant 0 : index
    %46 = vector.load %arg14[%c0_29, %c0_30, %c0_31] : memref<16x8x128xf32, #tpu.memory_space<vmem>>, vector<1x8x128xf32>
    %47 = vector.shape_cast %46 : vector<1x8x128xf32> to vector<8x128xf32>
    %48 = vector.shape_cast %45 : vector<8x128xf32> to vector<1x8x128xf32>
    tpu.vector_store %arg14[%c0_29, %c0_30, %c0_31], %48 {strides = array<i32>} : memref<16x8x128xf32, #tpu.memory_space<vmem>>, vector<1x8x128xf32>,
    %c2_32 = arith.constant 2 : index
    %c0_33 = arith.constant 0 : index
    %c0_34 = arith.constant 0 : index
    %49 = vector.load %arg13[%c2_32, %c0_33, %c0_34] : memref<28x8x128xf32, #tpu.memory_space<vmem>>, vector<1x8x128xf32>
    %50 = vector.shape_cast %49 : vector<1x8x128xf32> to vector<8x128xf32>
    %c3_35 = arith.constant 3 : index
    %c0_36 = arith.constant 0 : index
    %c0_37 = arith.constant 0 : index
    %51 = vector.load %arg13[%c3_35, %c0_36, %c0_37] : memref<28x8x128xf32, #tpu.memory_space<vmem>>, vector<1x8x128xf32>
    %52 = vector.shape_cast %51 : vector<1x8x128xf32> to vector<8x128xf32>
    %53 = arith.maximumf %50, %52 : vector<8x128xf32>
    %c1_38 = arith.constant 1 : index
    %c0_39 = arith.constant 0 : index
    %c0_40 = arith.constant 0 : index
    %54 = vector.load %arg14[%c1_38, %c0_39, %c0_40] : memref<16x8x128xf32, #tpu.memory_space<vmem>>, vector<1x8x128xf32>
    %55 = vector.shape_cast %54 : vector<1x8x128xf32> to vector<8x128xf32>
    %56 = vector.shape_cast %53 : vector<8x128xf32> to vector<1x8x128xf32>
    tpu.vector_store %arg14[%c1_38, %c0_39, %c0_40], %56 {strides = array<i32>} : memref<16x8x128xf32, #tpu.memory_space<vmem>>, vector<1x8x128xf32>,
    %c4_41 = arith.constant 4 : index
    %c0_42 = arith.constant 0 : index
    %c0_43 = arith.constant 0 : index
    %57 = vector.load %arg13[%c4_41, %c0_42, %c0_43] : memref<28x8x128xf32, #tpu.memory_space<vmem>>, vector<1x8x128xf32>
    %58 = vector.shape_cast %57 : vector<1x8x128xf32> to vector<8x128xf32>
    %c5 = arith.constant 5 : index
    %c0_44 = arith.constant 0 : index
    %c0_45 = arith.constant 0 : index
    %59 = vector.load %arg13[%c5, %c0_44, %c0_45] : memref<28x8x128xf32, #tpu.memory_space<vmem>>, vector<1x8x128xf32>
    %60 = vector.shape_cast %59 : vector<1x8x128xf32> to vector<8x128xf32>
    %61 = arith.maximumf %58, %60 : vector<8x128xf32>
    %c2_46 = arith.constant 2 : index
    %c0_47 = arith.constant 0 : index
    %c0_48 = arith.constant 0 : index
    %62 = vector.load %arg14[%c2_46, %c0_47, %c0_48] : memref<16x8x128xf32, #tpu.memory_space<vmem>>, vector<1x8x128xf32>
    %63 = vector.shape_cast %62 : vector<1x8x128xf32> to vector<8x128xf32>
    %64 = vector.shape_cast %61 : vector<8x128xf32> to vector<1x8x128xf32>
    tpu.vector_store %arg14[%c2_46, %c0_47, %c0_48], %64 {strides = array<i32>} : memref<16x8x128xf32, #tpu.memory_space<vmem>>, vector<1x8x128xf32>,
    %c6 = arith.constant 6 : index
    %c0_49 = arith.constant 0 : index
    %c0_50 = arith.constant 0 : index
    %65 = vector.load %arg13[%c6, %c0_49, %c0_50] : memref<28x8x128xf32, #tpu.memory_space<vmem>>, vector<1x8x128xf32>
    %66 = vector.shape_cast %65 : vector<1x8x128xf32> to vector<8x128xf32>
    %c7 = arith.constant 7 : index
    %c0_51 = arith.constant 0 : index
    %c0_52 = arith.constant 0 : index
    %67 = vector.load %arg13[%c7, %c0_51, %c0_52] : memref<28x8x128xf32, #tpu.memory_space<vmem>>, vector<1x8x128xf32>
    %68 = vector.shape_cast %67 : vector<1x8x128xf32> to vector<8x128xf32>
    %69 = arith.maximumf %66, %68 : vector<8x128xf32>
    %c3_53 = arith.constant 3 : index
    %c0_54 = arith.constant 0 : index
    %c0_55 = arith.constant 0 : index
    %70 = vector.load %arg14[%c3_53, %c0_54, %c0_55] : memref<16x8x128xf32, #tpu.memory_space<vmem>>, vector<1x8x128xf32>
    %71 = vector.shape_cast %70 : vector<1x8x128xf32> to vector<8x128xf32>
    %72 = vector.shape_cast %69 : vector<8x128xf32> to vector<1x8x128xf32>
    tpu.vector_store %arg14[%c3_53, %c0_54, %c0_55], %72 {strides = array<i32>} : memref<16x8x128xf32, #tpu.memory_space<vmem>>, vector<1x8x128xf32>,
    %c8 = arith.constant 8 : index
    %c0_56 = arith.constant 0 : index
    %c0_57 = arith.constant 0 : index
    %73 = vector.load %arg13[%c8, %c0_56, %c0_57] : memref<28x8x128xf32, #tpu.memory_space<vmem>>, vector<1x8x128xf32>
    %74 = vector.shape_cast %73 : vector<1x8x128xf32> to vector<8x128xf32>
    %c9 = arith.constant 9 : index
    %c0_58 = arith.constant 0 : index
    %c0_59 = arith.constant 0 : index
    %75 = vector.load %arg13[%c9, %c0_58, %c0_59] : memref<28x8x128xf32, #tpu.memory_space<vmem>>, vector<1x8x128xf32>
    %76 = vector.shape_cast %75 : vector<1x8x128xf32> to vector<8x128xf32>
    %77 = arith.maximumf %74, %76 : vector<8x128xf32>
    %c4_60 = arith.constant 4 : index
    %c0_61 = arith.constant 0 : index
    %c0_62 = arith.constant 0 : index
    %78 = vector.load %arg14[%c4_60, %c0_61, %c0_62] : memref<16x8x128xf32, #tpu.memory_space<vmem>>, vector<1x8x128xf32>
    %79 = vector.shape_cast %78 : vector<1x8x128xf32> to vector<8x128xf32>
    %80 = vector.shape_cast %77 : vector<8x128xf32> to vector<1x8x128xf32>
    tpu.vector_store %arg14[%c4_60, %c0_61, %c0_62], %80 {strides = array<i32>} : memref<16x8x128xf32, #tpu.memory_space<vmem>>, vector<1x8x128xf32>,
    %c10 = arith.constant 10 : index
    %c0_63 = arith.constant 0 : index
    %c0_64 = arith.constant 0 : index
    %81 = vector.load %arg13[%c10, %c0_63, %c0_64] : memref<28x8x128xf32, #tpu.memory_space<vmem>>, vector<1x8x128xf32>
    %82 = vector.shape_cast %81 : vector<1x8x128xf32> to vector<8x128xf32>
    %c11 = arith.constant 11 : index
    %c0_65 = arith.constant 0 : index
    %c0_66 = arith.constant 0 : index
    %83 = vector.load %arg13[%c11, %c0_65, %c0_66] : memref<28x8x128xf32, #tpu.memory_space<vmem>>, vector<1x8x128xf32>
    %84 = vector.shape_cast %83 : vector<1x8x128xf32> to vector<8x128xf32>
    %85 = arith.maximumf %82, %84 : vector<8x128xf32>
    %c5_67 = arith.constant 5 : index
    %c0_68 = arith.constant 0 : index
    %c0_69 = arith.constant 0 : index
    %86 = vector.load %arg14[%c5_67, %c0_68, %c0_69] : memref<16x8x128xf32, #tpu.memory_space<vmem>>, vector<1x8x128xf32>
    %87 = vector.shape_cast %86 : vector<1x8x128xf32> to vector<8x128xf32>
    %88 = vector.shape_cast %85 : vector<8x128xf32> to vector<1x8x128xf32>
    tpu.vector_store %arg14[%c5_67, %c0_68, %c0_69], %88 {strides = array<i32>} : memref<16x8x128xf32, #tpu.memory_space<vmem>>, vector<1x8x128xf32>,
    %c12 = arith.constant 12 : index
    %c0_70 = arith.constant 0 : index
    %c0_71 = arith.constant 0 : index
    %89 = vector.load %arg13[%c12, %c0_70, %c0_71] : memref<28x8x128xf32, #tpu.memory_space<vmem>>, vector<1x8x128xf32>
    %90 = vector.shape_cast %89 : vector<1x8x128xf32> to vector<8x128xf32>
    %c13 = arith.constant 13 : index
    %c0_72 = arith.constant 0 : index
    %c0_73 = arith.constant 0 : index
    %91 = vector.load %arg13[%c13, %c0_72, %c0_73] : memref<28x8x128xf32, #tpu.memory_space<vmem>>, vector<1x8x128xf32>
    %92 = vector.shape_cast %91 : vector<1x8x128xf32> to vector<8x128xf32>
    %93 = arith.maximumf %90, %92 : vector<8x128xf32>
    %c6_74 = arith.constant 6 : index
    %c0_75 = arith.constant 0 : index
    %c0_76 = arith.constant 0 : index
    %94 = vector.load %arg14[%c6_74, %c0_75, %c0_76] : memref<16x8x128xf32, #tpu.memory_space<vmem>>, vector<1x8x128xf32>
    %95 = vector.shape_cast %94 : vector<1x8x128xf32> to vector<8x128xf32>
    %96 = vector.shape_cast %93 : vector<8x128xf32> to vector<1x8x128xf32>
    tpu.vector_store %arg14[%c6_74, %c0_75, %c0_76], %96 {strides = array<i32>} : memref<16x8x128xf32, #tpu.memory_space<vmem>>, vector<1x8x128xf32>,
    %c14 = arith.constant 14 : index
    %c0_77 = arith.constant 0 : index
    %c0_78 = arith.constant 0 : index
    %97 = vector.load %arg13[%c14, %c0_77, %c0_78] : memref<28x8x128xf32, #tpu.memory_space<vmem>>, vector<1x8x128xf32>
    %98 = vector.shape_cast %97 : vector<1x8x128xf32> to vector<8x128xf32>
    %c15 = arith.constant 15 : index
    %c0_79 = arith.constant 0 : index
    %c0_80 = arith.constant 0 : index
    %99 = vector.load %arg13[%c15, %c0_79, %c0_80] : memref<28x8x128xf32, #tpu.memory_space<vmem>>, vector<1x8x128xf32>
    %100 = vector.shape_cast %99 : vector<1x8x128xf32> to vector<8x128xf32>
    %101 = arith.maximumf %98, %100 : vector<8x128xf32>
    %c7_81 = arith.constant 7 : index
    %c0_82 = arith.constant 0 : index
    %c0_83 = arith.constant 0 : index
    %102 = vector.load %arg14[%c7_81, %c0_82, %c0_83] : memref<16x8x128xf32, #tpu.memory_space<vmem>>, vector<1x8x128xf32>
    %103 = vector.shape_cast %102 : vector<1x8x128xf32> to vector<8x128xf32>
    %104 = vector.shape_cast %101 : vector<8x128xf32> to vector<1x8x128xf32>
    tpu.vector_store %arg14[%c7_81, %c0_82, %c0_83], %104 {strides = array<i32>} : memref<16x8x128xf32, #tpu.memory_space<vmem>>, vector<1x8x128xf32>,
    %c16 = arith.constant 16 : index
    %c0_84 = arith.constant 0 : index
    %c0_85 = arith.constant 0 : index
    %105 = vector.load %arg13[%c16, %c0_84, %c0_85] : memref<28x8x128xf32, #tpu.memory_space<vmem>>, vector<1x8x128xf32>
    %106 = vector.shape_cast %105 : vector<1x8x128xf32> to vector<8x128xf32>
    %c17 = arith.constant 17 : index
    %c0_86 = arith.constant 0 : index
    %c0_87 = arith.constant 0 : index
    %107 = vector.load %arg13[%c17, %c0_86, %c0_87] : memref<28x8x128xf32, #tpu.memory_space<vmem>>, vector<1x8x128xf32>
    %108 = vector.shape_cast %107 : vector<1x8x128xf32> to vector<8x128xf32>
    %109 = arith.maximumf %106, %108 : vector<8x128xf32>
    %c8_88 = arith.constant 8 : index
    %c0_89 = arith.constant 0 : index
    %c0_90 = arith.constant 0 : index
    %110 = vector.load %arg14[%c8_88, %c0_89, %c0_90] : memref<16x8x128xf32, #tpu.memory_space<vmem>>, vector<1x8x128xf32>
    %111 = vector.shape_cast %110 : vector<1x8x128xf32> to vector<8x128xf32>
    %112 = vector.shape_cast %109 : vector<8x128xf32> to vector<1x8x128xf32>
    tpu.vector_store %arg14[%c8_88, %c0_89, %c0_90], %112 {strides = array<i32>} : memref<16x8x128xf32, #tpu.memory_space<vmem>>, vector<1x8x128xf32>,
    %c18 = arith.constant 18 : index
    %c0_91 = arith.constant 0 : index
    %c0_92 = arith.constant 0 : index
    %113 = vector.load %arg13[%c18, %c0_91, %c0_92] : memref<28x8x128xf32, #tpu.memory_space<vmem>>, vector<1x8x128xf32>
    %114 = vector.shape_cast %113 : vector<1x8x128xf32> to vector<8x128xf32>
    %c19 = arith.constant 19 : index
    %c0_93 = arith.constant 0 : index
    %c0_94 = arith.constant 0 : index
    %115 = vector.load %arg13[%c19, %c0_93, %c0_94] : memref<28x8x128xf32, #tpu.memory_space<vmem>>, vector<1x8x128xf32>
    %116 = vector.shape_cast %115 : vector<1x8x128xf32> to vector<8x128xf32>
    %117 = arith.maximumf %114, %116 : vector<8x128xf32>
    %c9_95 = arith.constant 9 : index
    %c0_96 = arith.constant 0 : index
    %c0_97 = arith.constant 0 : index
    %118 = vector.load %arg14[%c9_95, %c0_96, %c0_97] : memref<16x8x128xf32, #tpu.memory_space<vmem>>, vector<1x8x128xf32>
    %119 = vector.shape_cast %118 : vector<1x8x128xf32> to vector<8x128xf32>
    %120 = vector.shape_cast %117 : vector<8x128xf32> to vector<1x8x128xf32>
    tpu.vector_store %arg14[%c9_95, %c0_96, %c0_97], %120 {strides = array<i32>} : memref<16x8x128xf32, #tpu.memory_space<vmem>>, vector<1x8x128xf32>,
    %c20 = arith.constant 20 : index
    %c0_98 = arith.constant 0 : index
    %c0_99 = arith.constant 0 : index
    %121 = vector.load %arg13[%c20, %c0_98, %c0_99] : memref<28x8x128xf32, #tpu.memory_space<vmem>>, vector<1x8x128xf32>
    %122 = vector.shape_cast %121 : vector<1x8x128xf32> to vector<8x128xf32>
    %c21 = arith.constant 21 : index
    %c0_100 = arith.constant 0 : index
    %c0_101 = arith.constant 0 : index
    %123 = vector.load %arg13[%c21, %c0_100, %c0_101] : memref<28x8x128xf32, #tpu.memory_space<vmem>>, vector<1x8x128xf32>
    %124 = vector.shape_cast %123 : vector<1x8x128xf32> to vector<8x128xf32>
    %125 = arith.maximumf %122, %124 : vector<8x128xf32>
    %c10_102 = arith.constant 10 : index
    %c0_103 = arith.constant 0 : index
    %c0_104 = arith.constant 0 : index
    %126 = vector.load %arg14[%c10_102, %c0_103, %c0_104] : memref<16x8x128xf32, #tpu.memory_space<vmem>>, vector<1x8x128xf32>
    %127 = vector.shape_cast %126 : vector<1x8x128xf32> to vector<8x128xf32>
    %128 = vector.shape_cast %125 : vector<8x128xf32> to vector<1x8x128xf32>
    tpu.vector_store %arg14[%c10_102, %c0_103, %c0_104], %128 {strides = array<i32>} : memref<16x8x128xf32, #tpu.memory_space<vmem>>, vector<1x8x128xf32>,
    %c22 = arith.constant 22 : index
    %c0_105 = arith.constant 0 : index
    %c0_106 = arith.constant 0 : index
    %129 = vector.load %arg13[%c22, %c0_105, %c0_106] : memref<28x8x128xf32, #tpu.memory_space<vmem>>, vector<1x8x128xf32>
    %130 = vector.shape_cast %129 : vector<1x8x128xf32> to vector<8x128xf32>
    %c23 = arith.constant 23 : index
    %c0_107 = arith.constant 0 : index
    %c0_108 = arith.constant 0 : index
    %131 = vector.load %arg13[%c23, %c0_107, %c0_108] : memref<28x8x128xf32, #tpu.memory_space<vmem>>, vector<1x8x128xf32>
    %132 = vector.shape_cast %131 : vector<1x8x128xf32> to vector<8x128xf32>
    %133 = arith.maximumf %130, %132 : vector<8x128xf32>
    %c11_109 = arith.constant 11 : index
    %c0_110 = arith.constant 0 : index
    %c0_111 = arith.constant 0 : index
    %134 = vector.load %arg14[%c11_109, %c0_110, %c0_111] : memref<16x8x128xf32, #tpu.memory_space<vmem>>, vector<1x8x128xf32>
    %135 = vector.shape_cast %134 : vector<1x8x128xf32> to vector<8x128xf32>
    %136 = vector.shape_cast %133 : vector<8x128xf32> to vector<1x8x128xf32>
    tpu.vector_store %arg14[%c11_109, %c0_110, %c0_111], %136 {strides = array<i32>} : memref<16x8x128xf32, #tpu.memory_space<vmem>>, vector<1x8x128xf32>,
    %c24 = arith.constant 24 : index
    %c0_112 = arith.constant 0 : index
    %c0_113 = arith.constant 0 : index
    %137 = vector.load %arg13[%c24, %c0_112, %c0_113] : memref<28x8x128xf32, #tpu.memory_space<vmem>>, vector<1x8x128xf32>
    %138 = vector.shape_cast %137 : vector<1x8x128xf32> to vector<8x128xf32>
    %c25 = arith.constant 25 : index
    %c0_114 = arith.constant 0 : index
    %c0_115 = arith.constant 0 : index
    %139 = vector.load %arg13[%c25, %c0_114, %c0_115] : memref<28x8x128xf32, #tpu.memory_space<vmem>>, vector<1x8x128xf32>
    %140 = vector.shape_cast %139 : vector<1x8x128xf32> to vector<8x128xf32>
    %141 = arith.maximumf %138, %140 : vector<8x128xf32>
    %c12_116 = arith.constant 12 : index
    %c0_117 = arith.constant 0 : index
    %c0_118 = arith.constant 0 : index
    %142 = vector.load %arg14[%c12_116, %c0_117, %c0_118] : memref<16x8x128xf32, #tpu.memory_space<vmem>>, vector<1x8x128xf32>
    %143 = vector.shape_cast %142 : vector<1x8x128xf32> to vector<8x128xf32>
    %144 = vector.shape_cast %141 : vector<8x128xf32> to vector<1x8x128xf32>
    tpu.vector_store %arg14[%c12_116, %c0_117, %c0_118], %144 {strides = array<i32>} : memref<16x8x128xf32, #tpu.memory_space<vmem>>, vector<1x8x128xf32>,
    %c26 = arith.constant 26 : index
    %c0_119 = arith.constant 0 : index
    %c0_120 = arith.constant 0 : index
    %145 = vector.load %arg13[%c26, %c0_119, %c0_120] : memref<28x8x128xf32, #tpu.memory_space<vmem>>, vector<1x8x128xf32>
    %146 = vector.shape_cast %145 : vector<1x8x128xf32> to vector<8x128xf32>
    %c27 = arith.constant 27 : index
    %c0_121 = arith.constant 0 : index
    %c0_122 = arith.constant 0 : index
    %147 = vector.load %arg13[%c27, %c0_121, %c0_122] : memref<28x8x128xf32, #tpu.memory_space<vmem>>, vector<1x8x128xf32>
    %148 = vector.shape_cast %147 : vector<1x8x128xf32> to vector<8x128xf32>
    %149 = arith.maximumf %146, %148 : vector<8x128xf32>
    %c13_123 = arith.constant 13 : index
    %c0_124 = arith.constant 0 : index
    %c0_125 = arith.constant 0 : index
    %150 = vector.load %arg14[%c13_123, %c0_124, %c0_125] : memref<16x8x128xf32, #tpu.memory_space<vmem>>, vector<1x8x128xf32>
    %151 = vector.shape_cast %150 : vector<1x8x128xf32> to vector<8x128xf32>
    %152 = vector.shape_cast %149 : vector<8x128xf32> to vector<1x8x128xf32>
    tpu.vector_store %arg14[%c13_123, %c0_124, %c0_125], %152 {strides = array<i32>} : memref<16x8x128xf32, #tpu.memory_space<vmem>>, vector<1x8x128xf32>,
    %cst_126 = arith.constant 0.000000e+00 : f32
    %153 = vector.broadcast %cst_126 : f32 to vector<8x128xf32>
    %c14_127 = arith.constant 14 : index
    %c0_128 = arith.constant 0 : index
    %c0_129 = arith.constant 0 : index
    %154 = vector.load %arg14[%c14_127, %c0_128, %c0_129] : memref<16x8x128xf32, #tpu.memory_space<vmem>>, vector<1x8x128xf32>
    %155 = vector.shape_cast %154 : vector<1x8x128xf32> to vector<8x128xf32>
    %156 = vector.shape_cast %153 : vector<8x128xf32> to vector<1x8x128xf32>
    tpu.vector_store %arg14[%c14_127, %c0_128, %c0_129], %156 {strides = array<i32>} : memref<16x8x128xf32, #tpu.memory_space<vmem>>, vector<1x8x128xf32>,
    %cst_130 = arith.constant 0.000000e+00 : f32
    %157 = vector.broadcast %cst_130 : f32 to vector<8x128xf32>
    %c15_131 = arith.constant 15 : index
    %c0_132 = arith.constant 0 : index
    %c0_133 = arith.constant 0 : index
    %158 = vector.load %arg14[%c15_131, %c0_132, %c0_133] : memref<16x8x128xf32, #tpu.memory_space<vmem>>, vector<1x8x128xf32>
    %159 = vector.shape_cast %158 : vector<1x8x128xf32> to vector<8x128xf32>
    %160 = vector.shape_cast %157 : vector<8x128xf32> to vector<1x8x128xf32>
    tpu.vector_store %arg14[%c15_131, %c0_132, %c0_133], %160 {strides = array<i32>} : memref<16x8x128xf32, #tpu.memory_space<vmem>>, vector<1x8x128xf32>,
    %c0_134 = arith.constant 0 : index
    %c0_135 = arith.constant 0 : index
    %c0_136 = arith.constant 0 : index
    %161 = vector.load %arg14[%c0_134, %c0_135, %c0_136] : memref<16x8x128xf32, #tpu.memory_space<vmem>>, vector<16x8x128xf32>
    %162 = vector.shape_cast %161 : vector<16x8x128xf32> to vector<128x128xf32>
    %163 = arith.truncf %162 : vector<128x128xf32> to vector<128x128xbf16>
    %c0_137 = arith.constant 0 : index
    %c0_138 = arith.constant 0 : index
    %c0_139 = arith.constant 0 : index
    %164 = vector.load %arg4[%c0_137, %c0_138, %c0_139] : memref<5x128x256xbf16, #tpu.memory_space<vmem>>, vector<1x128x256xbf16>
    %165 = vector.shape_cast %164 : vector<1x128x256xbf16> to vector<128x256xbf16>
    %cst_140 = arith.constant dense<0.000000e+00> : vector<128x256xf32>
    %166 = tpu.matmul %163, %165, %cst_140 {dimension_numbers = #tpu.dot_dimension_numbers<[1], [0], [0], [1], [0, 0, 1, 1], [], []>} : vector<128x128xbf16>, vector<128x256xbf16>, vector<128x256xf32> -> vector<128x256xf32>
    %167 = vector.shape_cast %166 : vector<128x256xf32> to vector<16x8x256xf32>
    %168 = vector.extract_strided_slice %167 {offsets = [0, 0, 0], sizes = [10, 8, 256], strides = [1, 1, 1]} : vector<16x8x256xf32> to vector<10x8x256xf32>
    %c1_141 = arith.constant 1 : index
    %c0_142 = arith.constant 0 : index
    %c0_143 = arith.constant 0 : index
    %169 = vector.load %arg4[%c1_141, %c0_142, %c0_143] : memref<5x128x256xbf16, #tpu.memory_space<vmem>>, vector<1x128x256xbf16>
    %170 = vector.shape_cast %169 : vector<1x128x256xbf16> to vector<128x256xbf16>
    %cst_144 = arith.constant dense<0.000000e+00> : vector<128x256xf32>
    %171 = tpu.matmul %163, %170, %cst_144 {dimension_numbers = #tpu.dot_dimension_numbers<[1], [0], [0], [1], [0, 0, 1, 1], [], []>} : vector<128x128xbf16>, vector<128x256xbf16>, vector<128x256xf32> -> vector<128x256xf32>
    %172 = vector.shape_cast %171 : vector<128x256xf32> to vector<16x8x256xf32>
    %173 = vector.extract_strided_slice %172 {offsets = [1, 0, 0], sizes = [10, 8, 256], strides = [1, 1, 1]} : vector<16x8x256xf32> to vector<10x8x256xf32>
    %174 = arith.addf %168, %173 : vector<10x8x256xf32>
    %c2_145 = arith.constant 2 : index
    %c0_146 = arith.constant 0 : index
    %c0_147 = arith.constant 0 : index
    %175 = vector.load %arg4[%c2_145, %c0_146, %c0_147] : memref<5x128x256xbf16, #tpu.memory_space<vmem>>, vector<1x128x256xbf16>
    %176 = vector.shape_cast %175 : vector<1x128x256xbf16> to vector<128x256xbf16>
    %cst_148 = arith.constant dense<0.000000e+00> : vector<128x256xf32>
    %177 = tpu.matmul %163, %176, %cst_148 {dimension_numbers = #tpu.dot_dimension_numbers<[1], [0], [0], [1], [0, 0, 1, 1], [], []>} : vector<128x128xbf16>, vector<128x256xbf16>, vector<128x256xf32> -> vector<128x256xf32>
    %178 = vector.shape_cast %177 : vector<128x256xf32> to vector<16x8x256xf32>
    %179 = vector.extract_strided_slice %178 {offsets = [2, 0, 0], sizes = [10, 8, 256], strides = [1, 1, 1]} : vector<16x8x256xf32> to vector<10x8x256xf32>
    %180 = arith.addf %174, %179 : vector<10x8x256xf32>
    %c3_149 = arith.constant 3 : index
    %c0_150 = arith.constant 0 : index
    %c0_151 = arith.constant 0 : index
    %181 = vector.load %arg4[%c3_149, %c0_150, %c0_151] : memref<5x128x256xbf16, #tpu.memory_space<vmem>>, vector<1x128x256xbf16>
    %182 = vector.shape_cast %181 : vector<1x128x256xbf16> to vector<128x256xbf16>
    %cst_152 = arith.constant dense<0.000000e+00> : vector<128x256xf32>
    %183 = tpu.matmul %163, %182, %cst_152 {dimension_numbers = #tpu.dot_dimension_numbers<[1], [0], [0], [1], [0, 0, 1, 1], [], []>} : vector<128x128xbf16>, vector<128x256xbf16>, vector<128x256xf32> -> vector<128x256xf32>
    %184 = vector.shape_cast %183 : vector<128x256xf32> to vector<16x8x256xf32>
    %185 = vector.extract_strided_slice %184 {offsets = [3, 0, 0], sizes = [10, 8, 256], strides = [1, 1, 1]} : vector<16x8x256xf32> to vector<10x8x256xf32>
    %186 = arith.addf %180, %185 : vector<10x8x256xf32>
    %c4_153 = arith.constant 4 : index
    %c0_154 = arith.constant 0 : index
    %c0_155 = arith.constant 0 : index
    %187 = vector.load %arg4[%c4_153, %c0_154, %c0_155] : memref<5x128x256xbf16, #tpu.memory_space<vmem>>, vector<1x128x256xbf16>
    %188 = vector.shape_cast %187 : vector<1x128x256xbf16> to vector<128x256xbf16>
    %cst_156 = arith.constant dense<0.000000e+00> : vector<128x256xf32>
    %189 = tpu.matmul %163, %188, %cst_156 {dimension_numbers = #tpu.dot_dimension_numbers<[1], [0], [0], [1], [0, 0, 1, 1], [], []>} : vector<128x128xbf16>, vector<128x256xbf16>, vector<128x256xf32> -> vector<128x256xf32>
    %190 = vector.shape_cast %189 : vector<128x256xf32> to vector<16x8x256xf32>
    %191 = vector.extract_strided_slice %190 {offsets = [4, 0, 0], sizes = [10, 8, 256], strides = [1, 1, 1]} : vector<16x8x256xf32> to vector<10x8x256xf32>
    %192 = arith.addf %186, %191 : vector<10x8x256xf32>
    %c0_157 = arith.constant 0 : index
    %c0_158 = arith.constant 0 : index
    %193 = vector.load %arg5[%c0_157, %c0_158] : memref<1x256xf32, #tpu.memory_space<vmem>>, vector<1x256xf32>
    %194 = vector.shape_cast %193 : vector<1x256xf32> to vector<1x1x256xf32>
    %195 = vector.broadcast %194 : vector<1x1x256xf32> to vector<10x8x256xf32>
    %196 = arith.addf %192, %195 : vector<10x8x256xf32>
    %cst_159 = arith.constant 0.000000e+00 : f32
    %197 = vector.broadcast %cst_159 : f32 to vector<10x8x256xf32>
    %198 = arith.maximumf %196, %197 : vector<10x8x256xf32>
    %199 = vector.extract_strided_slice %198 {offsets = [0, 0, 0], sizes = [10, 8, 128], strides = [1, 1, 1]} : vector<10x8x256xf32> to vector<10x8x128xf32>
    %200 = vector.extract_strided_slice %198 {offsets = [0, 0, 128], sizes = [10, 8, 128], strides = [1, 1, 1]} : vector<10x8x256xf32> to vector<10x8x128xf32>
    %201 = arith.maximumf %199, %200 : vector<10x8x128xf32>
    %c0_160 = arith.constant 0 : index
    %c0_161 = arith.constant 0 : index
    %c0_162 = arith.constant 0 : index
    %202 = vector.load %arg15[%c0_160, %c0_161, %c0_162] : memref<10x8x128xf32, #tpu.memory_space<vmem>>, vector<10x8x128xf32>
    tpu.vector_store %arg15[%c0_160, %c0_161, %c0_162], %201 {strides = array<i32>} : memref<10x8x128xf32, #tpu.memory_space<vmem>>, vector<10x8x128xf32>,
    %c0_163 = arith.constant 0 : index
    %c0_164 = arith.constant 0 : index
    %c0_165 = arith.constant 0 : index
    %203 = vector.load %arg15[%c0_163, %c0_164, %c0_165] : memref<10x8x128xf32, #tpu.memory_space<vmem>>, vector<1x8x128xf32>
    %204 = vector.shape_cast %203 : vector<1x8x128xf32> to vector<8x128xf32>
    %c1_166 = arith.constant 1 : index
    %c0_167 = arith.constant 0 : index
    %c0_168 = arith.constant 0 : index
    %205 = vector.load %arg15[%c1_166, %c0_167, %c0_168] : memref<10x8x128xf32, #tpu.memory_space<vmem>>, vector<1x8x128xf32>
    %206 = vector.shape_cast %205 : vector<1x8x128xf32> to vector<8x128xf32>
    %207 = arith.maximumf %204, %206 : vector<8x128xf32>
    %c0_169 = arith.constant 0 : index
    %c0_170 = arith.constant 0 : index
    %208 = vector.load %arg16[%c0_169, %c0_170] : memref<8x640xf32, #tpu.memory_space<vmem>>, vector<8x128xf32>
    tpu.vector_store %arg16[%c0_169, %c0_170], %207 {strides = array<i32>} : memref<8x640xf32, #tpu.memory_space<vmem>>, vector<8x128xf32>,
    %c2_171 = arith.constant 2 : index
    %c0_172 = arith.constant 0 : index
    %c0_173 = arith.constant 0 : index
    %209 = vector.load %arg15[%c2_171, %c0_172, %c0_173] : memref<10x8x128xf32, #tpu.memory_space<vmem>>, vector<1x8x128xf32>
    %210 = vector.shape_cast %209 : vector<1x8x128xf32> to vector<8x128xf32>
    %c3_174 = arith.constant 3 : index
    %c0_175 = arith.constant 0 : index
    %c0_176 = arith.constant 0 : index
    %211 = vector.load %arg15[%c3_174, %c0_175, %c0_176] : memref<10x8x128xf32, #tpu.memory_space<vmem>>, vector<1x8x128xf32>
    %212 = vector.shape_cast %211 : vector<1x8x128xf32> to vector<8x128xf32>
    %213 = arith.maximumf %210, %212 : vector<8x128xf32>
    %c0_177 = arith.constant 0 : index
    %c128 = arith.constant 128 : index
    %214 = vector.load %arg16[%c0_177, %c128] : memref<8x640xf32, #tpu.memory_space<vmem>>, vector<8x128xf32>
    tpu.vector_store %arg16[%c0_177, %c128], %213 {strides = array<i32>} : memref<8x640xf32, #tpu.memory_space<vmem>>, vector<8x128xf32>,
    %c4_178 = arith.constant 4 : index
    %c0_179 = arith.constant 0 : index
    %c0_180 = arith.constant 0 : index
    %215 = vector.load %arg15[%c4_178, %c0_179, %c0_180] : memref<10x8x128xf32, #tpu.memory_space<vmem>>, vector<1x8x128xf32>
    %216 = vector.shape_cast %215 : vector<1x8x128xf32> to vector<8x128xf32>
    %c5_181 = arith.constant 5 : index
    %c0_182 = arith.constant 0 : index
    %c0_183 = arith.constant 0 : index
    %217 = vector.load %arg15[%c5_181, %c0_182, %c0_183] : memref<10x8x128xf32, #tpu.memory_space<vmem>>, vector<1x8x128xf32>
    %218 = vector.shape_cast %217 : vector<1x8x128xf32> to vector<8x128xf32>
    %219 = arith.maximumf %216, %218 : vector<8x128xf32>
    %c0_184 = arith.constant 0 : index
    %c256 = arith.constant 256 : index
    %220 = vector.load %arg16[%c0_184, %c256] : memref<8x640xf32, #tpu.memory_space<vmem>>, vector<8x128xf32>
    tpu.vector_store %arg16[%c0_184, %c256], %219 {strides = array<i32>} : memref<8x640xf32, #tpu.memory_space<vmem>>, vector<8x128xf32>,
    %c6_185 = arith.constant 6 : index
    %c0_186 = arith.constant 0 : index
    %c0_187 = arith.constant 0 : index
    %221 = vector.load %arg15[%c6_185, %c0_186, %c0_187] : memref<10x8x128xf32, #tpu.memory_space<vmem>>, vector<1x8x128xf32>
    %222 = vector.shape_cast %221 : vector<1x8x128xf32> to vector<8x128xf32>
    %c7_188 = arith.constant 7 : index
    %c0_189 = arith.constant 0 : index
    %c0_190 = arith.constant 0 : index
    %223 = vector.load %arg15[%c7_188, %c0_189, %c0_190] : memref<10x8x128xf32, #tpu.memory_space<vmem>>, vector<1x8x128xf32>
    %224 = vector.shape_cast %223 : vector<1x8x128xf32> to vector<8x128xf32>
    %225 = arith.maximumf %222, %224 : vector<8x128xf32>
    %c0_191 = arith.constant 0 : index
    %c384 = arith.constant 384 : index
    %226 = vector.load %arg16[%c0_191, %c384] : memref<8x640xf32, #tpu.memory_space<vmem>>, vector<8x128xf32>
    tpu.vector_store %arg16[%c0_191, %c384], %225 {strides = array<i32>} : memref<8x640xf32, #tpu.memory_space<vmem>>, vector<8x128xf32>,
    %c8_192 = arith.constant 8 : index
    %c0_193 = arith.constant 0 : index
    %c0_194 = arith.constant 0 : index
    %227 = vector.load %arg15[%c8_192, %c0_193, %c0_194] : memref<10x8x128xf32, #tpu.memory_space<vmem>>, vector<1x8x128xf32>
    %228 = vector.shape_cast %227 : vector<1x8x128xf32> to vector<8x128xf32>
    %c9_195 = arith.constant 9 : index
    %c0_196 = arith.constant 0 : index
    %c0_197 = arith.constant 0 : index
    %229 = vector.load %arg15[%c9_195, %c0_196, %c0_197] : memref<10x8x128xf32, #tpu.memory_space<vmem>>, vector<1x8x128xf32>
    %230 = vector.shape_cast %229 : vector<1x8x128xf32> to vector<8x128xf32>
    %231 = arith.maximumf %228, %230 : vector<8x128xf32>
    %c0_198 = arith.constant 0 : index
    %c512 = arith.constant 512 : index
    %232 = vector.load %arg16[%c0_198, %c512] : memref<8x640xf32, #tpu.memory_space<vmem>>, vector<8x128xf32>
    tpu.vector_store %arg16[%c0_198, %c512], %231 {strides = array<i32>} : memref<8x640xf32, #tpu.memory_space<vmem>>, vector<8x128xf32>,
    %c0_199 = arith.constant 0 : index
    %c0_200 = arith.constant 0 : index
    %233 = vector.load %arg16[%c0_199, %c0_200] : memref<8x640xf32, #tpu.memory_space<vmem>>, vector<8x640xf32>
    %234 = arith.truncf %233 : vector<8x640xf32> to vector<8x640xbf16>
    %c0_201 = arith.constant 0 : index
    %c0_202 = arith.constant 0 : index
    %235 = vector.load %arg6[%c0_201, %c0_202] : memref<640x128xbf16, #tpu.memory_space<vmem>>, vector<640x128xbf16>
    %cst_203 = arith.constant dense<0.000000e+00> : vector<8x128xf32>
    %236 = tpu.matmul %234, %235, %cst_203 {dimension_numbers = #tpu.dot_dimension_numbers<[1], [0], [0], [1], [0, 0, 1, 1], [], []>} : vector<8x640xbf16>, vector<640x128xbf16>, vector<8x128xf32> -> vector<8x128xf32>
    %c0_204 = arith.constant 0 : index
    %c0_205 = arith.constant 0 : index
    %237 = vector.load %arg7[%c0_204, %c0_205] : memref<1x128xf32, #tpu.memory_space<vmem>>, vector<1x128xf32>
    %238 = vector.broadcast %237 : vector<1x128xf32> to vector<8x128xf32>
    %239 = arith.addf %236, %238 : vector<8x128xf32>
    %cst_206 = arith.constant 0.000000e+00 : f32
    %240 = vector.broadcast %cst_206 : f32 to vector<8x128xf32>
    %241 = arith.maximumf %239, %240 : vector<8x128xf32>
    %242 = arith.truncf %241 : vector<8x128xf32> to vector<8x128xbf16>
    %c0_207 = arith.constant 0 : index
    %c0_208 = arith.constant 0 : index
    %243 = vector.load %arg8[%c0_207, %c0_208] : memref<128x128xbf16, #tpu.memory_space<vmem>>, vector<128x128xbf16>
    %cst_209 = arith.constant dense<0.000000e+00> : vector<8x128xf32>
    %244 = tpu.matmul %242, %243, %cst_209 {dimension_numbers = #tpu.dot_dimension_numbers<[1], [0], [0], [1], [0, 0, 1, 1], [], []>} : vector<8x128xbf16>, vector<128x128xbf16>, vector<8x128xf32> -> vector<8x128xf32>
    %c0_210 = arith.constant 0 : index
    %c0_211 = arith.constant 0 : index
    %245 = vector.load %arg9[%c0_210, %c0_211] : memref<1x128xf32, #tpu.memory_space<vmem>>, vector<1x128xf32>
    %246 = vector.broadcast %245 : vector<1x128xf32> to vector<8x128xf32>
    %247 = arith.addf %244, %246 : vector<8x128xf32>
    %cst_212 = arith.constant 0.000000e+00 : f32
    %248 = vector.broadcast %cst_212 : f32 to vector<8x128xf32>
    %249 = arith.maximumf %247, %248 : vector<8x128xf32>
    %250 = arith.truncf %249 : vector<8x128xf32> to vector<8x128xbf16>
    %c0_213 = arith.constant 0 : index
    %c0_214 = arith.constant 0 : index
    %251 = vector.load %arg10[%c0_213, %c0_214] : memref<128x128xbf16, #tpu.memory_space<vmem>>, vector<128x128xbf16>
    %cst_215 = arith.constant dense<0.000000e+00> : vector<8x128xf32>
    %252 = tpu.matmul %250, %251, %cst_215 {dimension_numbers = #tpu.dot_dimension_numbers<[1], [0], [0], [1], [0, 0, 1, 1], [], []>} : vector<8x128xbf16>, vector<128x128xbf16>, vector<8x128xf32> -> vector<8x128xf32>
    %c0_216 = arith.constant 0 : index
    %c0_217 = arith.constant 0 : index
    %253 = vector.load %arg11[%c0_216, %c0_217] : memref<1x128xf32, #tpu.memory_space<vmem>>, vector<1x128xf32>
    %254 = vector.broadcast %253 : vector<1x128xf32> to vector<8x128xf32>
    %255 = arith.addf %252, %254 : vector<8x128xf32>
    %c0_218 = arith.constant 0 : index
    %c0_219 = arith.constant 0 : index
    %256 = vector.load %arg12[%c0_218, %c0_219] : memref<8x128xf32, #tpu.memory_space<vmem>>, vector<8x128xf32>
    tpu.vector_store %arg12[%c0_218, %c0_219], %255 {strides = array<i32>} : memref<8x128xf32, #tpu.memory_space<vmem>>, vector<8x128xf32>,
    return
  }
  func.func @transform_0(%arg0: i32) -> (i32, i32, i32) {
    %c0_i32 = arith.constant 0 : i32
    %c0_i32_0 = arith.constant 0 : i32
    %c0_i32_1 = arith.constant 0 : i32
    return %arg0, %c0_i32, %c0_i32_0 : i32, i32, i32
  }
  func.func @transform_1(%arg0: i32) -> (i32, i32, i32) {
    %c0_i32 = arith.constant 0 : i32
    %c0_i32_0 = arith.constant 0 : i32
    %c0_i32_1 = arith.constant 0 : i32
    %c0_i32_2 = arith.constant 0 : i32
    return %c0_i32, %c0_i32_0, %c0_i32_1 : i32, i32, i32
  }
  func.func @transform_2(%arg0: i32) -> (i32, i32) {
    %c0_i32 = arith.constant 0 : i32
    %c0_i32_0 = arith.constant 0 : i32
    %c0_i32_1 = arith.constant 0 : i32
    return %c0_i32, %c0_i32_0 : i32, i32
  }
  func.func @transform_3(%arg0: i32) -> (i32, i32, i32) {
    %c0_i32 = arith.constant 0 : i32
    %c0_i32_0 = arith.constant 0 : i32
    %c0_i32_1 = arith.constant 0 : i32
    %c0_i32_2 = arith.constant 0 : i32
    return %c0_i32, %c0_i32_0, %c0_i32_1 : i32, i32, i32
  }
  func.func @transform_4(%arg0: i32) -> (i32, i32) {
    %c0_i32 = arith.constant 0 : i32
    %c0_i32_0 = arith.constant 0 : i32
    %c0_i32_1 = arith.constant 0 : i32
    return %c0_i32, %c0_i32_0 : i32, i32
  }
  func.func @transform_5(%arg0: i32) -> (i32, i32) {
    %c0_i32 = arith.constant 0 : i32
    %c0_i32_0 = arith.constant 0 : i32
    %c0_i32_1 = arith.constant 0 : i32
    return %c0_i32, %c0_i32_0 : i32, i32
  }
  func.func @transform_6(%arg0: i32) -> (i32, i32) {
    %c0_i32 = arith.constant 0 : i32
    %c0_i32_0 = arith.constant 0 : i32
    %c0_i32_1 = arith.constant 0 : i32
    return %c0_i32, %c0_i32_0 : i32, i32
  }
  func.func @transform_7(%arg0: i32) -> (i32, i32) {
    %c0_i32 = arith.constant 0 : i32
    %c0_i32_0 = arith.constant 0 : i32
    %c0_i32_1 = arith.constant 0 : i32
    return %c0_i32, %c0_i32_0 : i32, i32
  }
  func.func @transform_8(%arg0: i32) -> (i32, i32) {
    %c0_i32 = arith.constant 0 : i32
    %c0_i32_0 = arith.constant 0 : i32
    %c0_i32_1 = arith.constant 0 : i32
    return %c0_i32, %c0_i32_0 : i32, i32
  }
  func.func @transform_9(%arg0: i32) -> (i32, i32) {
    %c0_i32 = arith.constant 0 : i32
    %c0_i32_0 = arith.constant 0 : i32
    %c0_i32_1 = arith.constant 0 : i32
    return %c0_i32, %c0_i32_0 : i32, i32
  }
  func.func @transform_10(%arg0: i32) -> (i32, i32) {
    %c0_i32 = arith.constant 0 : i32
    %c0_i32_0 = arith.constant 0 : i32
    %c0_i32_1 = arith.constant 0 : i32
    return %c0_i32, %c0_i32_0 : i32, i32
  }
  func.func @transform_11(%arg0: i32) -> (i32, i32) {
    %c0_i32 = arith.constant 0 : i32
    %c0_i32_0 = arith.constant 0 : i32
    return %arg0, %c0_i32 : i32, i32
  }
}

</mosaic_0001>

<llo_original>
// kernel: convnet_forward.1
$region0: #{convnet_forward.1}
  #allocation0 [shape = 'u32[]', space=smem, size = 0x4, offset = 0x4, fixed_abs, tag = 'smem constant byte address 0x4 - core index']
  #allocation1 [shape = 'u32[144,128]{1,0:T(1,128)}', space=vmem, size = 0x12000, scoped, tag = 'internal scratch']
  #allocation2 [shape = 'f32[28,8,128]{2,1,0:T(8,128)}', space=vmem, size = 0x1c000, scoped, tag = 'scratch operand']
  #allocation3 [shape = 'f32[16,8,128]{2,1,0:T(8,128)}', space=vmem, size = 0x10000, scoped, tag = 'scratch operand']
  #allocation4 [shape = 'f32[10,8,128]{2,1,0:T(8,128)}', space=vmem, size = 0xa000, scoped, tag = 'scratch operand']
  #allocation5 [shape = 'f32[8,640]{1,0:T(8,128)}', space=vmem, size = 0x5000, scoped, tag = 'scratch operand']
  %s0 = inlined_call_operand.vmem [shape: bf16[2,256,128], index: 0, kind: input, shape index: {}]
  %s1 = inlined_call_operand.vmem [shape: bf16[5,128,256], index: 1, kind: input, shape index: {}]
  %s2 = inlined_call_operand.vmem [shape: f32[1,256], index: 2, kind: input, shape index: {}]
  %s3 = inlined_call_operand.vmem [shape: bf16[5,128,256], index: 3, kind: input, shape index: {}]
  %s4 = inlined_call_operand.vmem [shape: f32[1,256], index: 4, kind: input, shape index: {}]
  %s5 = inlined_call_operand.vmem [shape: bf16[640,128], index: 5, kind: input, shape index: {}]
  %s6 = inlined_call_operand.vmem [shape: f32[1,128], index: 6, kind: input, shape index: {}]
  %s7 = inlined_call_operand.vmem [shape: bf16[128,128], index: 7, kind: input, shape index: {}]
  %s8 = inlined_call_operand.vmem [shape: f32[1,128], index: 8, kind: input, shape index: {}]
  %s9 = inlined_call_operand.vmem [shape: bf16[128,128], index: 9, kind: input, shape index: {}]
  %s10 = inlined_call_operand.vmem [shape: f32[1,128], index: 10, kind: input, shape index: {}]
  %s11 = inlined_call_operand.hbm [shape: f32[16,128], index: 11, kind: output, shape index: {}]
  %s12 = sld [smem:[#allocation0]]
  $region77: #{convnet_forward.1} parent=0
    _
  %s14 = ssub.s32 1, %s12
  %s15 = scalar_select 0, %s14, %s12
  $region1: #{convnet_forward.1} parent=0
    #allocation6 [shape = 'u8[8192]{0}', space=vmem, size = 0x2000, scoped, tag = 'output window, operand 0']
    #allocation7 [shape = 's32[2]{0}', space=sflag, size = 0x8, scoped, tag = 'scoped memory for convnet_forward.1']
    %16 = vsyncpa [#allocation7], 0
    %s17 = scalar_lea.sflag [#allocation7], 1
    %18 = vsyncpa %s17, 0
    loop: start=0, step=1, limit=4
    $region2: #{convnet_forward.1} parent=1 // loop_pre_header
      _
    $region3: #{convnet_forward.1} parent=1 // loop_header
      %s20 = sphi 0, %s24
      %p21 = scmp.ge.s32.totalorder %s20, 4
      %s30 = sphi 0, %s32
      %s33 = sphi 0, %s30
      %s34 = sphi 0, %s33
      %s50 = sphi 0, %s34
      %s54 = sphi 0, %s54
      %s56 = sphi 0, %s54
      %s57 = sphi 0, %s56
      %s71 = sphi 0, %s57
      %s75 = sphi 0, %s75
      %s77 = sphi 0, %s75
      %s78 = sphi 0, %s77
      %s92 = sphi 0, %s78
      %s96 = sphi 0, %s96
      %s98 = sphi 0, %s96
      %s99 = sphi 0, %s98
      %s113 = sphi 0, %s99
      %s117 = sphi 0, %s117
      %s119 = sphi 0, %s117
      %s120 = sphi 0, %s119
      %s134 = sphi 0, %s120
      %s138 = sphi 0, %s138
      %s140 = sphi 0, %s138
      %s141 = sphi 0, %s140
      %s155 = sphi 0, %s141
      %s159 = sphi 0, %s159
      %s161 = sphi 0, %s159
      %s162 = sphi 0, %s161
      %s176 = sphi 0, %s162
      %s180 = sphi 0, %s180
      %s182 = sphi 0, %s180
      %s183 = sphi 0, %s182
      %s197 = sphi 0, %s183
      %s201 = sphi 0, %s201
      %s203 = sphi 0, %s201
      %s204 = sphi 0, %s203
      %s218 = sphi 0, %s204
      %s222 = sphi 0, %s222
      %s224 = sphi 0, %s222
      %s225 = sphi 0, %s224
      %s239 = sphi 0, %s225
      %s243 = sphi 0, %s243
      %s245 = sphi 0, %s243
      %s246 = sphi 0, %s245
      %s260 = sphi 0, %s246
      %s266 = sphi 0, %s268
      %s269 = sphi 0, %s266
      %s270 = sphi 0, %s269
      %s286 = sphi 0, %s270
    $region4: #{convnet_forward.1} parent=1 // loop_header_branch
      %23 = sbr.rel (%p21) target = $region8
    $region5: #{convnet_forward.1} parent=1 // loop_body
      %s25 = ssub.s32 %s20, 1
      %s26 = ssub.s32 %s20, 2
      %s27 = sadd.s32 %s20, 1
      %s28 = ssub.s32 %s20, %s27
      %p29 = scmp.eq.s32.totalorder %s28, 0
      %s31 = sadd.s32 %s30, 1
      %s32 = scalar_select %p29, %s30, %s31
      %p35 = pneg %p29
      %p36 = scmp.eq.s32.totalorder %s20, 1
      %p37 = por %p35, %p36
      %p38 = scmp.ne.s32.totalorder %s30, %s33
      %p39 = scmp.eq.s32.totalorder %s20, 0
      %p40 = por %p38, %p39
      %p41 = scmp.ne.s32.totalorder %s30, %s33
      %p42 = scmp.eq.s32.totalorder %s25, 1
      %p43 = por %p41, %p42
      %p44 = scmp.ne.s32.totalorder %s33, %s34
      %p45 = scmp.eq.s32.totalorder %s25, 0
      %p46 = por %p44, %p45
      %p47 = scmp.ne.s32.totalorder %s33, %s34
      %p48 = scmp.eq.s32.totalorder %s26, 1
      %p49 = por %p47, %p48
      %p51 = scmp.ne.s32.totalorder %s34, %s50
      %p52 = scmp.eq.s32.totalorder %s26, 0
      %p53 = por %p51, %p52
      %s55 = sadd.s32 %s54, 1
      %p58 = scmp.eq.s32.totalorder %s20, 1
      %p59 = scmp.ne.s32.totalorder %s54, %s56
      %p60 = scmp.eq.s32.totalorder %s20, 0
      %p61 = por %p59, %p60
      %p62 = scmp.ne.s32.totalorder %s54, %s56
      %p63 = scmp.eq.s32.totalorder %s25, 1
      %p64 = por %p62, %p63
      %p65 = scmp.ne.s32.totalorder %s56, %s57
      %p66 = scmp.eq.s32.totalorder %s25, 0
      %p67 = por %p65, %p66
      %p68 = scmp.ne.s32.totalorder %s56, %s57
      %p69 = scmp.eq.s32.totalorder %s26, 1
      %p70 = por %p68, %p69
      %p72 = scmp.ne.s32.totalorder %s57, %s71
      %p73 = scmp.eq.s32.totalorder %s26, 0
      %p74 = por %p72, %p73
      %s76 = sadd.s32 %s75, 1
      %p79 = scmp.eq.s32.totalorder %s20, 1
      %p80 = scmp.ne.s32.totalorder %s75, %s77
      %p81 = scmp.eq.s32.totalorder %s20, 0
      %p82 = por %p80, %p81
      %p83 = scmp.ne.s32.totalorder %s75, %s77
      %p84 = scmp.eq.s32.totalorder %s25, 1
      %p85 = por %p83, %p84
      %p86 = scmp.ne.s32.totalorder %s77, %s78
      %p87 = scmp.eq.s32.totalorder %s25, 0
      %p88 = por %p86, %p87
      %p89 = scmp.ne.s32.totalorder %s77, %s78
      %p90 = scmp.eq.s32.totalorder %s26, 1
      %p91 = por %p89, %p90
      %p93 = scmp.ne.s32.totalorder %s78, %s92
      %p94 = scmp.eq.s32.totalorder %s26, 0
      %p95 = por %p93, %p94
      %s97 = sadd.s32 %s96, 1
      %p100 = scmp.eq.s32.totalorder %s20, 1
      %p101 = scmp.ne.s32.totalorder %s96, %s98
      %p102 = scmp.eq.s32.totalorder %s20, 0
      %p103 = por %p101, %p102
      %p104 = scmp.ne.s32.totalorder %s96, %s98
      %p105 = scmp.eq.s32.totalorder %s25, 1
      %p106 = por %p104, %p105
      %p107 = scmp.ne.s32.totalorder %s98, %s99
      %p108 = scmp.eq.s32.totalorder %s25, 0
      %p109 = por %p107, %p108
      %p110 = scmp.ne.s32.totalorder %s98, %s99
      %p111 = scmp.eq.s32.totalorder %s26, 1
      %p112 = por %p110, %p111
      %p114 = scmp.ne.s32.totalorder %s99, %s113
      %p115 = scmp.eq.s32.totalorder %s26, 0
      %p116 = por %p114, %p115
      %s118 = sadd.s32 %s117, 1
      %p121 = scmp.eq.s32.totalorder %s20, 1
      %p122 = scmp.ne.s32.totalorder %s117, %s119
      %p123 = scmp.eq.s32.totalorder %s20, 0
      %p124 = por %p122, %p123
      %p125 = scmp.ne.s32.totalorder %s117, %s119
      %p126 = scmp.eq.s32.totalorder %s25, 1
      %p127 = por %p125, %p126
      %p128 = scmp.ne.s32.totalorder %s119, %s120
      %p129 = scmp.eq.s32.totalorder %s25, 0
      %p130 = por %p128, %p129
      %p131 = scmp.ne.s32.totalorder %s119, %s120
      %p132 = scmp.eq.s32.totalorder %s26, 1
      %p133 = por %p131, %p132
      %p135 = scmp.ne.s32.totalorder %s120, %s134
      %p136 = scmp.eq.s32.totalorder %s26, 0
      %p137 = por %p135, %p136
      %s139 = sadd.s32 %s138, 1
      %p142 = scmp.eq.s32.totalorder %s20, 1
      %p143 = scmp.ne.s32.totalorder %s138, %s140
      %p144 = scmp.eq.s32.totalorder %s20, 0
      %p145 = por %p143, %p144
      %p146 = scmp.ne.s32.totalorder %s138, %s140
      %p147 = scmp.eq.s32.totalorder %s25, 1
      %p148 = por %p146, %p147
      %p149 = scmp.ne.s32.totalorder %s140, %s141
      %p150 = scmp.eq.s32.totalorder %s25, 0
      %p151 = por %p149, %p150
      %p152 = scmp.ne.s32.totalorder %s140, %s141
      %p153 = scmp.eq.s32.totalorder %s26, 1
      %p154 = por %p152, %p153
      %p156 = scmp.ne.s32.totalorder %s141, %s155
      %p157 = scmp.eq.s32.totalorder %s26, 0
      %p158 = por %p156, %p157
      %s160 = sadd.s32 %s159, 1
      %p163 = scmp.eq.s32.totalorder %s20, 1
      %p164 = scmp.ne.s32.totalorder %s159, %s161
      %p165 = scmp.eq.s32.totalorder %s20, 0
      %p166 = por %p164, %p165
      %p167 = scmp.ne.s32.totalorder %s159, %s161
      %p168 = scmp.eq.s32.totalorder %s25, 1
      %p169 = por %p167, %p168
      %p170 = scmp.ne.s32.totalorder %s161, %s162
      %p171 = scmp.eq.s32.totalorder %s25, 0
      %p172 = por %p170, %p171
      %p173 = scmp.ne.s32.totalorder %s161, %s162
      %p174 = scmp.eq.s32.totalorder %s26, 1
      %p175 = por %p173, %p174
      %p177 = scmp.ne.s32.totalorder %s162, %s176
      %p178 = scmp.eq.s32.totalorder %s26, 0
      %p179 = por %p177, %p178
      %s181 = sadd.s32 %s180, 1
      %p184 = scmp.eq.s32.totalorder %s20, 1
      %p185 = scmp.ne.s32.totalorder %s180, %s182
      %p186 = scmp.eq.s32.totalorder %s20, 0
      %p187 = por %p185, %p186
      %p188 = scmp.ne.s32.totalorder %s180, %s182
      %p189 = scmp.eq.s32.totalorder %s25, 1
      %p190 = por %p188, %p189
      %p191 = scmp.ne.s32.totalorder %s182, %s183
      %p192 = scmp.eq.s32.totalorder %s25, 0
      %p193 = por %p191, %p192
      %p194 = scmp.ne.s32.totalorder %s182, %s183
      %p195 = scmp.eq.s32.totalorder %s26, 1
      %p196 = por %p194, %p195
      %p198 = scmp.ne.s32.totalorder %s183, %s197
      %p199 = scmp.eq.s32.totalorder %s26, 0
      %p200 = por %p198, %p199
      %s202 = sadd.s32 %s201, 1
      %p205 = scmp.eq.s32.totalorder %s20, 1
      %p206 = scmp.ne.s32.totalorder %s201, %s203
      %p207 = scmp.eq.s32.totalorder %s20, 0
      %p208 = por %p206, %p207
      %p209 = scmp.ne.s32.totalorder %s201, %s203
      %p210 = scmp.eq.s32.totalorder %s25, 1
      %p211 = por %p209, %p210
      %p212 = scmp.ne.s32.totalorder %s203, %s204
      %p213 = scmp.eq.s32.totalorder %s25, 0
      %p214 = por %p212, %p213
      %p215 = scmp.ne.s32.totalorder %s203, %s204
      %p216 = scmp.eq.s32.totalorder %s26, 1
      %p217 = por %p215, %p216
      %p219 = scmp.ne.s32.totalorder %s204, %s218
      %p220 = scmp.eq.s32.totalorder %s26, 0
      %p221 = por %p219, %p220
      %s223 = sadd.s32 %s222, 1
      %p226 = scmp.eq.s32.totalorder %s20, 1
      %p227 = scmp.ne.s32.totalorder %s222, %s224
      %p228 = scmp.eq.s32.totalorder %s20, 0
      %p229 = por %p227, %p228
      %p230 = scmp.ne.s32.totalorder %s222, %s224
      %p231 = scmp.eq.s32.totalorder %s25, 1
      %p232 = por %p230, %p231
      %p233 = scmp.ne.s32.totalorder %s224, %s225
      %p234 = scmp.eq.s32.totalorder %s25, 0
      %p235 = por %p233, %p234
      %p236 = scmp.ne.s32.totalorder %s224, %s225
      %p237 = scmp.eq.s32.totalorder %s26, 1
      %p238 = por %p236, %p237
      %p240 = scmp.ne.s32.totalorder %s225, %s239
      %p241 = scmp.eq.s32.totalorder %s26, 0
      %p242 = por %p240, %p241
      %s244 = sadd.s32 %s243, 1
      %p247 = scmp.eq.s32.totalorder %s20, 1
      %p248 = scmp.ne.s32.totalorder %s243, %s245
      %p249 = scmp.eq.s32.totalorder %s20, 0
      %p250 = por %p248, %p249
      %p251 = scmp.ne.s32.totalorder %s243, %s245
      %p252 = scmp.eq.s32.totalorder %s25, 1
      %p253 = por %p251, %p252
      %p254 = scmp.ne.s32.totalorder %s245, %s246
      %p255 = scmp.eq.s32.totalorder %s25, 0
      %p256 = por %p254, %p255
      %p257 = scmp.ne.s32.totalorder %s245, %s246
      %p258 = scmp.eq.s32.totalorder %s26, 1
      %p259 = por %p257, %p258
      %p261 = scmp.ne.s32.totalorder %s246, %s260
      %p262 = scmp.eq.s32.totalorder %s26, 0
      %p263 = por %p261, %p262
      %s264 = ssub.s32 %s20, %s27
      %p265 = scmp.eq.s32.totalorder %s264, 0
      %s267 = sadd.s32 %s266, 1
      %s268 = scalar_select %p265, %s266, %s267
      %p271 = pneg %p265
      %p272 = scmp.eq.s32.totalorder %s20, 1
      %p273 = por %p271, %p272
      %p274 = scmp.ne.s32.totalorder %s266, %s269
      %p275 = scmp.eq.s32.totalorder %s20, 0
      %p276 = por %p274, %p275
      %p277 = scmp.ne.s32.totalorder %s266, %s269
      %p278 = scmp.eq.s32.totalorder %s25, 1
      %p279 = por %p277, %p278
      %p280 = scmp.ne.s32.totalorder %s269, %s270
      %p281 = scmp.eq.s32.totalorder %s25, 0
      %p282 = por %p280, %p281
      %p283 = scmp.ne.s32.totalorder %s269, %s270
      %p284 = scmp.eq.s32.totalorder %s26, 1
      %p285 = por %p283, %p284
      %p287 = scmp.ne.s32.totalorder %s270, %s286
      %p288 = scmp.eq.s32.totalorder %s26, 0
      %p289 = por %p287, %p288
      %p290 = scmp.le.s32.totalorder 1, %s20
      %p291 = scmp.lt.s32.totalorder %s20, 3
      %p292 = pnand %p290, %p291
      %p293 = pneg %p292
      // Predicated region
      $region9: #{convnet_forward.1} parent=5 // pred_check
        _
      $region10: #{convnet_forward.1} parent=5 // pred_check_branch
        %295 = sbr.rel (%p292) target = $region12
      $region11: #{convnet_forward.1} parent=5 // pred_region
        %s296 = ssub.s32 %s20, 1
        // Predicated region
        $region13: #{convnet_forward.1} parent=11 // pred_check
          %p297 = pneg %p67
        $region14: #{convnet_forward.1} parent=11 // pred_check_branch
          %299 = sbr.rel (%p297) target = $region16
        $region15: #{convnet_forward.1} parent=11 // pred_region
          _
        $region16: #{convnet_forward.1} parent=11 // pred_fallthru
          _
        // Predicated region
        $region17: #{convnet_forward.1} parent=11 // pred_check
          %p300 = pneg %p88
        $region18: #{convnet_forward.1} parent=11 // pred_check_branch
          %302 = sbr.rel (%p300) target = $region20
        $region19: #{convnet_forward.1} parent=11 // pred_region
          _
        $region20: #{convnet_forward.1} parent=11 // pred_fallthru
          _
        // Predicated region
        $region21: #{convnet_forward.1} parent=11 // pred_check
          %p303 = pneg %p109
        $region22: #{convnet_forward.1} parent=11 // pred_check_branch
          %305 = sbr.rel (%p303) target = $region24
        $region23: #{convnet_forward.1} parent=11 // pred_region
          _
        $region24: #{convnet_forward.1} parent=11 // pred_fallthru
          _
        // Predicated region
        $region25: #{convnet_forward.1} parent=11 // pred_check
          %p306 = pneg %p130
        $region26: #{convnet_forward.1} parent=11 // pred_check_branch
          %308 = sbr.rel (%p306) target = $region28
        $region27: #{convnet_forward.1} parent=11 // pred_region
          _
        $region28: #{convnet_forward.1} parent=11 // pred_fallthru
          _
        // Predicated region
        $region29: #{convnet_forward.1} parent=11 // pred_check
          %p309 = pneg %p151
        $region30: #{convnet_forward.1} parent=11 // pred_check_branch
          %311 = sbr.rel (%p309) target = $region32
        $region31: #{convnet_forward.1} parent=11 // pred_region
          _
        $region32: #{convnet_forward.1} parent=11 // pred_fallthru
          _
        // Predicated region
        $region33: #{convnet_forward.1} parent=11 // pred_check
          %p312 = pneg %p172
        $region34: #{convnet_forward.1} parent=11 // pred_check_branch
          %314 = sbr.rel (%p312) target = $region36
        $region35: #{convnet_forward.1} parent=11 // pred_region
          _
        $region36: #{convnet_forward.1} parent=11 // pred_fallthru
          _
        // Predicated region
        $region37: #{convnet_forward.1} parent=11 // pred_check
          %p315 = pneg %p193
        $region38: #{convnet_forward.1} parent=11 // pred_check_branch
          %317 = sbr.rel (%p315) target = $region40
        $region39: #{convnet_forward.1} parent=11 // pred_region
          _
        $region40: #{convnet_forward.1} parent=11 // pred_fallthru
          _
        // Predicated region
        $region41: #{convnet_forward.1} parent=11 // pred_check
          %p318 = pneg %p214
        $region42: #{convnet_forward.1} parent=11 // pred_check_branch
          %320 = sbr.rel (%p318) target = $region44
        $region43: #{convnet_forward.1} parent=11 // pred_region
          _
        $region44: #{convnet_forward.1} parent=11 // pred_fallthru
          _
        // Predicated region
        $region45: #{convnet_forward.1} parent=11 // pred_check
          %p321 = pneg %p235
        $region46: #{convnet_forward.1} parent=11 // pred_check_branch
          %323 = sbr.rel (%p321) target = $region48
        $region47: #{convnet_forward.1} parent=11 // pred_region
          _
        $region48: #{convnet_forward.1} parent=11 // pred_fallthru
          _
        // Predicated region
        $region49: #{convnet_forward.1} parent=11 // pred_check
          %p324 = pneg %p256
        $region50: #{convnet_forward.1} parent=11 // pred_check_branch
          %326 = sbr.rel (%p324) target = $region52
        $region51: #{convnet_forward.1} parent=11 // pred_region
          _
        $region52: #{convnet_forward.1} parent=11 // pred_fallthru
          _
      $region12: #{convnet_forward.1} parent=5 // pred_fallthru
        _
      %p327 = scmp.lt.s32.totalorder %s20, 2
      // Predicated region
      $region53: #{convnet_forward.1} parent=5 // pred_check
        %p328 = pneg %p327
      $region54: #{convnet_forward.1} parent=5 // pred_check_branch
        %330 = sbr.rel (%p328) target = $region56
      $region55: #{convnet_forward.1} parent=5 // pred_region
        // Predicated region
        $region57: #{convnet_forward.1} parent=55 // pred_check
          %p331 = pneg %p40
        $region58: #{convnet_forward.1} parent=55 // pred_check_branch
          %333 = sbr.rel (%p331) target = $region60
        $region59: #{convnet_forward.1} parent=55 // pred_region
          %p334 = scmp.lt.s32.totalorder %s20, 1
          %s335 = scalar_select %p334, %s20, 1
          %s336 = smul.addr %s335, 32
          %s337 = smul.addr %s336, 4
          %s338 = scalar_lea.vmem %s0, %s337
        $region60: #{convnet_forward.1} parent=55 // pred_fallthru
          _
      $region56: #{convnet_forward.1} parent=5 // pred_fallthru
        _
      %p339 = scmp.le.s32.totalorder 1, %s20
      %p340 = scmp.lt.s32.totalorder %s20, 3
      %p341 = pnand %p339, %p340
      %p342 = pneg %p341
      // Predicated region
      $region61: #{convnet_forward.1} parent=5 // pred_check
        _
      $region62: #{convnet_forward.1} parent=5 // pred_check_branch
        %344 = sbr.rel (%p341) target = $region64
      $region63: #{convnet_forward.1} parent=5 // pred_region
        %s345 = ssub.s32 %s20, 1
        %p346 = scmp.lt.s32.totalorder %s25, 1
        %s347 = scalar_select %p346, %s25, 1
        %s348 = smul.addr %s347, 32
        %s349 = smul.addr %s348, 4
        %s350 = scalar_lea.vmem %s0, %s349
        %p351 = pneg %p46
        %p352 = pneg %p43
        %p353 = pneg %p67
        %p354 = pneg %p64
        %p355 = pneg %p88
        %p356 = pneg %p85
        %p357 = pneg %p109
        %p358 = pneg %p106
        %p359 = pneg %p130
        %p360 = pneg %p127
        %p361 = pneg %p151
        %p362 = pneg %p148
        %p363 = pneg %p172
        %p364 = pneg %p169
        %p365 = pneg %p193
        %p366 = pneg %p190
        %p367 = pneg %p214
        %p368 = pneg %p211
        %p369 = pneg %p235
        %p370 = pneg %p232
        %p371 = pneg %p256
        %p372 = pneg %p253
        %p373 = pneg %p282
        %p374 = pneg %p279
        %s375 = sand.u32 %s269, 1
        %s376 = scalar_lea.sflag [#allocation7], %s375
        %s377 = sand.u32 %s269, 1
        %s378 = smul.addr %s377, 8
        %s379 = scalar_lea.vmem [#allocation6], %s378
        %p380 = scmp.lt.s32.totalorder %s25, 1
        %s381 = scalar_select %p380, %s25, 1
        %s382 = smul.addr %s381, 32
        %s383 = smul.addr %s382, 4
        %s384 = scalar_lea.vmem %s0, %s383
        %v386 = vld [vmem:[%s384] sm:$0xf]
        %v387 = vld [vmem:[%s384 + $0x4] sm:$0xf]
        %v388 = vld [vmem:[%s384 + $0x8] sm:$0xf]
        %v389 = vld [vmem:[%s384 + $0xc] sm:$0xf]
        %v390 = vld [vmem:[%s384 + $0x10] sm:$0xf]
        %v391 = vld [vmem:[%s384 + $0x14] sm:$0xf]
        %v392 = vld [vmem:[%s384 + $0x18] sm:$0xf]
        %v393 = vld [vmem:[%s384 + $0x1c] sm:$0xf]
        %v394 = vld [vmem:[%s384 + $0x20] sm:$0xf]
        %v395 = vld [vmem:[%s384 + $0x24] sm:$0xf]
        %v396 = vld [vmem:[%s384 + $0x28] sm:$0xf]
        %v397 = vld [vmem:[%s384 + $0x2c] sm:$0xf]
        %v398 = vld [vmem:[%s384 + $0x30] sm:$0xf]
        %v399 = vld [vmem:[%s384 + $0x34] sm:$0xf]
        %v400 = vld [vmem:[%s384 + $0x38] sm:$0xf]
        %v401 = vld [vmem:[%s384 + $0x3c] sm:$0xf]
        %v402 = vld [vmem:[%s384 + $0x40] sm:$0xf]
        %v403 = vld [vmem:[%s384 + $0x44] sm:$0xf]
        %v404 = vld [vmem:[%s384 + $0x48] sm:$0xf]
        %v405 = vld [vmem:[%s384 + $0x4c] sm:$0xf]
        %v406 = vld [vmem:[%s384 + $0x50] sm:$0xf]
        %v407 = vld [vmem:[%s384 + $0x54] sm:$0xf]
        %v408 = vld [vmem:[%s384 + $0x58] sm:$0xf]
        %v409 = vld [vmem:[%s384 + $0x5c] sm:$0xf]
        %v410 = vld [vmem:[%s384 + $0x60] sm:$0xf]
        %v411 = vld [vmem:[%s384 + $0x64] sm:$0xf]
        %v412 = vld [vmem:[%s384 + $0x68] sm:$0xf]
        %v413 = vld [vmem:[%s384 + $0x6c] sm:$0xf]
        %v414 = vld [vmem:[%s384 + $0x70] sm:$0xf]
        %v415 = vld [vmem:[%s384 + $0x74] sm:$0xf]
        %v416 = vld [vmem:[%s384 + $0x78] sm:$0xf]
        %v417 = vld [vmem:[%s384 + $0x7c] sm:$0xf]
        %v418 = vld [vmem:[%s1] sm:$0xff]
        %v419 = vld [vmem:[%s1 + $0x8] sm:$0xff]
        %v420 = vld [vmem:[%s1 + $0x10] sm:$0xff]
        %v421 = vld [vmem:[%s1 + $0x18] sm:$0xff]
        %v422 = vld [vmem:[%s1 + $0x20] sm:$0xff]
        %v423 = vld [vmem:[%s1 + $0x28] sm:$0xff]
        %v424 = vld [vmem:[%s1 + $0x30] sm:$0xff]
        %v425 = vld [vmem:[%s1 + $0x38] sm:$0xff]
        %v426 = vld [vmem:[%s1 + $0x40] sm:$0xff]
        %v427 = vld [vmem:[%s1 + $0x48] sm:$0xff]
        %v428 = vld [vmem:[%s1 + $0x50] sm:$0xff]
        %v429 = vld [vmem:[%s1 + $0x58] sm:$0xff]
        %v430 = vld [vmem:[%s1 + $0x60] sm:$0xff]
        %v431 = vld [vmem:[%s1 + $0x68] sm:$0xff]
        %v432 = vld [vmem:[%s1 + $0x70] sm:$0xff]
        %v433 = vld [vmem:[%s1 + $0x78] sm:$0xff]
        %v466 = vunpack.c.l.b16 %v386
        %v467 = vunpack.c.l.b16 %v387
        %v468 = vunpack.c.l.b16 %v388
        %v469 = vunpack.c.l.b16 %v389
        %v470 = vunpack.c.l.b16 %v390
        %v471 = vunpack.c.l.b16 %v391
        %v472 = vunpack.c.l.b16 %v392
        %v473 = vunpack.c.l.b16 %v393
        %v474 = vunpack.c.l.b16 %v394
        %v475 = vunpack.c.l.b16 %v395
        %v476 = vunpack.c.l.b16 %v396
        %v477 = vunpack.c.l.b16 %v397
        %v478 = vunpack.c.l.b16 %v398
        %v479 = vunpack.c.l.b16 %v399
        %v480 = vunpack.c.l.b16 %v400
        %v481 = vunpack.c.l.b16 %v401
        %v482 = vunpack.c.l.b16 %v402
        %v483 = vunpack.c.l.b16 %v403
        %v484 = vunpack.c.l.b16 %v404
        %v485 = vunpack.c.l.b16 %v405
        %v486 = vunpack.c.l.b16 %v406
        %v487 = vunpack.c.l.b16 %v407
        %v488 = vunpack.c.l.b16 %v408
        %v489 = vunpack.c.l.b16 %v409
        %v490 = vunpack.c.l.b16 %v410
        %v491 = vunpack.c.l.b16 %v411
        %v492 = vunpack.c.l.b16 %v412
        %v493 = vunpack.c.l.b16 %v413
        %v494 = vunpack.c.l.b16 %v414
        %v495 = vunpack.c.l.b16 %v415
        %v496 = vunpack.c.l.b16 %v416
        %v497 = vunpack.c.l.b16 %v417
        %v498 = vpack.c.b16 %v467, %v466
        %v499 = vpack.c.b16 %v469, %v468
        %v500 = vpack.c.b16 %v471, %v470
        %v501 = vpack.c.b16 %v473, %v472
        %v502 = vpack.c.b16 %v475, %v474
        %v503 = vpack.c.b16 %v477, %v476
        %v504 = vpack.c.b16 %v479, %v478
        %v505 = vpack.c.b16 %v481, %v480
        %v506 = vpack.c.b16 %v483, %v482
        %v507 = vpack.c.b16 %v485, %v484
        %v508 = vpack.c.b16 %v487, %v486
        %v509 = vpack.c.b16 %v489, %v488
        %v510 = vpack.c.b16 %v491, %v490
        %v511 = vpack.c.b16 %v493, %v492
        %v512 = vpack.c.b16 %v495, %v494
        %v513 = vpack.c.b16 %v497, %v496
        %v546 = vunpack.c.l.b16 %v418
        %v547 = vunpack.c.h.b16 %v418
        %v548 = vunpack.c.l.b16 %v419
        %v549 = vunpack.c.h.b16 %v419
        %v550 = vunpack.c.l.b16 %v420
        %v551 = vunpack.c.h.b16 %v420
        %v552 = vunpack.c.l.b16 %v421
        %v553 = vunpack.c.h.b16 %v421
        %v554 = vunpack.c.l.b16 %v422
        %v555 = vunpack.c.h.b16 %v422
        %v556 = vunpack.c.l.b16 %v423
        %v557 = vunpack.c.h.b16 %v423
        %v558 = vunpack.c.l.b16 %v424
        %v559 = vunpack.c.h.b16 %v424
        %v560 = vunpack.c.l.b16 %v425
        %v561 = vunpack.c.h.b16 %v425
        %v562 = vunpack.c.l.b16 %v426
        %v563 = vunpack.c.h.b16 %v426
        %v564 = vunpack.c.l.b16 %v427
        %v565 = vunpack.c.h.b16 %v427
        %v566 = vunpack.c.l.b16 %v428
        %v567 = vunpack.c.h.b16 %v428
        %v568 = vunpack.c.l.b16 %v429
        %v569 = vunpack.c.h.b16 %v429
        %v570 = vunpack.c.l.b16 %v430
        %v571 = vunpack.c.h.b16 %v430
        %v572 = vunpack.c.l.b16 %v431
        %v573 = vunpack.c.h.b16 %v431
        %v574 = vunpack.c.l.b16 %v432
        %v575 = vunpack.c.h.b16 %v432
        %v576 = vunpack.c.l.b16 %v433
        %v577 = vunpack.c.h.b16 %v433
        %v578 = vpack.c.b16 %v548, %v546
        %v579 = vpack.c.b16 %v549, %v547
        %v580 = vpack.c.b16 %v552, %v550
        %v581 = vpack.c.b16 %v553, %v551
        %v582 = vpack.c.b16 %v556, %v554
        %v583 = vpack.c.b16 %v557, %v555
        %v584 = vpack.c.b16 %v560, %v558
        %v585 = vpack.c.b16 %v561, %v559
        %v586 = vpack.c.b16 %v564, %v562
        %v587 = vpack.c.b16 %v565, %v563
        %v588 = vpack.c.b16 %v568, %v566
        %v589 = vpack.c.b16 %v569, %v567
        %v590 = vpack.c.b16 %v572, %v570
        %v591 = vpack.c.b16 %v573, %v571
        %v592 = vpack.c.b16 %v576, %v574
        %v593 = vpack.c.b16 %v577, %v575
        %610 = vmatprep.subr.bf16.mxu0 %v579
        %611 = vmatpush1.bf16.msra.mxu0 %v578
        %612 = vmatprep.subr.bf16.mxu0 %v581
        %613 = vmatpush1.bf16.msra.mxu0 %v580
        %614 = vmatprep.subr.bf16.mxu0 %v583
        %615 = vmatpush1.bf16.msra.mxu0 %v582
        %616 = vmatprep.subr.bf16.mxu0 %v585
        %617 = vmatpush1.bf16.msra.mxu0 %v584
        %618 = vmatprep.subr.bf16.mxu0 %v587
        %619 = vmatpush1.bf16.msra.mxu0 %v586
        %620 = vmatprep.subr.bf16.mxu0 %v589
        %621 = vmatpush1.bf16.msra.mxu0 %v588
        %622 = vmatprep.subr.bf16.mxu0 %v591
        %623 = vmatpush1.bf16.msra.mxu0 %v590
        %624 = vmatprep.subr.bf16.mxu0 %v593
        %625 = vmatpush1.bf16.msra.mxu0 %v592
        %626 = vmatprep.subr.bf16.mxu0 0
        %627 = vmatpush1.bf16.msra.mxu0 0
        %628 = vmatprep.subr.bf16.mxu0 0
        %629 = vmatpush1.bf16.msra.mxu0 0
        %630 = vmatprep.subr.bf16.mxu0 0
        %631 = vmatpush1.bf16.msra.mxu0 0
        %632 = vmatprep.subr.bf16.mxu0 0
        %633 = vmatpush1.bf16.msra.mxu0 0
        %634 = vmatprep.subr.bf16.mxu0 0
        %635 = vmatpush1.bf16.msra.mxu0 0
        %636 = vmatprep.subr.bf16.mxu0 0
        %637 = vmatpush1.bf16.msra.mxu0 0
        %638 = vmatprep.subr.bf16.mxu0 0
        %639 = vmatpush1.bf16.msra.mxu0 0
        %640 = vmatprep.subr.bf16.mxu0 0
        %641 = vmatpush1.bf16.msra.mxu0 0
        %642 = vmatprep.mubr.bf16.mxu0 0
        %643 = vmatmul.mubr.bf16.gmra.mrb[0].mxu0 %v498
        %v644 = vpop.f32.mrb[0].mxu0
        %v645 = vadd.f32 0.0, %v644
        %v646 = vpop.f32.mrb[0].mxu0
        %v647 = vadd.f32 0.0, %v646
        %v648 = vpop.f32.mrb[0].mxu0
        %v649 = vadd.f32 0.0, %v648
        %v650 = vpop.f32.mrb[0].mxu0
        %v651 = vadd.f32 0.0, %v650
        %652 = vmatprep.mubr.bf16.mxu0 0
        %653 = vmatmul.mubr.bf16.gmra.mrb[0].mxu0 %v499
        %v654 = vpop.f32.mrb[0].mxu0
        %v655 = vadd.f32 0.0, %v654
        %v656 = vpop.f32.mrb[0].mxu0
        %v657 = vadd.f32 0.0, %v656
        %v658 = vpop.f32.mrb[0].mxu0
        %v659 = vadd.f32 0.0, %v658
        %v660 = vpop.f32.mrb[0].mxu0
        %v661 = vadd.f32 0.0, %v660
        %662 = vmatprep.mubr.bf16.mxu0 0
        %663 = vmatmul.mubr.bf16.gmra.mrb[0].mxu0 %v500
        %v664 = vpop.f32.mrb[0].mxu0
        %v665 = vadd.f32 0.0, %v664
        %v666 = vpop.f32.mrb[0].mxu0
        %v667 = vadd.f32 0.0, %v666
        %v668 = vpop.f32.mrb[0].mxu0
        %v669 = vadd.f32 0.0, %v668
        %v670 = vpop.f32.mrb[0].mxu0
        %v671 = vadd.f32 0.0, %v670
        %672 = vmatprep.mubr.bf16.mxu0 0
        %673 = vmatmul.mubr.bf16.gmra.mrb[0].mxu0 %v501
        %v674 = vpop.f32.mrb[0].mxu0
        %v675 = vadd.f32 0.0, %v674
        %v676 = vpop.f32.mrb[0].mxu0
        %v677 = vadd.f32 0.0, %v676
        %v678 = vpop.f32.mrb[0].mxu0
        %v679 = vadd.f32 0.0, %v678
        %v680 = vpop.f32.mrb[0].mxu0
        %v681 = vadd.f32 0.0, %v680
        %682 = vmatprep.mubr.bf16.mxu0 0
        %683 = vmatmul.mubr.bf16.gmra.mrb[0].mxu0 %v502
        %v684 = vpop.f32.mrb[0].mxu0
        %v685 = vadd.f32 0.0, %v684
        %v686 = vpop.f32.mrb[0].mxu0
        %v687 = vadd.f32 0.0, %v686
        %v688 = vpop.f32.mrb[0].mxu0
        %v689 = vadd.f32 0.0, %v688
        %v690 = vpop.f32.mrb[0].mxu0
        %v691 = vadd.f32 0.0, %v690
        %692 = vmatprep.mubr.bf16.mxu0 0
        %693 = vmatmul.mubr.bf16.gmra.mrb[0].mxu0 %v503
        %v694 = vpop.f32.mrb[0].mxu0
        %v695 = vadd.f32 0.0, %v694
        %v696 = vpop.f32.mrb[0].mxu0
        %v697 = vadd.f32 0.0, %v696
        %v698 = vpop.f32.mrb[0].mxu0
        %v699 = vadd.f32 0.0, %v698
        %v700 = vpop.f32.mrb[0].mxu0
        %v701 = vadd.f32 0.0, %v700
        %702 = vmatprep.mubr.bf16.mxu0 0
        %703 = vmatmul.mubr.bf16.gmra.mrb[0].mxu0 %v504
        %v704 = vpop.f32.mrb[0].mxu0
        %v705 = vadd.f32 0.0, %v704
        %v706 = vpop.f32.mrb[0].mxu0
        %v707 = vadd.f32 0.0, %v706
        %v708 = vpop.f32.mrb[0].mxu0
        %v709 = vadd.f32 0.0, %v708
        %v710 = vpop.f32.mrb[0].mxu0
        %v711 = vadd.f32 0.0, %v710
        %712 = vmatprep.mubr.bf16.mxu0 0
        %713 = vmatmul.mubr.bf16.gmra.mrb[0].mxu0 %v505
        %v714 = vpop.f32.mrb[0].mxu0
        %v715 = vadd.f32 0.0, %v714
        %v716 = vpop.f32.mrb[0].mxu0
        %v717 = vadd.f32 0.0, %v716
        %v718 = vpop.f32.mrb[0].mxu0
        %v719 = vadd.f32 0.0, %v718
        %v720 = vpop.f32.mrb[0].mxu0
        %v721 = vadd.f32 0.0, %v720
        %722 = vmatprep.mubr.bf16.mxu0 0
        %723 = vmatmul.mubr.bf16.gmra.mrb[0].mxu0 %v506
        %v724 = vpop.f32.mrb[0].mxu0
        %v725 = vadd.f32 0.0, %v724
        %v726 = vpop.f32.mrb[0].mxu0
        %v727 = vadd.f32 0.0, %v726
        %v728 = vpop.f32.mrb[0].mxu0
        %v729 = vadd.f32 0.0, %v728
        %v730 = vpop.f32.mrb[0].mxu0
        %v731 = vadd.f32 0.0, %v730
        %732 = vmatprep.mubr.bf16.mxu0 0
        %733 = vmatmul.mubr.bf16.gmra.mrb[0].mxu0 %v507
        %v734 = vpop.f32.mrb[0].mxu0
        %v735 = vadd.f32 0.0, %v734
        %v736 = vpop.f32.mrb[0].mxu0
        %v737 = vadd.f32 0.0, %v736
        %v738 = vpop.f32.mrb[0].mxu0
        %v739 = vadd.f32 0.0, %v738
        %v740 = vpop.f32.mrb[0].mxu0
        %v741 = vadd.f32 0.0, %v740
        %742 = vmatprep.mubr.bf16.mxu0 0
        %743 = vmatmul.mubr.bf16.gmra.mrb[0].mxu0 %v508
        %v744 = vpop.f32.mrb[0].mxu0
        %v745 = vadd.f32 0.0, %v744
        %v746 = vpop.f32.mrb[0].mxu0
        %v747 = vadd.f32 0.0, %v746
        %v748 = vpop.f32.mrb[0].mxu0
        %v749 = vadd.f32 0.0, %v748
        %v750 = vpop.f32.mrb[0].mxu0
        %v751 = vadd.f32 0.0, %v750
        %752 = vmatprep.mubr.bf16.mxu0 0
        %753 = vmatmul.mubr.bf16.gmra.mrb[0].mxu0 %v509
        %v754 = vpop.f32.mrb[0].mxu0
        %v755 = vadd.f32 0.0, %v754
        %v756 = vpop.f32.mrb[0].mxu0
        %v757 = vadd.f32 0.0, %v756
        %v758 = vpop.f32.mrb[0].mxu0
        %v759 = vadd.f32 0.0, %v758
        %v760 = vpop.f32.mrb[0].mxu0
        %v761 = vadd.f32 0.0, %v760
        %762 = vmatprep.mubr.bf16.mxu0 0
        %763 = vmatmul.mubr.bf16.gmra.mrb[0].mxu0 %v510
        %v764 = vpop.f32.mrb[0].mxu0
        %v765 = vadd.f32 0.0, %v764
        %v766 = vpop.f32.mrb[0].mxu0
        %v767 = vadd.f32 0.0, %v766
        %v768 = vpop.f32.mrb[0].mxu0
        %v769 = vadd.f32 0.0, %v768
        %v770 = vpop.f32.mrb[0].mxu0
        %v771 = vadd.f32 0.0, %v770
        %772 = vmatprep.mubr.bf16.mxu0 0
        %773 = vmatmul.mubr.bf16.gmra.mrb[0].mxu0 %v511
        %v774 = vpop.f32.mrb[0].mxu0
        %v775 = vadd.f32 0.0, %v774
        %v776 = vpop.f32.mrb[0].mxu0
        %v777 = vadd.f32 0.0, %v776
        %v778 = vpop.f32.mrb[0].mxu0
        %v779 = vadd.f32 0.0, %v778
        %v780 = vpop.f32.mrb[0].mxu0
        %v781 = vadd.f32 0.0, %v780
        %782 = vmatprep.mubr.bf16.mxu0 0
        %783 = vmatmul.mubr.bf16.gmra.mrb[0].mxu0 %v512
        %v784 = vpop.f32.mrb[0].mxu0
        %v785 = vpop.f32.mrb[0].mxu0
        %v786 = vpop.f32.mrb[0].mxu0
        %v787 = vpop.f32.mrb[0].mxu0
        %788 = vmatprep.mubr.bf16.mxu0 0
        %789 = vmatmul.mubr.bf16.gmra.mrb[0].mxu0 %v513
        %v790 = vpop.f32.mrb[0].mxu0
        %v791 = vpop.f32.mrb[0].mxu0
        %v792 = vpop.f32.mrb[0].mxu0
        %v793 = vpop.f32.mrb[0].mxu0
        %794 = vdwg.mxu0
        %s795 = scalar_lea.vmem %s1, 128
        %v796 = vld [vmem:[%s795] sm:$0xff]
        %v797 = vld [vmem:[%s795 + $0x8] sm:$0xff]
        %v798 = vld [vmem:[%s795 + $0x10] sm:$0xff]
        %v799 = vld [vmem:[%s795 + $0x18] sm:$0xff]
        %v800 = vld [vmem:[%s795 + $0x20] sm:$0xff]
        %v801 = vld [vmem:[%s795 + $0x28] sm:$0xff]
        %v802 = vld [vmem:[%s795 + $0x30] sm:$0xff]
        %v803 = vld [vmem:[%s795 + $0x38] sm:$0xff]
        %v804 = vld [vmem:[%s795 + $0x40] sm:$0xff]
        %v805 = vld [vmem:[%s795 + $0x48] sm:$0xff]
        %v806 = vld [vmem:[%s795 + $0x50] sm:$0xff]
        %v807 = vld [vmem:[%s795 + $0x58] sm:$0xff]
        %v808 = vld [vmem:[%s795 + $0x60] sm:$0xff]
        %v809 = vld [vmem:[%s795 + $0x68] sm:$0xff]
        %v810 = vld [vmem:[%s795 + $0x70] sm:$0xff]
        %v811 = vld [vmem:[%s795 + $0x78] sm:$0xff]
        %v828 = vunpack.c.l.b16 %v796
        %v829 = vunpack.c.h.b16 %v796
        %v830 = vunpack.c.l.b16 %v797
        %v831 = vunpack.c.h.b16 %v797
        %v832 = vunpack.c.l.b16 %v798
        %v833 = vunpack.c.h.b16 %v798
        %v834 = vunpack.c.l.b16 %v799
        %v835 = vunpack.c.h.b16 %v799
        %v836 = vunpack.c.l.b16 %v800
        %v837 = vunpack.c.h.b16 %v800
        %v838 = vunpack.c.l.b16 %v801
        %v839 = vunpack.c.h.b16 %v801
        %v840 = vunpack.c.l.b16 %v802
        %v841 = vunpack.c.h.b16 %v802
        %v842 = vunpack.c.l.b16 %v803
        %v843 = vunpack.c.h.b16 %v803
        %v844 = vunpack.c.l.b16 %v804
        %v845 = vunpack.c.h.b16 %v804
        %v846 = vunpack.c.l.b16 %v805
        %v847 = vunpack.c.h.b16 %v805
        %v848 = vunpack.c.l.b16 %v806
        %v849 = vunpack.c.h.b16 %v806
        %v850 = vunpack.c.l.b16 %v807
        %v851 = vunpack.c.h.b16 %v807
        %v852 = vunpack.c.l.b16 %v808
        %v853 = vunpack.c.h.b16 %v808
        %v854 = vunpack.c.l.b16 %v809
        %v855 = vunpack.c.h.b16 %v809
        %v856 = vunpack.c.l.b16 %v810
        %v857 = vunpack.c.h.b16 %v810
        %v858 = vunpack.c.l.b16 %v811
        %v859 = vunpack.c.h.b16 %v811
        %v860 = vpack.c.b16 %v830, %v828
        %v861 = vpack.c.b16 %v831, %v829
        %v862 = vpack.c.b16 %v834, %v832
        %v863 = vpack.c.b16 %v835, %v833
        %v864 = vpack.c.b16 %v838, %v836
        %v865 = vpack.c.b16 %v839, %v837
        %v866 = vpack.c.b16 %v842, %v840
        %v867 = vpack.c.b16 %v843, %v841
        %v868 = vpack.c.b16 %v846, %v844
        %v869 = vpack.c.b16 %v847, %v845
        %v870 = vpack.c.b16 %v850, %v848
        %v871 = vpack.c.b16 %v851, %v849
        %v872 = vpack.c.b16 %v854, %v852
        %v873 = vpack.c.b16 %v855, %v853
        %v874 = vpack.c.b16 %v858, %v856
        %v875 = vpack.c.b16 %v859, %v857
        %892 = vmatprep.subr.bf16.mxu0 %v861
        %893 = vmatpush1.bf16.msra.mxu0 %v860
        %894 = vmatprep.subr.bf16.mxu0 %v863
        %895 = vmatpush1.bf16.msra.mxu0 %v862
        %896 = vmatprep.subr.bf16.mxu0 %v865
        %897 = vmatpush1.bf16.msra.mxu0 %v864
        %898 = vmatprep.subr.bf16.mxu0 %v867
        %899 = vmatpush1.bf16.msra.mxu0 %v866
        %900 = vmatprep.subr.bf16.mxu0 %v869
        %901 = vmatpush1.bf16.msra.mxu0 %v868
        %902 = vmatprep.subr.bf16.mxu0 %v871
        %903 = vmatpush1.bf16.msra.mxu0 %v870
        %904 = vmatprep.subr.bf16.mxu0 %v873
        %905 = vmatpush1.bf16.msra.mxu0 %v872
        %906 = vmatprep.subr.bf16.mxu0 %v875
        %907 = vmatpush1.bf16.msra.mxu0 %v874
        %908 = vmatprep.subr.bf16.mxu0 0
        %909 = vmatpush1.bf16.msra.mxu0 0
        %910 = vmatprep.subr.bf16.mxu0 0
        %911 = vmatpush1.bf16.msra.mxu0 0
        %912 = vmatprep.subr.bf16.mxu0 0
        %913 = vmatpush1.bf16.msra.mxu0 0
        %914 = vmatprep.subr.bf16.mxu0 0
        %915 = vmatpush1.bf16.msra.mxu0 0
        %916 = vmatprep.subr.bf16.mxu0 0
        %917 = vmatpush1.bf16.msra.mxu0 0
        %918 = vmatprep.subr.bf16.mxu0 0
        %919 = vmatpush1.bf16.msra.mxu0 0
        %920 = vmatprep.subr.bf16.mxu0 0
        %921 = vmatpush1.bf16.msra.mxu0 0
        %922 = vmatprep.subr.bf16.mxu0 0
        %923 = vmatpush1.bf16.msra.mxu0 0
        %924 = vmatprep.mubr.bf16.mxu0 0
        %925 = vmatmul.mubr.bf16.gmra.mrb[0].mxu0 %v498
        %v926 = vpop.f32.mrb[0].mxu0
        %v927 = vpop.f32.mrb[0].mxu0
        %v928 = vpop.f32.mrb[0].mxu0
        %v929 = vadd.f32 0.0, %v928
        %v930 = vpop.f32.mrb[0].mxu0
        %v931 = vadd.f32 0.0, %v930
        %932 = vmatprep.mubr.bf16.mxu0 0
        %933 = vmatmul.mubr.bf16.gmra.mrb[0].mxu0 %v499
        %v934 = vpop.f32.mrb[0].mxu0
        %v935 = vadd.f32 0.0, %v934
        %v936 = vpop.f32.mrb[0].mxu0
        %v937 = vadd.f32 0.0, %v936
        %v938 = vpop.f32.mrb[0].mxu0
        %v939 = vadd.f32 0.0, %v938
        %v940 = vpop.f32.mrb[0].mxu0
        %v941 = vadd.f32 0.0, %v940
        %942 = vmatprep.mubr.bf16.mxu0 0
        %943 = vmatmul.mubr.bf16.gmra.mrb[0].mxu0 %v500
        %v944 = vpop.f32.mrb[0].mxu0
        %v945 = vadd.f32 0.0, %v944
        %v946 = vpop.f32.mrb[0].mxu0
        %v947 = vadd.f32 0.0, %v946
        %v948 = vpop.f32.mrb[0].mxu0
        %v949 = vadd.f32 0.0, %v948
        %v950 = vpop.f32.mrb[0].mxu0
        %v951 = vadd.f32 0.0, %v950
        %952 = vmatprep.mubr.bf16.mxu0 0
        %953 = vmatmul.mubr.bf16.gmra.mrb[0].mxu0 %v501
        %v954 = vpop.f32.mrb[0].mxu0
        %v955 = vadd.f32 0.0, %v954
        %v956 = vpop.f32.mrb[0].mxu0
        %v957 = vadd.f32 0.0, %v956
        %v958 = vpop.f32.mrb[0].mxu0
        %v959 = vadd.f32 0.0, %v958
        %v960 = vpop.f32.mrb[0].mxu0
        %v961 = vadd.f32 0.0, %v960
        %962 = vmatprep.mubr.bf16.mxu0 0
        %963 = vmatmul.mubr.bf16.gmra.mrb[0].mxu0 %v502
        %v964 = vpop.f32.mrb[0].mxu0
        %v965 = vadd.f32 0.0, %v964
        %v966 = vpop.f32.mrb[0].mxu0
        %v967 = vadd.f32 0.0, %v966
        %v968 = vpop.f32.mrb[0].mxu0
        %v969 = vadd.f32 0.0, %v968
        %v970 = vpop.f32.mrb[0].mxu0
        %v971 = vadd.f32 0.0, %v970
        %972 = vmatprep.mubr.bf16.mxu0 0
        %973 = vmatmul.mubr.bf16.gmra.mrb[0].mxu0 %v503
        %v974 = vpop.f32.mrb[0].mxu0
        %v975 = vadd.f32 0.0, %v974
        %v976 = vpop.f32.mrb[0].mxu0
        %v977 = vadd.f32 0.0, %v976
        %v978 = vpop.f32.mrb[0].mxu0
        %v979 = vadd.f32 0.0, %v978
        %v980 = vpop.f32.mrb[0].mxu0
        %v981 = vadd.f32 0.0, %v980
        %982 = vmatprep.mubr.bf16.mxu0 0
        %983 = vmatmul.mubr.bf16.gmra.mrb[0].mxu0 %v504
        %v984 = vpop.f32.mrb[0].mxu0
        %v985 = vadd.f32 0.0, %v984
        %v986 = vpop.f32.mrb[0].mxu0
        %v987 = vadd.f32 0.0, %v986
        %v988 = vpop.f32.mrb[0].mxu0
        %v989 = vadd.f32 0.0, %v988
        %v990 = vpop.f32.mrb[0].mxu0
        %v991 = vadd.f32 0.0, %v990
        %992 = vmatprep.mubr.bf16.mxu0 0
        %993 = vmatmul.mubr.bf16.gmra.mrb[0].mxu0 %v505
        %v994 = vpop.f32.mrb[0].mxu0
        %v995 = vadd.f32 0.0, %v994
        %v996 = vpop.f32.mrb[0].mxu0
        %v997 = vadd.f32 0.0, %v996
        %v998 = vpop.f32.mrb[0].mxu0
        %v999 = vadd.f32 0.0, %v998
        %v1000 = vpop.f32.mrb[0].mxu0
        %v1001 = vadd.f32 0.0, %v1000
        %1002 = vmatprep.mubr.bf16.mxu0 0
        %1003 = vmatmul.mubr.bf16.gmra.mrb[0].mxu0 %v506
        %v1004 = vpop.f32.mrb[0].mxu0
        %v1005 = vadd.f32 0.0, %v1004
        %v1006 = vpop.f32.mrb[0].mxu0
        %v1007 = vadd.f32 0.0, %v1006
        %v1008 = vpop.f32.mrb[0].mxu0
        %v1009 = vadd.f32 0.0, %v1008
        %v1010 = vpop.f32.mrb[0].mxu0
        %v1011 = vadd.f32 0.0, %v1010
        %1012 = vmatprep.mubr.bf16.mxu0 0
        %1013 = vmatmul.mubr.bf16.gmra.mrb[0].mxu0 %v507
        %v1014 = vpop.f32.mrb[0].mxu0
        %v1015 = vadd.f32 0.0, %v1014
        %v1016 = vpop.f32.mrb[0].mxu0
        %v1017 = vadd.f32 0.0, %v1016
        %v1018 = vpop.f32.mrb[0].mxu0
        %v1019 = vadd.f32 0.0, %v1018
        %v1020 = vpop.f32.mrb[0].mxu0
        %v1021 = vadd.f32 0.0, %v1020
        %1022 = vmatprep.mubr.bf16.mxu0 0
        %1023 = vmatmul.mubr.bf16.gmra.mrb[0].mxu0 %v508
        %v1024 = vpop.f32.mrb[0].mxu0
        %v1025 = vadd.f32 0.0, %v1024
        %v1026 = vpop.f32.mrb[0].mxu0
        %v1027 = vadd.f32 0.0, %v1026
        %v1028 = vpop.f32.mrb[0].mxu0
        %v1029 = vadd.f32 0.0, %v1028
        %v1030 = vpop.f32.mrb[0].mxu0
        %v1031 = vadd.f32 0.0, %v1030
        %1032 = vmatprep.mubr.bf16.mxu0 0
        %1033 = vmatmul.mubr.bf16.gmra.mrb[0].mxu0 %v509
        %v1034 = vpop.f32.mrb[0].mxu0
        %v1035 = vadd.f32 0.0, %v1034
        %v1036 = vpop.f32.mrb[0].mxu0
        %v1037 = vadd.f32 0.0, %v1036
        %v1038 = vpop.f32.mrb[0].mxu0
        %v1039 = vadd.f32 0.0, %v1038
        %v1040 = vpop.f32.mrb[0].mxu0
        %v1041 = vadd.f32 0.0, %v1040
        %1042 = vmatprep.mubr.bf16.mxu0 0
        %1043 = vmatmul.mubr.bf16.gmra.mrb[0].mxu0 %v510
        %v1044 = vpop.f32.mrb[0].mxu0
        %v1045 = vadd.f32 0.0, %v1044
        %v1046 = vpop.f32.mrb[0].mxu0
        %v1047 = vadd.f32 0.0, %v1046
        %v1048 = vpop.f32.mrb[0].mxu0
        %v1049 = vadd.f32 0.0, %v1048
        %v1050 = vpop.f32.mrb[0].mxu0
        %v1051 = vadd.f32 0.0, %v1050
        %1052 = vmatprep.mubr.bf16.mxu0 0
        %1053 = vmatmul.mubr.bf16.gmra.mrb[0].mxu0 %v511
        %v1054 = vpop.f32.mrb[0].mxu0
        %v1055 = vadd.f32 0.0, %v1054
        %v1056 = vpop.f32.mrb[0].mxu0
        %v1057 = vadd.f32 0.0, %v1056
        %v1058 = vpop.f32.mrb[0].mxu0
        %v1059 = vadd.f32 0.0, %v1058
        %v1060 = vpop.f32.mrb[0].mxu0
        %v1061 = vadd.f32 0.0, %v1060
        %1062 = vmatprep.mubr.bf16.mxu0 0
        %1063 = vmatmul.mubr.bf16.gmra.mrb[0].mxu0 %v512
        %v1064 = vpop.f32.mrb[0].mxu0
        %v1065 = vadd.f32 0.0, %v1064
        %v1066 = vpop.f32.mrb[0].mxu0
        %v1067 = vadd.f32 0.0, %v1066
        %v1068 = vpop.f32.mrb[0].mxu0
        %v1069 = vpop.f32.mrb[0].mxu0
        %1070 = vmatprep.mubr.bf16.mxu0 0
        %1071 = vmatmul.mubr.bf16.gmra.mrb[0].mxu0 %v513
        %v1072 = vpop.f32.mrb[0].mxu0
        %v1073 = vpop.f32.mrb[0].mxu0
        %v1074 = vpop.f32.mrb[0].mxu0
        %v1075 = vpop.f32.mrb[0].mxu0
        %1076 = vdwg.mxu0
        %v1077 = vadd.f32 %v645, %v929
        %v1078 = vadd.f32 %v647, %v931
        %v1079 = vadd.f32 %v649, %v935
        %v1080 = vadd.f32 %v651, %v937
        %v1081 = vadd.f32 %v655, %v939
        %v1082 = vadd.f32 %v657, %v941
        %v1083 = vadd.f32 %v659, %v945
        %v1084 = vadd.f32 %v661, %v947
        %v1085 = vadd.f32 %v665, %v949
        %v1086 = vadd.f32 %v667, %v951
        %v1087 = vadd.f32 %v669, %v955
        %v1088 = vadd.f32 %v671, %v957
        %v1089 = vadd.f32 %v675, %v959
        %v1090 = vadd.f32 %v677, %v961
        %v1091 = vadd.f32 %v679, %v965
        %v1092 = vadd.f32 %v681, %v967
        %v1093 = vadd.f32 %v685, %v969
        %v1094 = vadd.f32 %v687, %v971
        %v1095 = vadd.f32 %v689, %v975
        %v1096 = vadd.f32 %v691, %v977
        %v1097 = vadd.f32 %v695, %v979
        %v1098 = vadd.f32 %v697, %v981
        %v1099 = vadd.f32 %v699, %v985
        %v1100 = vadd.f32 %v701, %v987
        %v1101 = vadd.f32 %v705, %v989
        %v1102 = vadd.f32 %v707, %v991
        %v1103 = vadd.f32 %v709, %v995
        %v1104 = vadd.f32 %v711, %v997
        %v1105 = vadd.f32 %v715, %v999
        %v1106 = vadd.f32 %v717, %v1001
        %v1107 = vadd.f32 %v719, %v1005
        %v1108 = vadd.f32 %v721, %v1007
        %v1109 = vadd.f32 %v725, %v1009
        %v1110 = vadd.f32 %v727, %v1011
        %v1111 = vadd.f32 %v729, %v1015
        %v1112 = vadd.f32 %v731, %v1017
        %v1113 = vadd.f32 %v735, %v1019
        %v1114 = vadd.f32 %v737, %v1021
        %v1115 = vadd.f32 %v739, %v1025
        %v1116 = vadd.f32 %v741, %v1027
        %v1117 = vadd.f32 %v745, %v1029
        %v1118 = vadd.f32 %v747, %v1031
        %v1119 = vadd.f32 %v749, %v1035
        %v1120 = vadd.f32 %v751, %v1037
        %v1121 = vadd.f32 %v755, %v1039
        %v1122 = vadd.f32 %v757, %v1041
        %v1123 = vadd.f32 %v759, %v1045
        %v1124 = vadd.f32 %v761, %v1047
        %v1125 = vadd.f32 %v765, %v1049
        %v1126 = vadd.f32 %v767, %v1051
        %v1127 = vadd.f32 %v769, %v1055
        %v1128 = vadd.f32 %v771, %v1057
        %v1129 = vadd.f32 %v775, %v1059
        %v1130 = vadd.f32 %v777, %v1061
        %v1131 = vadd.f32 %v779, %v1065
        %v1132 = vadd.f32 %v781, %v1067
        %s1133 = scalar_lea.vmem %s1, 256
        %v1134 = vld [vmem:[%s1133] sm:$0xff]
        %v1135 = vld [vmem:[%s1133 + $0x8] sm:$0xff]
        %v1136 = vld [vmem:[%s1133 + $0x10] sm:$0xff]
        %v1137 = vld [vmem:[%s1133 + $0x18] sm:$0xff]
        %v1138 = vld [vmem:[%s1133 + $0x20] sm:$0xff]
        %v1139 = vld [vmem:[%s1133 + $0x28] sm:$0xff]
        %v1140 = vld [vmem:[%s1133 + $0x30] sm:$0xff]
        %v1141 = vld [vmem:[%s1133 + $0x38] sm:$0xff]
        %v1142 = vld [vmem:[%s1133 + $0x40] sm:$0xff]
        %v1143 = vld [vmem:[%s1133 + $0x48] sm:$0xff]
        %v1144 = vld [vmem:[%s1133 + $0x50] sm:$0xff]
        %v1145 = vld [vmem:[%s1133 + $0x58] sm:$0xff]
        %v1146 = vld [vmem:[%s1133 + $0x60] sm:$0xff]
        %v1147 = vld [vmem:[%s1133 + $0x68] sm:$0xff]
        %v1148 = vld [vmem:[%s1133 + $0x70] sm:$0xff]
        %v1149 = vld [vmem:[%s1133 + $0x78] sm:$0xff]
        %v1166 = vunpack.c.l.b16 %v1134
        %v1167 = vunpack.c.h.b16 %v1134
        %v1168 = vunpack.c.l.b16 %v1135
        %v1169 = vunpack.c.h.b16 %v1135
        %v1170 = vunpack.c.l.b16 %v1136
        %v1171 = vunpack.c.h.b16 %v1136
        %v1172 = vunpack.c.l.b16 %v1137
        %v1173 = vunpack.c.h.b16 %v1137
        %v1174 = vunpack.c.l.b16 %v1138
        %v1175 = vunpack.c.h.b16 %v1138
        %v1176 = vunpack.c.l.b16 %v1139
        %v1177 = vunpack.c.h.b16 %v1139
        %v1178 = vunpack.c.l.b16 %v1140
        %v1179 = vunpack.c.h.b16 %v1140
        %v1180 = vunpack.c.l.b16 %v1141
        %v1181 = vunpack.c.h.b16 %v1141
        %v1182 = vunpack.c.l.b16 %v1142
        %v1183 = vunpack.c.h.b16 %v1142
        %v1184 = vunpack.c.l.b16 %v1143
        %v1185 = vunpack.c.h.b16 %v1143
        %v1186 = vunpack.c.l.b16 %v1144
        %v1187 = vunpack.c.h.b16 %v1144
        %v1188 = vunpack.c.l.b16 %v1145
        %v1189 = vunpack.c.h.b16 %v1145
        %v1190 = vunpack.c.l.b16 %v1146
        %v1191 = vunpack.c.h.b16 %v1146
        %v1192 = vunpack.c.l.b16 %v1147
        %v1193 = vunpack.c.h.b16 %v1147
        %v1194 = vunpack.c.l.b16 %v1148
        %v1195 = vunpack.c.h.b16 %v1148
        %v1196 = vunpack.c.l.b16 %v1149
        %v1197 = vunpack.c.h.b16 %v1149
        %v1198 = vpack.c.b16 %v1168, %v1166
        %v1199 = vpack.c.b16 %v1169, %v1167
        %v1200 = vpack.c.b16 %v1172, %v1170
        %v1201 = vpack.c.b16 %v1173, %v1171
        %v1202 = vpack.c.b16 %v1176, %v1174
        %v1203 = vpack.c.b16 %v1177, %v1175
        %v1204 = vpack.c.b16 %v1180, %v1178
        %v1205 = vpack.c.b16 %v1181, %v1179
        %v1206 = vpack.c.b16 %v1184, %v1182
        %v1207 = vpack.c.b16 %v1185, %v1183
        %v1208 = vpack.c.b16 %v1188, %v1186
        %v1209 = vpack.c.b16 %v1189, %v1187
        %v1210 = vpack.c.b16 %v1192, %v1190
        %v1211 = vpack.c.b16 %v1193, %v1191
        %v1212 = vpack.c.b16 %v1196, %v1194
        %v1213 = vpack.c.b16 %v1197, %v1195
        %1230 = vmatprep.subr.bf16.mxu0 %v1199
        %1231 = vmatpush1.bf16.msra.mxu0 %v1198
        %1232 = vmatprep.subr.bf16.mxu0 %v1201
        %1233 = vmatpush1.bf16.msra.mxu0 %v1200
        %1234 = vmatprep.subr.bf16.mxu0 %v1203
        %1235 = vmatpush1.bf16.msra.mxu0 %v1202
        %1236 = vmatprep.subr.bf16.mxu0 %v1205
        %1237 = vmatpush1.bf16.msra.mxu0 %v1204
        %1238 = vmatprep.subr.bf16.mxu0 %v1207
        %1239 = vmatpush1.bf16.msra.mxu0 %v1206
        %1240 = vmatprep.subr.bf16.mxu0 %v1209
        %1241 = vmatpush1.bf16.msra.mxu0 %v1208
        %1242 = vmatprep.subr.bf16.mxu0 %v1211
        %1243 = vmatpush1.bf16.msra.mxu0 %v1210
        %1244 = vmatprep.subr.bf16.mxu0 %v1213
        %1245 = vmatpush1.bf16.msra.mxu0 %v1212
        %1246 = vmatprep.subr.bf16.mxu0 0
        %1247 = vmatpush1.bf16.msra.mxu0 0
        %1248 = vmatprep.subr.bf16.mxu0 0
        %1249 = vmatpush1.bf16.msra.mxu0 0
        %1250 = vmatprep.subr.bf16.mxu0 0
        %1251 = vmatpush1.bf16.msra.mxu0 0
        %1252 = vmatprep.subr.bf16.mxu0 0
        %1253 = vmatpush1.bf16.msra.mxu0 0
        %1254 = vmatprep.subr.bf16.mxu0 0
        %1255 = vmatpush1.bf16.msra.mxu0 0
        %1256 = vmatprep.subr.bf16.mxu0 0
        %1257 = vmatpush1.bf16.msra.mxu0 0
        %1258 = vmatprep.subr.bf16.mxu0 0
        %1259 = vmatpush1.bf16.msra.mxu0 0
        %1260 = vmatprep.subr.bf16.mxu0 0
        %1261 = vmatpush1.bf16.msra.mxu0 0
        %1262 = vmatprep.mubr.bf16.mxu0 0
        %1263 = vmatmul.mubr.bf16.gmra.mrb[0].mxu0 %v498
        %v1264 = vpop.f32.mrb[0].mxu0
        %v1265 = vpop.f32.mrb[0].mxu0
        %v1266 = vpop.f32.mrb[0].mxu0
        %v1267 = vpop.f32.mrb[0].mxu0
        %1268 = vmatprep.mubr.bf16.mxu0 0
        %1269 = vmatmul.mubr.bf16.gmra.mrb[0].mxu0 %v499
        %v1270 = vpop.f32.mrb[0].mxu0
        %v1271 = vadd.f32 0.0, %v1270
        %v1272 = vpop.f32.mrb[0].mxu0
        %v1273 = vadd.f32 0.0, %v1272
        %v1274 = vpop.f32.mrb[0].mxu0
        %v1275 = vadd.f32 0.0, %v1274
        %v1276 = vpop.f32.mrb[0].mxu0
        %v1277 = vadd.f32 0.0, %v1276
        %1278 = vmatprep.mubr.bf16.mxu0 0
        %1279 = vmatmul.mubr.bf16.gmra.mrb[0].mxu0 %v500
        %v1280 = vpop.f32.mrb[0].mxu0
        %v1281 = vadd.f32 0.0, %v1280
        %v1282 = vpop.f32.mrb[0].mxu0
        %v1283 = vadd.f32 0.0, %v1282
        %v1284 = vpop.f32.mrb[0].mxu0
        %v1285 = vadd.f32 0.0, %v1284
        %v1286 = vpop.f32.mrb[0].mxu0
        %v1287 = vadd.f32 0.0, %v1286
        %1288 = vmatprep.mubr.bf16.mxu0 0
        %1289 = vmatmul.mubr.bf16.gmra.mrb[0].mxu0 %v501
        %v1290 = vpop.f32.mrb[0].mxu0
        %v1291 = vadd.f32 0.0, %v1290
        %v1292 = vpop.f32.mrb[0].mxu0
        %v1293 = vadd.f32 0.0, %v1292
        %v1294 = vpop.f32.mrb[0].mxu0
        %v1295 = vadd.f32 0.0, %v1294
        %v1296 = vpop.f32.mrb[0].mxu0
        %v1297 = vadd.f32 0.0, %v1296
        %1298 = vmatprep.mubr.bf16.mxu0 0
        %1299 = vmatmul.mubr.bf16.gmra.mrb[0].mxu0 %v502
        %v1300 = vpop.f32.mrb[0].mxu0
        %v1301 = vadd.f32 0.0, %v1300
        %v1302 = vpop.f32.mrb[0].mxu0
        %v1303 = vadd.f32 0.0, %v1302
        %v1304 = vpop.f32.mrb[0].mxu0
        %v1305 = vadd.f32 0.0, %v1304
        %v1306 = vpop.f32.mrb[0].mxu0
        %v1307 = vadd.f32 0.0, %v1306
        %1308 = vmatprep.mubr.bf16.mxu0 0
        %1309 = vmatmul.mubr.bf16.gmra.mrb[0].mxu0 %v503
        %v1310 = vpop.f32.mrb[0].mxu0
        %v1311 = vadd.f32 0.0, %v1310
        %v1312 = vpop.f32.mrb[0].mxu0
        %v1313 = vadd.f32 0.0, %v1312
        %v1314 = vpop.f32.mrb[0].mxu0
        %v1315 = vadd.f32 0.0, %v1314
        %v1316 = vpop.f32.mrb[0].mxu0
        %v1317 = vadd.f32 0.0, %v1316
        %1318 = vmatprep.mubr.bf16.mxu0 0
        %1319 = vmatmul.mubr.bf16.gmra.mrb[0].mxu0 %v504
        %v1320 = vpop.f32.mrb[0].mxu0
        %v1321 = vadd.f32 0.0, %v1320
        %v1322 = vpop.f32.mrb[0].mxu0
        %v1323 = vadd.f32 0.0, %v1322
        %v1324 = vpop.f32.mrb[0].mxu0
        %v1325 = vadd.f32 0.0, %v1324
        %v1326 = vpop.f32.mrb[0].mxu0
        %v1327 = vadd.f32 0.0, %v1326
        %1328 = vmatprep.mubr.bf16.mxu0 0
        %1329 = vmatmul.mubr.bf16.gmra.mrb[0].mxu0 %v505
        %v1330 = vpop.f32.mrb[0].mxu0
        %v1331 = vadd.f32 0.0, %v1330
        %v1332 = vpop.f32.mrb[0].mxu0
        %v1333 = vadd.f32 0.0, %v1332
        %v1334 = vpop.f32.mrb[0].mxu0
        %v1335 = vadd.f32 0.0, %v1334
        %v1336 = vpop.f32.mrb[0].mxu0
        %v1337 = vadd.f32 0.0, %v1336
        %1338 = vmatprep.mubr.bf16.mxu0 0
        %1339 = vmatmul.mubr.bf16.gmra.mrb[0].mxu0 %v506
        %v1340 = vpop.f32.mrb[0].mxu0
        %v1341 = vadd.f32 0.0, %v1340
        %v1342 = vpop.f32.mrb[0].mxu0
        %v1343 = vadd.f32 0.0, %v1342
        %v1344 = vpop.f32.mrb[0].mxu0
        %v1345 = vadd.f32 0.0, %v1344
        %v1346 = vpop.f32.mrb[0].mxu0
        %v1347 = vadd.f32 0.0, %v1346
        %1348 = vmatprep.mubr.bf16.mxu0 0
        %1349 = vmatmul.mubr.bf16.gmra.mrb[0].mxu0 %v507
        %v1350 = vpop.f32.mrb[0].mxu0
        %v1351 = vadd.f32 0.0, %v1350
        %v1352 = vpop.f32.mrb[0].mxu0
        %v1353 = vadd.f32 0.0, %v1352
        %v1354 = vpop.f32.mrb[0].mxu0
        %v1355 = vadd.f32 0.0, %v1354
        %v1356 = vpop.f32.mrb[0].mxu0
        %v1357 = vadd.f32 0.0, %v1356
        %1358 = vmatprep.mubr.bf16.mxu0 0
        %1359 = vmatmul.mubr.bf16.gmra.mrb[0].mxu0 %v508
        %v1360 = vpop.f32.mrb[0].mxu0
        %v1361 = vadd.f32 0.0, %v1360
        %v1362 = vpop.f32.mrb[0].mxu0
        %v1363 = vadd.f32 0.0, %v1362
        %v1364 = vpop.f32.mrb[0].mxu0
        %v1365 = vadd.f32 0.0, %v1364
        %v1366 = vpop.f32.mrb[0].mxu0
        %v1367 = vadd.f32 0.0, %v1366
        %1368 = vmatprep.mubr.bf16.mxu0 0
        %1369 = vmatmul.mubr.bf16.gmra.mrb[0].mxu0 %v509
        %v1370 = vpop.f32.mrb[0].mxu0
        %v1371 = vadd.f32 0.0, %v1370
        %v1372 = vpop.f32.mrb[0].mxu0
        %v1373 = vadd.f32 0.0, %v1372
        %v1374 = vpop.f32.mrb[0].mxu0
        %v1375 = vadd.f32 0.0, %v1374
        %v1376 = vpop.f32.mrb[0].mxu0
        %v1377 = vadd.f32 0.0, %v1376
        %1378 = vmatprep.mubr.bf16.mxu0 0
        %1379 = vmatmul.mubr.bf16.gmra.mrb[0].mxu0 %v510
        %v1380 = vpop.f32.mrb[0].mxu0
        %v1381 = vadd.f32 0.0, %v1380
        %v1382 = vpop.f32.mrb[0].mxu0
        %v1383 = vadd.f32 0.0, %v1382
        %v1384 = vpop.f32.mrb[0].mxu0
        %v1385 = vadd.f32 0.0, %v1384
        %v1386 = vpop.f32.mrb[0].mxu0
        %v1387 = vadd.f32 0.0, %v1386
        %1388 = vmatprep.mubr.bf16.mxu0 0
        %1389 = vmatmul.mubr.bf16.gmra.mrb[0].mxu0 %v511
        %v1390 = vpop.f32.mrb[0].mxu0
        %v1391 = vadd.f32 0.0, %v1390
        %v1392 = vpop.f32.mrb[0].mxu0
        %v1393 = vadd.f32 0.0, %v1392
        %v1394 = vpop.f32.mrb[0].mxu0
        %v1395 = vadd.f32 0.0, %v1394
        %v1396 = vpop.f32.mrb[0].mxu0
        %v1397 = vadd.f32 0.0, %v1396
        %1398 = vmatprep.mubr.bf16.mxu0 0
        %1399 = vmatmul.mubr.bf16.gmra.mrb[0].mxu0 %v512
        %v1400 = vpop.f32.mrb[0].mxu0
        %v1401 = vadd.f32 0.0, %v1400
        %v1402 = vpop.f32.mrb[0].mxu0
        %v1403 = vadd.f32 0.0, %v1402
        %v1404 = vpop.f32.mrb[0].mxu0
        %v1405 = vadd.f32 0.0, %v1404
        %v1406 = vpop.f32.mrb[0].mxu0
        %v1407 = vadd.f32 0.0, %v1406
        %1408 = vmatprep.mubr.bf16.mxu0 0
        %1409 = vmatmul.mubr.bf16.gmra.mrb[0].mxu0 %v513
        %v1410 = vpop.f32.mrb[0].mxu0
        %v1411 = vpop.f32.mrb[0].mxu0
        %v1412 = vpop.f32.mrb[0].mxu0
        %v1413 = vpop.f32.mrb[0].mxu0
        %1414 = vdwg.mxu0
        %v1415 = vadd.f32 %v1077, %v1271
        %v1416 = vadd.f32 %v1078, %v1273
        %v1417 = vadd.f32 %v1079, %v1275
        %v1418 = vadd.f32 %v1080, %v1277
        %v1419 = vadd.f32 %v1081, %v1281
        %v1420 = vadd.f32 %v1082, %v1283
        %v1421 = vadd.f32 %v1083, %v1285
        %v1422 = vadd.f32 %v1084, %v1287
        %v1423 = vadd.f32 %v1085, %v1291
        %v1424 = vadd.f32 %v1086, %v1293
        %v1425 = vadd.f32 %v1087, %v1295
        %v1426 = vadd.f32 %v1088, %v1297
        %v1427 = vadd.f32 %v1089, %v1301
        %v1428 = vadd.f32 %v1090, %v1303
        %v1429 = vadd.f32 %v1091, %v1305
        %v1430 = vadd.f32 %v1092, %v1307
        %v1431 = vadd.f32 %v1093, %v1311
        %v1432 = vadd.f32 %v1094, %v1313
        %v1433 = vadd.f32 %v1095, %v1315
        %v1434 = vadd.f32 %v1096, %v1317
        %v1435 = vadd.f32 %v1097, %v1321
        %v1436 = vadd.f32 %v1098, %v1323
        %v1437 = vadd.f32 %v1099, %v1325
        %v1438 = vadd.f32 %v1100, %v1327
        %v1439 = vadd.f32 %v1101, %v1331
        %v1440 = vadd.f32 %v1102, %v1333
        %v1441 = vadd.f32 %v1103, %v1335
        %v1442 = vadd.f32 %v1104, %v1337
        %v1443 = vadd.f32 %v1105, %v1341
        %v1444 = vadd.f32 %v1106, %v1343
        %v1445 = vadd.f32 %v1107, %v1345
        %v1446 = vadd.f32 %v1108, %v1347
        %v1447 = vadd.f32 %v1109, %v1351
        %v1448 = vadd.f32 %v1110, %v1353
        %v1449 = vadd.f32 %v1111, %v1355
        %v1450 = vadd.f32 %v1112, %v1357
        %v1451 = vadd.f32 %v1113, %v1361
        %v1452 = vadd.f32 %v1114, %v1363
        %v1453 = vadd.f32 %v1115, %v1365
        %v1454 = vadd.f32 %v1116, %v1367
        %v1455 = vadd.f32 %v1117, %v1371
        %v1456 = vadd.f32 %v1118, %v1373
        %v1457 = vadd.f32 %v1119, %v1375
        %v1458 = vadd.f32 %v1120, %v1377
        %v1459 = vadd.f32 %v1121, %v1381
        %v1460 = vadd.f32 %v1122, %v1383
        %v1461 = vadd.f32 %v1123, %v1385
        %v1462 = vadd.f32 %v1124, %v1387
        %v1463 = vadd.f32 %v1125, %v1391
        %v1464 = vadd.f32 %v1126, %v1393
        %v1465 = vadd.f32 %v1127, %v1395
        %v1466 = vadd.f32 %v1128, %v1397
        %v1467 = vadd.f32 %v1129, %v1401
        %v1468 = vadd.f32 %v1130, %v1403
        %v1469 = vadd.f32 %v1131, %v1405
        %v1470 = vadd.f32 %v1132, %v1407
        %s1471 = scalar_lea.vmem %s1, 384
        %v1472 = vld [vmem:[%s1471] sm:$0xff]
        %v1473 = vld [vmem:[%s1471 + $0x8] sm:$0xff]
        %v1474 = vld [vmem:[%s1471 + $0x10] sm:$0xff]
        %v1475 = vld [vmem:[%s1471 + $0x18] sm:$0xff]
        %v1476 = vld [vmem:[%s1471 + $0x20] sm:$0xff]
        %v1477 = vld [vmem:[%s1471 + $0x28] sm:$0xff]
        %v1478 = vld [vmem:[%s1471 + $0x30] sm:$0xff]
        %v1479 = vld [vmem:[%s1471 + $0x38] sm:$0xff]
        %v1480 = vld [vmem:[%s1471 + $0x40] sm:$0xff]
        %v1481 = vld [vmem:[%s1471 + $0x48] sm:$0xff]
        %v1482 = vld [vmem:[%s1471 + $0x50] sm:$0xff]
        %v1483 = vld [vmem:[%s1471 + $0x58] sm:$0xff]
        %v1484 = vld [vmem:[%s1471 + $0x60] sm:$0xff]
        %v1485 = vld [vmem:[%s1471 + $0x68] sm:$0xff]
        %v1486 = vld [vmem:[%s1471 + $0x70] sm:$0xff]
        %v1487 = vld [vmem:[%s1471 + $0x78] sm:$0xff]
        %v1504 = vunpack.c.l.b16 %v1472
        %v1505 = vunpack.c.h.b16 %v1472
        %v1506 = vunpack.c.l.b16 %v1473
        %v1507 = vunpack.c.h.b16 %v1473
        %v1508 = vunpack.c.l.b16 %v1474
        %v1509 = vunpack.c.h.b16 %v1474
        %v1510 = vunpack.c.l.b16 %v1475
        %v1511 = vunpack.c.h.b16 %v1475
        %v1512 = vunpack.c.l.b16 %v1476
        %v1513 = vunpack.c.h.b16 %v1476
        %v1514 = vunpack.c.l.b16 %v1477
        %v1515 = vunpack.c.h.b16 %v1477
        %v1516 = vunpack.c.l.b16 %v1478
        %v1517 = vunpack.c.h.b16 %v1478
        %v1518 = vunpack.c.l.b16 %v1479
        %v1519 = vunpack.c.h.b16 %v1479
        %v1520 = vunpack.c.l.b16 %v1480
        %v1521 = vunpack.c.h.b16 %v1480
        %v1522 = vunpack.c.l.b16 %v1481
        %v1523 = vunpack.c.h.b16 %v1481
        %v1524 = vunpack.c.l.b16 %v1482
        %v1525 = vunpack.c.h.b16 %v1482
        %v1526 = vunpack.c.l.b16 %v1483
        %v1527 = vunpack.c.h.b16 %v1483
        %v1528 = vunpack.c.l.b16 %v1484
        %v1529 = vunpack.c.h.b16 %v1484
        %v1530 = vunpack.c.l.b16 %v1485
        %v1531 = vunpack.c.h.b16 %v1485
        %v1532 = vunpack.c.l.b16 %v1486
        %v1533 = vunpack.c.h.b16 %v1486
        %v1534 = vunpack.c.l.b16 %v1487
        %v1535 = vunpack.c.h.b16 %v1487
        %v1536 = vpack.c.b16 %v1506, %v1504
        %v1537 = vpack.c.b16 %v1507, %v1505
        %v1538 = vpack.c.b16 %v1510, %v1508
        %v1539 = vpack.c.b16 %v1511, %v1509
        %v1540 = vpack.c.b16 %v1514, %v1512
        %v1541 = vpack.c.b16 %v1515, %v1513
        %v1542 = vpack.c.b16 %v1518, %v1516
        %v1543 = vpack.c.b16 %v1519, %v1517
        %v1544 = vpack.c.b16 %v1522, %v1520
        %v1545 = vpack.c.b16 %v1523, %v1521
        %v1546 = vpack.c.b16 %v1526, %v1524
        %v1547 = vpack.c.b16 %v1527, %v1525
        %v1548 = vpack.c.b16 %v1530, %v1528
        %v1549 = vpack.c.b16 %v1531, %v1529
        %v1550 = vpack.c.b16 %v1534, %v1532
        %v1551 = vpack.c.b16 %v1535, %v1533
        %1568 = vmatprep.subr.bf16.mxu0 %v1537
        %1569 = vmatpush1.bf16.msra.mxu0 %v1536
        %1570 = vmatprep.subr.bf16.mxu0 %v1539
        %1571 = vmatpush1.bf16.msra.mxu0 %v1538
        %1572 = vmatprep.subr.bf16.mxu0 %v1541
        %1573 = vmatpush1.bf16.msra.mxu0 %v1540
        %1574 = vmatprep.subr.bf16.mxu0 %v1543
        %1575 = vmatpush1.bf16.msra.mxu0 %v1542
        %1576 = vmatprep.subr.bf16.mxu0 %v1545
        %1577 = vmatpush1.bf16.msra.mxu0 %v1544
        %1578 = vmatprep.subr.bf16.mxu0 %v1547
        %1579 = vmatpush1.bf16.msra.mxu0 %v1546
        %1580 = vmatprep.subr.bf16.mxu0 %v1549
        %1581 = vmatpush1.bf16.msra.mxu0 %v1548
        %1582 = vmatprep.subr.bf16.mxu0 %v1551
        %1583 = vmatpush1.bf16.msra.mxu0 %v1550
        %1584 = vmatprep.subr.bf16.mxu0 0
        %1585 = vmatpush1.bf16.msra.mxu0 0
        %1586 = vmatprep.subr.bf16.mxu0 0
        %1587 = vmatpush1.bf16.msra.mxu0 0
        %1588 = vmatprep.subr.bf16.mxu0 0
        %1589 = vmatpush1.bf16.msra.mxu0 0
        %1590 = vmatprep.subr.bf16.mxu0 0
        %1591 = vmatpush1.bf16.msra.mxu0 0
        %1592 = vmatprep.subr.bf16.mxu0 0
        %1593 = vmatpush1.bf16.msra.mxu0 0
        %1594 = vmatprep.subr.bf16.mxu0 0
        %1595 = vmatpush1.bf16.msra.mxu0 0
        %1596 = vmatprep.subr.bf16.mxu0 0
        %1597 = vmatpush1.bf16.msra.mxu0 0
        %1598 = vmatprep.subr.bf16.mxu0 0
        %1599 = vmatpush1.bf16.msra.mxu0 0
        %1600 = vmatprep.mubr.bf16.mxu0 0
        %1601 = vmatmul.mubr.bf16.gmra.mrb[0].mxu0 %v498
        %v1602 = vpop.f32.mrb[0].mxu0
        %v1603 = vpop.f32.mrb[0].mxu0
        %v1604 = vpop.f32.mrb[0].mxu0
        %v1605 = vpop.f32.mrb[0].mxu0
        %1606 = vmatprep.mubr.bf16.mxu0 0
        %1607 = vmatmul.mubr.bf16.gmra.mrb[0].mxu0 %v499
        %v1608 = vpop.f32.mrb[0].mxu0
        %v1609 = vpop.f32.mrb[0].mxu0
        %v1610 = vpop.f32.mrb[0].mxu0
        %v1611 = vadd.f32 0.0, %v1610
        %v1612 = vpop.f32.mrb[0].mxu0
        %v1613 = vadd.f32 0.0, %v1612
        %1614 = vmatprep.mubr.bf16.mxu0 0
        %1615 = vmatmul.mubr.bf16.gmra.mrb[0].mxu0 %v500
        %v1616 = vpop.f32.mrb[0].mxu0
        %v1617 = vadd.f32 0.0, %v1616
        %v1618 = vpop.f32.mrb[0].mxu0
        %v1619 = vadd.f32 0.0, %v1618
        %v1620 = vpop.f32.mrb[0].mxu0
        %v1621 = vadd.f32 0.0, %v1620
        %v1622 = vpop.f32.mrb[0].mxu0
        %v1623 = vadd.f32 0.0, %v1622
        %1624 = vmatprep.mubr.bf16.mxu0 0
        %1625 = vmatmul.mubr.bf16.gmra.mrb[0].mxu0 %v501
        %v1626 = vpop.f32.mrb[0].mxu0
        %v1627 = vadd.f32 0.0, %v1626
        %v1628 = vpop.f32.mrb[0].mxu0
        %v1629 = vadd.f32 0.0, %v1628
        %v1630 = vpop.f32.mrb[0].mxu0
        %v1631 = vadd.f32 0.0, %v1630
        %v1632 = vpop.f32.mrb[0].mxu0
        %v1633 = vadd.f32 0.0, %v1632
        %1634 = vmatprep.mubr.bf16.mxu0 0
        %1635 = vmatmul.mubr.bf16.gmra.mrb[0].mxu0 %v502
        %v1636 = vpop.f32.mrb[0].mxu0
        %v1637 = vadd.f32 0.0, %v1636
        %v1638 = vpop.f32.mrb[0].mxu0
        %v1639 = vadd.f32 0.0, %v1638
        %v1640 = vpop.f32.mrb[0].mxu0
        %v1641 = vadd.f32 0.0, %v1640
        %v1642 = vpop.f32.mrb[0].mxu0
        %v1643 = vadd.f32 0.0, %v1642
        %1644 = vmatprep.mubr.bf16.mxu0 0
        %1645 = vmatmul.mubr.bf16.gmra.mrb[0].mxu0 %v503
        %v1646 = vpop.f32.mrb[0].mxu0
        %v1647 = vadd.f32 0.0, %v1646
        %v1648 = vpop.f32.mrb[0].mxu0
        %v1649 = vadd.f32 0.0, %v1648
        %v1650 = vpop.f32.mrb[0].mxu0
        %v1651 = vadd.f32 0.0, %v1650
        %v1652 = vpop.f32.mrb[0].mxu0
        %v1653 = vadd.f32 0.0, %v1652
        %1654 = vmatprep.mubr.bf16.mxu0 0
        %1655 = vmatmul.mubr.bf16.gmra.mrb[0].mxu0 %v504
        %v1656 = vpop.f32.mrb[0].mxu0
        %v1657 = vadd.f32 0.0, %v1656
        %v1658 = vpop.f32.mrb[0].mxu0
        %v1659 = vadd.f32 0.0, %v1658
        %v1660 = vpop.f32.mrb[0].mxu0
        %v1661 = vadd.f32 0.0, %v1660
        %v1662 = vpop.f32.mrb[0].mxu0
        %v1663 = vadd.f32 0.0, %v1662
        %1664 = vmatprep.mubr.bf16.mxu0 0
        %1665 = vmatmul.mubr.bf16.gmra.mrb[0].mxu0 %v505
        %v1666 = vpop.f32.mrb[0].mxu0
        %v1667 = vadd.f32 0.0, %v1666
        %v1668 = vpop.f32.mrb[0].mxu0
        %v1669 = vadd.f32 0.0, %v1668
        %v1670 = vpop.f32.mrb[0].mxu0
        %v1671 = vadd.f32 0.0, %v1670
        %v1672 = vpop.f32.mrb[0].mxu0
        %v1673 = vadd.f32 0.0, %v1672
        %1674 = vmatprep.mubr.bf16.mxu0 0
        %1675 = vmatmul.mubr.bf16.gmra.mrb[0].mxu0 %v506
        %v1676 = vpop.f32.mrb[0].mxu0
        %v1677 = vadd.f32 0.0, %v1676
        %v1678 = vpop.f32.mrb[0].mxu0
        %v1679 = vadd.f32 0.0, %v1678
        %v1680 = vpop.f32.mrb[0].mxu0
        %v1681 = vadd.f32 0.0, %v1680
        %v1682 = vpop.f32.mrb[0].mxu0
        %v1683 = vadd.f32 0.0, %v1682
        %1684 = vmatprep.mubr.bf16.mxu0 0
        %1685 = vmatmul.mubr.bf16.gmra.mrb[0].mxu0 %v507
        %v1686 = vpop.f32.mrb[0].mxu0
        %v1687 = vadd.f32 0.0, %v1686
        %v1688 = vpop.f32.mrb[0].mxu0
        %v1689 = vadd.f32 0.0, %v1688
        %v1690 = vpop.f32.mrb[0].mxu0
        %v1691 = vadd.f32 0.0, %v1690
        %v1692 = vpop.f32.mrb[0].mxu0
        %v1693 = vadd.f32 0.0, %v1692
        %1694 = vmatprep.mubr.bf16.mxu0 0
        %1695 = vmatmul.mubr.bf16.gmra.mrb[0].mxu0 %v508
        %v1696 = vpop.f32.mrb[0].mxu0
        %v1697 = vadd.f32 0.0, %v1696
        %v1698 = vpop.f32.mrb[0].mxu0
        %v1699 = vadd.f32 0.0, %v1698
        %v1700 = vpop.f32.mrb[0].mxu0
        %v1701 = vadd.f32 0.0, %v1700
        %v1702 = vpop.f32.mrb[0].mxu0
        %v1703 = vadd.f32 0.0, %v1702
        %1704 = vmatprep.mubr.bf16.mxu0 0
        %1705 = vmatmul.mubr.bf16.gmra.mrb[0].mxu0 %v509
        %v1706 = vpop.f32.mrb[0].mxu0
        %v1707 = vadd.f32 0.0, %v1706
        %v1708 = vpop.f32.mrb[0].mxu0
        %v1709 = vadd.f32 0.0, %v1708
        %v1710 = vpop.f32.mrb[0].mxu0
        %v1711 = vadd.f32 0.0, %v1710
        %v1712 = vpop.f32.mrb[0].mxu0
        %v1713 = vadd.f32 0.0, %v1712
        %1714 = vmatprep.mubr.bf16.mxu0 0
        %1715 = vmatmul.mubr.bf16.gmra.mrb[0].mxu0 %v510
        %v1716 = vpop.f32.mrb[0].mxu0
        %v1717 = vadd.f32 0.0, %v1716
        %v1718 = vpop.f32.mrb[0].mxu0
        %v1719 = vadd.f32 0.0, %v1718
        %v1720 = vpop.f32.mrb[0].mxu0
        %v1721 = vadd.f32 0.0, %v1720
        %v1722 = vpop.f32.mrb[0].mxu0
        %v1723 = vadd.f32 0.0, %v1722
        %1724 = vmatprep.mubr.bf16.mxu0 0
        %1725 = vmatmul.mubr.bf16.gmra.mrb[0].mxu0 %v511
        %v1726 = vpop.f32.mrb[0].mxu0
        %v1727 = vadd.f32 0.0, %v1726
        %v1728 = vpop.f32.mrb[0].mxu0
        %v1729 = vadd.f32 0.0, %v1728
        %v1730 = vpop.f32.mrb[0].mxu0
        %v1731 = vadd.f32 0.0, %v1730
        %v1732 = vpop.f32.mrb[0].mxu0
        %v1733 = vadd.f32 0.0, %v1732
        %1734 = vmatprep.mubr.bf16.mxu0 0
        %1735 = vmatmul.mubr.bf16.gmra.mrb[0].mxu0 %v512
        %v1736 = vpop.f32.mrb[0].mxu0
        %v1737 = vadd.f32 0.0, %v1736
        %v1738 = vpop.f32.mrb[0].mxu0
        %v1739 = vadd.f32 0.0, %v1738
        %v1740 = vpop.f32.mrb[0].mxu0
        %v1741 = vadd.f32 0.0, %v1740
        %v1742 = vpop.f32.mrb[0].mxu0
        %v1743 = vadd.f32 0.0, %v1742
        %1744 = vmatprep.mubr.bf16.mxu0 0
        %1745 = vmatmul.mubr.bf16.gmra.mrb[0].mxu0 %v513
        %v1746 = vpop.f32.mrb[0].mxu0
        %v1747 = vadd.f32 0.0, %v1746
        %v1748 = vpop.f32.mrb[0].mxu0
        %v1749 = vadd.f32 0.0, %v1748
        %v1750 = vpop.f32.mrb[0].mxu0
        %v1751 = vpop.f32.mrb[0].mxu0
        %1752 = vdwg.mxu0
        %v1753 = vadd.f32 %v1415, %v1611
        %v1754 = vadd.f32 %v1416, %v1613
        %v1755 = vadd.f32 %v1417, %v1617
        %v1756 = vadd.f32 %v1418, %v1619
        %v1757 = vadd.f32 %v1419, %v1621
        %v1758 = vadd.f32 %v1420, %v1623
        %v1759 = vadd.f32 %v1421, %v1627
        %v1760 = vadd.f32 %v1422, %v1629
        %v1761 = vadd.f32 %v1423, %v1631
        %v1762 = vadd.f32 %v1424, %v1633
        %v1763 = vadd.f32 %v1425, %v1637
        %v1764 = vadd.f32 %v1426, %v1639
        %v1765 = vadd.f32 %v1427, %v1641
        %v1766 = vadd.f32 %v1428, %v1643
        %v1767 = vadd.f32 %v1429, %v1647
        %v1768 = vadd.f32 %v1430, %v1649
        %v1769 = vadd.f32 %v1431, %v1651
        %v1770 = vadd.f32 %v1432, %v1653
        %v1771 = vadd.f32 %v1433, %v1657
        %v1772 = vadd.f32 %v1434, %v1659
        %v1773 = vadd.f32 %v1435, %v1661
        %v1774 = vadd.f32 %v1436, %v1663
        %v1775 = vadd.f32 %v1437, %v1667
        %v1776 = vadd.f32 %v1438, %v1669
        %v1777 = vadd.f32 %v1439, %v1671
        %v1778 = vadd.f32 %v1440, %v1673
        %v1779 = vadd.f32 %v1441, %v1677
        %v1780 = vadd.f32 %v1442, %v1679
        %v1781 = vadd.f32 %v1443, %v1681
        %v1782 = vadd.f32 %v1444, %v1683
        %v1783 = vadd.f32 %v1445, %v1687
        %v1784 = vadd.f32 %v1446, %v1689
        %v1785 = vadd.f32 %v1447, %v1691
        %v1786 = vadd.f32 %v1448, %v1693
        %v1787 = vadd.f32 %v1449, %v1697
        %v1788 = vadd.f32 %v1450, %v1699
        %v1789 = vadd.f32 %v1451, %v1701
        %v1790 = vadd.f32 %v1452, %v1703
        %v1791 = vadd.f32 %v1453, %v1707
        %v1792 = vadd.f32 %v1454, %v1709
        %v1793 = vadd.f32 %v1455, %v1711
        %v1794 = vadd.f32 %v1456, %v1713
        %v1795 = vadd.f32 %v1457, %v1717
        %v1796 = vadd.f32 %v1458, %v1719
        %v1797 = vadd.f32 %v1459, %v1721
        %v1798 = vadd.f32 %v1460, %v1723
        %v1799 = vadd.f32 %v1461, %v1727
        %v1800 = vadd.f32 %v1462, %v1729
        %v1801 = vadd.f32 %v1463, %v1731
        %v1802 = vadd.f32 %v1464, %v1733
        %v1803 = vadd.f32 %v1465, %v1737
        %v1804 = vadd.f32 %v1466, %v1739
        %v1805 = vadd.f32 %v1467, %v1741
        %v1806 = vadd.f32 %v1468, %v1743
        %v1807 = vadd.f32 %v1469, %v1747
        %v1808 = vadd.f32 %v1470, %v1749
        %s1809 = scalar_lea.vmem %s1, 512
        %v1810 = vld [vmem:[%s1809] sm:$0xff]
        %v1811 = vld [vmem:[%s1809 + $0x8] sm:$0xff]
        %v1812 = vld [vmem:[%s1809 + $0x10] sm:$0xff]
        %v1813 = vld [vmem:[%s1809 + $0x18] sm:$0xff]
        %v1814 = vld [vmem:[%s1809 + $0x20] sm:$0xff]
        %v1815 = vld [vmem:[%s1809 + $0x28] sm:$0xff]
        %v1816 = vld [vmem:[%s1809 + $0x30] sm:$0xff]
        %v1817 = vld [vmem:[%s1809 + $0x38] sm:$0xff]
        %v1818 = vld [vmem:[%s1809 + $0x40] sm:$0xff]
        %v1819 = vld [vmem:[%s1809 + $0x48] sm:$0xff]
        %v1820 = vld [vmem:[%s1809 + $0x50] sm:$0xff]
        %v1821 = vld [vmem:[%s1809 + $0x58] sm:$0xff]
        %v1822 = vld [vmem:[%s1809 + $0x60] sm:$0xff]
        %v1823 = vld [vmem:[%s1809 + $0x68] sm:$0xff]
        %v1824 = vld [vmem:[%s1809 + $0x70] sm:$0xff]
        %v1825 = vld [vmem:[%s1809 + $0x78] sm:$0xff]
        %v1842 = vunpack.c.l.b16 %v1810
        %v1843 = vunpack.c.h.b16 %v1810
        %v1844 = vunpack.c.l.b16 %v1811
        %v1845 = vunpack.c.h.b16 %v1811
        %v1846 = vunpack.c.l.b16 %v1812
        %v1847 = vunpack.c.h.b16 %v1812
        %v1848 = vunpack.c.l.b16 %v1813
        %v1849 = vunpack.c.h.b16 %v1813
        %v1850 = vunpack.c.l.b16 %v1814
        %v1851 = vunpack.c.h.b16 %v1814
        %v1852 = vunpack.c.l.b16 %v1815
        %v1853 = vunpack.c.h.b16 %v1815
        %v1854 = vunpack.c.l.b16 %v1816
        %v1855 = vunpack.c.h.b16 %v1816
        %v1856 = vunpack.c.l.b16 %v1817
        %v1857 = vunpack.c.h.b16 %v1817
        %v1858 = vunpack.c.l.b16 %v1818
        %v1859 = vunpack.c.h.b16 %v1818
        %v1860 = vunpack.c.l.b16 %v1819
        %v1861 = vunpack.c.h.b16 %v1819
        %v1862 = vunpack.c.l.b16 %v1820
        %v1863 = vunpack.c.h.b16 %v1820
        %v1864 = vunpack.c.l.b16 %v1821
        %v1865 = vunpack.c.h.b16 %v1821
        %v1866 = vunpack.c.l.b16 %v1822
        %v1867 = vunpack.c.h.b16 %v1822
        %v1868 = vunpack.c.l.b16 %v1823
        %v1869 = vunpack.c.h.b16 %v1823
        %v1870 = vunpack.c.l.b16 %v1824
        %v1871 = vunpack.c.h.b16 %v1824
        %v1872 = vunpack.c.l.b16 %v1825
        %v1873 = vunpack.c.h.b16 %v1825
        %v1874 = vpack.c.b16 %v1844, %v1842
        %v1875 = vpack.c.b16 %v1845, %v1843
        %v1876 = vpack.c.b16 %v1848, %v1846
        %v1877 = vpack.c.b16 %v1849, %v1847
        %v1878 = vpack.c.b16 %v1852, %v1850
        %v1879 = vpack.c.b16 %v1853, %v1851
        %v1880 = vpack.c.b16 %v1856, %v1854
        %v1881 = vpack.c.b16 %v1857, %v1855
        %v1882 = vpack.c.b16 %v1860, %v1858
        %v1883 = vpack.c.b16 %v1861, %v1859
        %v1884 = vpack.c.b16 %v1864, %v1862
        %v1885 = vpack.c.b16 %v1865, %v1863
        %v1886 = vpack.c.b16 %v1868, %v1866
        %v1887 = vpack.c.b16 %v1869, %v1867
        %v1888 = vpack.c.b16 %v1872, %v1870
        %v1889 = vpack.c.b16 %v1873, %v1871
        %1906 = vmatprep.subr.bf16.mxu0 %v1875
        %1907 = vmatpush1.bf16.msra.mxu0 %v1874
        %1908 = vmatprep.subr.bf16.mxu0 %v1877
        %1909 = vmatpush1.bf16.msra.mxu0 %v1876
        %1910 = vmatprep.subr.bf16.mxu0 %v1879
        %1911 = vmatpush1.bf16.msra.mxu0 %v1878
        %1912 = vmatprep.subr.bf16.mxu0 %v1881
        %1913 = vmatpush1.bf16.msra.mxu0 %v1880
        %1914 = vmatprep.subr.bf16.mxu0 %v1883
        %1915 = vmatpush1.bf16.msra.mxu0 %v1882
        %1916 = vmatprep.subr.bf16.mxu0 %v1885
        %1917 = vmatpush1.bf16.msra.mxu0 %v1884
        %1918 = vmatprep.subr.bf16.mxu0 %v1887
        %1919 = vmatpush1.bf16.msra.mxu0 %v1886
        %1920 = vmatprep.subr.bf16.mxu0 %v1889
        %1921 = vmatpush1.bf16.msra.mxu0 %v1888
        %1922 = vmatprep.subr.bf16.mxu0 0
        %1923 = vmatpush1.bf16.msra.mxu0 0
        %1924 = vmatprep.subr.bf16.mxu0 0
        %1925 = vmatpush1.bf16.msra.mxu0 0
        %1926 = vmatprep.subr.bf16.mxu0 0
        %1927 = vmatpush1.bf16.msra.mxu0 0
        %1928 = vmatprep.subr.bf16.mxu0 0
        %1929 = vmatpush1.bf16.msra.mxu0 0
        %1930 = vmatprep.subr.bf16.mxu0 0
        %1931 = vmatpush1.bf16.msra.mxu0 0
        %1932 = vmatprep.subr.bf16.mxu0 0
        %1933 = vmatpush1.bf16.msra.mxu0 0
        %1934 = vmatprep.subr.bf16.mxu0 0
        %1935 = vmatpush1.bf16.msra.mxu0 0
        %1936 = vmatprep.subr.bf16.mxu0 0
        %1937 = vmatpush1.bf16.msra.mxu0 0
        %1938 = vmatprep.mubr.bf16.mxu0 0
        %1939 = vmatmul.mubr.bf16.gmra.mrb[0].mxu0 %v498
        %v1940 = vpop.f32.mrb[0].mxu0
        %v1941 = vpop.f32.mrb[0].mxu0
        %v1942 = vpop.f32.mrb[0].mxu0
        %v1943 = vpop.f32.mrb[0].mxu0
        %1944 = vmatprep.mubr.bf16.mxu0 0
        %1945 = vmatmul.mubr.bf16.gmra.mrb[0].mxu0 %v499
        %v1946 = vpop.f32.mrb[0].mxu0
        %v1947 = vpop.f32.mrb[0].mxu0
        %v1948 = vpop.f32.mrb[0].mxu0
        %v1949 = vpop.f32.mrb[0].mxu0
        %1950 = vmatprep.mubr.bf16.mxu0 0
        %1951 = vmatmul.mubr.bf16.gmra.mrb[0].mxu0 %v500
        %v1952 = vpop.f32.mrb[0].mxu0
        %v1953 = vadd.f32 0.0, %v1952
        %v1954 = vpop.f32.mrb[0].mxu0
        %v1955 = vadd.f32 0.0, %v1954
        %v1956 = vpop.f32.mrb[0].mxu0
        %v1957 = vadd.f32 0.0, %v1956
        %v1958 = vpop.f32.mrb[0].mxu0
        %v1959 = vadd.f32 0.0, %v1958
        %1960 = vmatprep.mubr.bf16.mxu0 0
        %1961 = vmatmul.mubr.bf16.gmra.mrb[0].mxu0 %v501
        %v1962 = vpop.f32.mrb[0].mxu0
        %v1963 = vadd.f32 0.0, %v1962
        %v1964 = vpop.f32.mrb[0].mxu0
        %v1965 = vadd.f32 0.0, %v1964
        %v1966 = vpop.f32.mrb[0].mxu0
        %v1967 = vadd.f32 0.0, %v1966
        %v1968 = vpop.f32.mrb[0].mxu0
        %v1969 = vadd.f32 0.0, %v1968
        %1970 = vmatprep.mubr.bf16.mxu0 0
        %1971 = vmatmul.mubr.bf16.gmra.mrb[0].mxu0 %v502
        %v1972 = vpop.f32.mrb[0].mxu0
        %v1973 = vadd.f32 0.0, %v1972
        %v1974 = vpop.f32.mrb[0].mxu0
        %v1975 = vadd.f32 0.0, %v1974
        %v1976 = vpop.f32.mrb[0].mxu0
        %v1977 = vadd.f32 0.0, %v1976
        %v1978 = vpop.f32.mrb[0].mxu0
        %v1979 = vadd.f32 0.0, %v1978
        %1980 = vmatprep.mubr.bf16.mxu0 0
        %1981 = vmatmul.mubr.bf16.gmra.mrb[0].mxu0 %v503
        %v1982 = vpop.f32.mrb[0].mxu0
        %v1983 = vadd.f32 0.0, %v1982
        %v1984 = vpop.f32.mrb[0].mxu0
        %v1985 = vadd.f32 0.0, %v1984
        %v1986 = vpop.f32.mrb[0].mxu0
        %v1987 = vadd.f32 0.0, %v1986
        %v1988 = vpop.f32.mrb[0].mxu0
        %v1989 = vadd.f32 0.0, %v1988
        %1990 = vmatprep.mubr.bf16.mxu0 0
        %1991 = vmatmul.mubr.bf16.gmra.mrb[0].mxu0 %v504
        %v1992 = vpop.f32.mrb[0].mxu0
        %v1993 = vadd.f32 0.0, %v1992
        %v1994 = vpop.f32.mrb[0].mxu0
        %v1995 = vadd.f32 0.0, %v1994
        %v1996 = vpop.f32.mrb[0].mxu0
        %v1997 = vadd.f32 0.0, %v1996
        %v1998 = vpop.f32.mrb[0].mxu0
        %v1999 = vadd.f32 0.0, %v1998
        %2000 = vmatprep.mubr.bf16.mxu0 0
        %2001 = vmatmul.mubr.bf16.gmra.mrb[0].mxu0 %v505
        %v2002 = vpop.f32.mrb[0].mxu0
        %v2003 = vadd.f32 0.0, %v2002
        %v2004 = vpop.f32.mrb[0].mxu0
        %v2005 = vadd.f32 0.0, %v2004
        %v2006 = vpop.f32.mrb[0].mxu0
        %v2007 = vadd.f32 0.0, %v2006
        %v2008 = vpop.f32.mrb[0].mxu0
        %v2009 = vadd.f32 0.0, %v2008
        %2010 = vmatprep.mubr.bf16.mxu0 0
        %2011 = vmatmul.mubr.bf16.gmra.mrb[0].mxu0 %v506
        %v2012 = vpop.f32.mrb[0].mxu0
        %v2013 = vadd.f32 0.0, %v2012
        %v2014 = vpop.f32.mrb[0].mxu0
        %v2015 = vadd.f32 0.0, %v2014
        %v2016 = vpop.f32.mrb[0].mxu0
        %v2017 = vadd.f32 0.0, %v2016
        %v2018 = vpop.f32.mrb[0].mxu0
        %v2019 = vadd.f32 0.0, %v2018
        %2020 = vmatprep.mubr.bf16.mxu0 0
        %2021 = vmatmul.mubr.bf16.gmra.mrb[0].mxu0 %v507
        %v2022 = vpop.f32.mrb[0].mxu0
        %v2023 = vadd.f32 0.0, %v2022
        %v2024 = vpop.f32.mrb[0].mxu0
        %v2025 = vadd.f32 0.0, %v2024
        %v2026 = vpop.f32.mrb[0].mxu0
        %v2027 = vadd.f32 0.0, %v2026
        %v2028 = vpop.f32.mrb[0].mxu0
        %v2029 = vadd.f32 0.0, %v2028
        %2030 = vmatprep.mubr.bf16.mxu0 0
        %2031 = vmatmul.mubr.bf16.gmra.mrb[0].mxu0 %v508
        %v2032 = vpop.f32.mrb[0].mxu0
        %v2033 = vadd.f32 0.0, %v2032
        %v2034 = vpop.f32.mrb[0].mxu0
        %v2035 = vadd.f32 0.0, %v2034
        %v2036 = vpop.f32.mrb[0].mxu0
        %v2037 = vadd.f32 0.0, %v2036
        %v2038 = vpop.f32.mrb[0].mxu0
        %v2039 = vadd.f32 0.0, %v2038
        %2040 = vmatprep.mubr.bf16.mxu0 0
        %2041 = vmatmul.mubr.bf16.gmra.mrb[0].mxu0 %v509
        %v2042 = vpop.f32.mrb[0].mxu0
        %v2043 = vadd.f32 0.0, %v2042
        %v2044 = vpop.f32.mrb[0].mxu0
        %v2045 = vadd.f32 0.0, %v2044
        %v2046 = vpop.f32.mrb[0].mxu0
        %v2047 = vadd.f32 0.0, %v2046
        %v2048 = vpop.f32.mrb[0].mxu0
        %v2049 = vadd.f32 0.0, %v2048
        %2050 = vmatprep.mubr.bf16.mxu0 0
        %2051 = vmatmul.mubr.bf16.gmra.mrb[0].mxu0 %v510
        %v2052 = vpop.f32.mrb[0].mxu0
        %v2053 = vadd.f32 0.0, %v2052
        %v2054 = vpop.f32.mrb[0].mxu0
        %v2055 = vadd.f32 0.0, %v2054
        %v2056 = vpop.f32.mrb[0].mxu0
        %v2057 = vadd.f32 0.0, %v2056
        %v2058 = vpop.f32.mrb[0].mxu0
        %v2059 = vadd.f32 0.0, %v2058
        %2060 = vmatprep.mubr.bf16.mxu0 0
        %2061 = vmatmul.mubr.bf16.gmra.mrb[0].mxu0 %v511
        %v2062 = vpop.f32.mrb[0].mxu0
        %v2063 = vadd.f32 0.0, %v2062
        %v2064 = vpop.f32.mrb[0].mxu0
        %v2065 = vadd.f32 0.0, %v2064
        %v2066 = vpop.f32.mrb[0].mxu0
        %v2067 = vadd.f32 0.0, %v2066
        %v2068 = vpop.f32.mrb[0].mxu0
        %v2069 = vadd.f32 0.0, %v2068
        %2070 = vmatprep.mubr.bf16.mxu0 0
        %2071 = vmatmul.mubr.bf16.gmra.mrb[0].mxu0 %v512
        %v2072 = vpop.f32.mrb[0].mxu0
        %v2073 = vadd.f32 0.0, %v2072
        %v2074 = vpop.f32.mrb[0].mxu0
        %v2075 = vadd.f32 0.0, %v2074
        %v2076 = vpop.f32.mrb[0].mxu0
        %v2077 = vadd.f32 0.0, %v2076
        %v2078 = vpop.f32.mrb[0].mxu0
        %v2079 = vadd.f32 0.0, %v2078
        %2080 = vmatprep.mubr.bf16.mxu0 0
        %2081 = vmatmul.mubr.bf16.gmra.mrb[0].mxu0 %v513
        %v2082 = vpop.f32.mrb[0].mxu0
        %v2083 = vadd.f32 0.0, %v2082
        %v2084 = vpop.f32.mrb[0].mxu0
        %v2085 = vadd.f32 0.0, %v2084
        %v2086 = vpop.f32.mrb[0].mxu0
        %v2087 = vadd.f32 0.0, %v2086
        %v2088 = vpop.f32.mrb[0].mxu0
        %v2089 = vadd.f32 0.0, %v2088
        %2090 = vdwg.mxu0
        %v2091 = vadd.f32 %v1753, %v1953
        %v2092 = vadd.f32 %v1754, %v1955
        %v2093 = vadd.f32 %v1755, %v1957
        %v2094 = vadd.f32 %v1756, %v1959
        %v2095 = vadd.f32 %v1757, %v1963
        %v2096 = vadd.f32 %v1758, %v1965
        %v2097 = vadd.f32 %v1759, %v1967
        %v2098 = vadd.f32 %v1760, %v1969
        %v2099 = vadd.f32 %v1761, %v1973
        %v2100 = vadd.f32 %v1762, %v1975
        %v2101 = vadd.f32 %v1763, %v1977
        %v2102 = vadd.f32 %v1764, %v1979
        %v2103 = vadd.f32 %v1765, %v1983
        %v2104 = vadd.f32 %v1766, %v1985
        %v2105 = vadd.f32 %v1767, %v1987
        %v2106 = vadd.f32 %v1768, %v1989
        %v2107 = vadd.f32 %v1769, %v1993
        %v2108 = vadd.f32 %v1770, %v1995
        %v2109 = vadd.f32 %v1771, %v1997
        %v2110 = vadd.f32 %v1772, %v1999
        %v2111 = vadd.f32 %v1773, %v2003
        %v2112 = vadd.f32 %v1774, %v2005
        %v2113 = vadd.f32 %v1775, %v2007
        %v2114 = vadd.f32 %v1776, %v2009
        %v2115 = vadd.f32 %v1777, %v2013
        %v2116 = vadd.f32 %v1778, %v2015
        %v2117 = vadd.f32 %v1779, %v2017
        %v2118 = vadd.f32 %v1780, %v2019
        %v2119 = vadd.f32 %v1781, %v2023
        %v2120 = vadd.f32 %v1782, %v2025
        %v2121 = vadd.f32 %v1783, %v2027
        %v2122 = vadd.f32 %v1784, %v2029
        %v2123 = vadd.f32 %v1785, %v2033
        %v2124 = vadd.f32 %v1786, %v2035
        %v2125 = vadd.f32 %v1787, %v2037
        %v2126 = vadd.f32 %v1788, %v2039
        %v2127 = vadd.f32 %v1789, %v2043
        %v2128 = vadd.f32 %v1790, %v2045
        %v2129 = vadd.f32 %v1791, %v2047
        %v2130 = vadd.f32 %v1792, %v2049
        %v2131 = vadd.f32 %v1793, %v2053
        %v2132 = vadd.f32 %v1794, %v2055
        %v2133 = vadd.f32 %v1795, %v2057
        %v2134 = vadd.f32 %v1796, %v2059
        %v2135 = vadd.f32 %v1797, %v2063
        %v2136 = vadd.f32 %v1798, %v2065
        %v2137 = vadd.f32 %v1799, %v2067
        %v2138 = vadd.f32 %v1800, %v2069
        %v2139 = vadd.f32 %v1801, %v2073
        %v2140 = vadd.f32 %v1802, %v2075
        %v2141 = vadd.f32 %v1803, %v2077
        %v2142 = vadd.f32 %v1804, %v2079
        %v2143 = vadd.f32 %v1805, %v2083
        %v2144 = vadd.f32 %v1806, %v2085
        %v2145 = vadd.f32 %v1807, %v2087
        %v2146 = vadd.f32 %v1808, %v2089
        %v2147 = vld [vmem:[%s2] sm:$0x3]
        %v2149 = vlaneseq
        %v2150 = vshrl.u32 %v2149, 7
        %v2151 = vsub.s32 0, %v2150
        %v2152 = vrot.slane %v2147, %v2151
        %v2153 = vlaneseq
        %v2154 = vshrl.u32 %v2153, 7
        %v2155 = vsub.s32 1, %v2154
        %v2156 = vrot.slane %v2147, %v2155
        %v2159 = vadd.f32 %v2091, %v2152
        %v2160 = vadd.f32 %v2092, %v2156
        %v2161 = vadd.f32 %v2093, %v2152
        %v2162 = vadd.f32 %v2094, %v2156
        %v2163 = vadd.f32 %v2095, %v2152
        %v2164 = vadd.f32 %v2096, %v2156
        %v2165 = vadd.f32 %v2097, %v2152
        %v2166 = vadd.f32 %v2098, %v2156
        %v2167 = vadd.f32 %v2099, %v2152
        %v2168 = vadd.f32 %v2100, %v2156
        %v2169 = vadd.f32 %v2101, %v2152
        %v2170 = vadd.f32 %v2102, %v2156
        %v2171 = vadd.f32 %v2103, %v2152
        %v2172 = vadd.f32 %v2104, %v2156
        %v2173 = vadd.f32 %v2105, %v2152
        %v2174 = vadd.f32 %v2106, %v2156
        %v2175 = vadd.f32 %v2107, %v2152
        %v2176 = vadd.f32 %v2108, %v2156
        %v2177 = vadd.f32 %v2109, %v2152
        %v2178 = vadd.f32 %v2110, %v2156
        %v2179 = vadd.f32 %v2111, %v2152
        %v2180 = vadd.f32 %v2112, %v2156
        %v2181 = vadd.f32 %v2113, %v2152
        %v2182 = vadd.f32 %v2114, %v2156
        %v2183 = vadd.f32 %v2115, %v2152
        %v2184 = vadd.f32 %v2116, %v2156
        %v2185 = vadd.f32 %v2117, %v2152
        %v2186 = vadd.f32 %v2118, %v2156
        %v2187 = vadd.f32 %v2119, %v2152
        %v2188 = vadd.f32 %v2120, %v2156
        %v2189 = vadd.f32 %v2121, %v2152
        %v2190 = vadd.f32 %v2122, %v2156
        %v2191 = vadd.f32 %v2123, %v2152
        %v2192 = vadd.f32 %v2124, %v2156
        %v2193 = vadd.f32 %v2125, %v2152
        %v2194 = vadd.f32 %v2126, %v2156
        %v2195 = vadd.f32 %v2127, %v2152
        %v2196 = vadd.f32 %v2128, %v2156
        %v2197 = vadd.f32 %v2129, %v2152
        %v2198 = vadd.f32 %v2130, %v2156
        %v2199 = vadd.f32 %v2131, %v2152
        %v2200 = vadd.f32 %v2132, %v2156
        %v2201 = vadd.f32 %v2133, %v2152
        %v2202 = vadd.f32 %v2134, %v2156
        %v2203 = vadd.f32 %v2135, %v2152
        %v2204 = vadd.f32 %v2136, %v2156
        %v2205 = vadd.f32 %v2137, %v2152
        %v2206 = vadd.f32 %v2138, %v2156
        %v2207 = vadd.f32 %v2139, %v2152
        %v2208 = vadd.f32 %v2140, %v2156
        %v2209 = vadd.f32 %v2141, %v2152
        %v2210 = vadd.f32 %v2142, %v2156
        %v2211 = vadd.f32 %v2143, %v2152
        %v2212 = vadd.f32 %v2144, %v2156
        %v2213 = vadd.f32 %v2145, %v2152
        %v2214 = vadd.f32 %v2146, %v2156
        %v2215 = vmax.f32 %v2159, 0.0
        %v2216 = vmax.f32 %v2160, 0.0
        %v2217 = vmax.f32 %v2161, 0.0
        %v2218 = vmax.f32 %v2162, 0.0
        %v2219 = vmax.f32 %v2163, 0.0
        %v2220 = vmax.f32 %v2164, 0.0
        %v2221 = vmax.f32 %v2165, 0.0
        %v2222 = vmax.f32 %v2166, 0.0
        %v2223 = vmax.f32 %v2167, 0.0
        %v2224 = vmax.f32 %v2168, 0.0
        %v2225 = vmax.f32 %v2169, 0.0
        %v2226 = vmax.f32 %v2170, 0.0
        %v2227 = vmax.f32 %v2171, 0.0
        %v2228 = vmax.f32 %v2172, 0.0
        %v2229 = vmax.f32 %v2173, 0.0
        %v2230 = vmax.f32 %v2174, 0.0
        %v2231 = vmax.f32 %v2175, 0.0
        %v2232 = vmax.f32 %v2176, 0.0
        %v2233 = vmax.f32 %v2177, 0.0
        %v2234 = vmax.f32 %v2178, 0.0
        %v2235 = vmax.f32 %v2179, 0.0
        %v2236 = vmax.f32 %v2180, 0.0
        %v2237 = vmax.f32 %v2181, 0.0
        %v2238 = vmax.f32 %v2182, 0.0
        %v2239 = vmax.f32 %v2183, 0.0
        %v2240 = vmax.f32 %v2184, 0.0
        %v2241 = vmax.f32 %v2185, 0.0
        %v2242 = vmax.f32 %v2186, 0.0
        %v2243 = vmax.f32 %v2187, 0.0
        %v2244 = vmax.f32 %v2188, 0.0
        %v2245 = vmax.f32 %v2189, 0.0
        %v2246 = vmax.f32 %v2190, 0.0
        %v2247 = vmax.f32 %v2191, 0.0
        %v2248 = vmax.f32 %v2192, 0.0
        %v2249 = vmax.f32 %v2193, 0.0
        %v2250 = vmax.f32 %v2194, 0.0
        %v2251 = vmax.f32 %v2195, 0.0
        %v2252 = vmax.f32 %v2196, 0.0
        %v2253 = vmax.f32 %v2197, 0.0
        %v2254 = vmax.f32 %v2198, 0.0
        %v2255 = vmax.f32 %v2199, 0.0
        %v2256 = vmax.f32 %v2200, 0.0
        %v2257 = vmax.f32 %v2201, 0.0
        %v2258 = vmax.f32 %v2202, 0.0
        %v2259 = vmax.f32 %v2203, 0.0
        %v2260 = vmax.f32 %v2204, 0.0
        %v2261 = vmax.f32 %v2205, 0.0
        %v2262 = vmax.f32 %v2206, 0.0
        %v2263 = vmax.f32 %v2207, 0.0
        %v2264 = vmax.f32 %v2208, 0.0
        %v2265 = vmax.f32 %v2209, 0.0
        %v2266 = vmax.f32 %v2210, 0.0
        %v2267 = vmax.f32 %v2211, 0.0
        %v2268 = vmax.f32 %v2212, 0.0
        %v2269 = vmax.f32 %v2213, 0.0
        %v2270 = vmax.f32 %v2214, 0.0
        %v2271 = vmax.f32 %v2215, %v2216
        %v2272 = vmax.f32 %v2217, %v2218
        %v2273 = vmax.f32 %v2219, %v2220
        %v2274 = vmax.f32 %v2221, %v2222
        %v2275 = vmax.f32 %v2223, %v2224
        %v2276 = vmax.f32 %v2225, %v2226
        %v2277 = vmax.f32 %v2227, %v2228
        %v2278 = vmax.f32 %v2229, %v2230
        %v2279 = vmax.f32 %v2231, %v2232
        %v2280 = vmax.f32 %v2233, %v2234
        %v2281 = vmax.f32 %v2235, %v2236
        %v2282 = vmax.f32 %v2237, %v2238
        %v2283 = vmax.f32 %v2239, %v2240
        %v2284 = vmax.f32 %v2241, %v2242
        %v2285 = vmax.f32 %v2243, %v2244
        %v2286 = vmax.f32 %v2245, %v2246
        %v2287 = vmax.f32 %v2247, %v2248
        %v2288 = vmax.f32 %v2249, %v2250
        %v2289 = vmax.f32 %v2251, %v2252
        %v2290 = vmax.f32 %v2253, %v2254
        %v2291 = vmax.f32 %v2255, %v2256
        %v2292 = vmax.f32 %v2257, %v2258
        %v2293 = vmax.f32 %v2259, %v2260
        %v2294 = vmax.f32 %v2261, %v2262
        %v2295 = vmax.f32 %v2263, %v2264
        %v2296 = vmax.f32 %v2265, %v2266
        %v2297 = vmax.f32 %v2267, %v2268
        %v2298 = vmax.f32 %v2269, %v2270
        %2299 = vst [vmem:[#allocation2] sm:$0xff] %v2271
        %2300 = vst [vmem:[#allocation2 + $0x8] sm:$0xff] %v2272
        %2301 = vst [vmem:[#allocation2 + $0x10] sm:$0xff] %v2273
        %2302 = vst [vmem:[#allocation2 + $0x18] sm:$0xff] %v2274
        %2303 = vst [vmem:[#allocation2 + $0x20] sm:$0xff] %v2275
        %2304 = vst [vmem:[#allocation2 + $0x28] sm:$0xff] %v2276
        %2305 = vst [vmem:[#allocation2 + $0x30] sm:$0xff] %v2277
        %2306 = vst [vmem:[#allocation2 + $0x38] sm:$0xff] %v2278
        %2307 = vst [vmem:[#allocation2 + $0x40] sm:$0xff] %v2279
        %2308 = vst [vmem:[#allocation2 + $0x48] sm:$0xff] %v2280
        %2309 = vst [vmem:[#allocation2 + $0x50] sm:$0xff] %v2281
        %2310 = vst [vmem:[#allocation2 + $0x58] sm:$0xff] %v2282
        %2311 = vst [vmem:[#allocation2 + $0x60] sm:$0xff] %v2283
        %2312 = vst [vmem:[#allocation2 + $0x68] sm:$0xff] %v2284
        %2313 = vst [vmem:[#allocation2 + $0x70] sm:$0xff] %v2285
        %2314 = vst [vmem:[#allocation2 + $0x78] sm:$0xff] %v2286
        %2315 = vst [vmem:[#allocation2 + $0x80] sm:$0xff] %v2287
        %2316 = vst [vmem:[#allocation2 + $0x88] sm:$0xff] %v2288
        %2317 = vst [vmem:[#allocation2 + $0x90] sm:$0xff] %v2289
        %2318 = vst [vmem:[#allocation2 + $0x98] sm:$0xff] %v2290
        %2319 = vst [vmem:[#allocation2 + $0xa0] sm:$0xff] %v2291
        %2320 = vst [vmem:[#allocation2 + $0xa8] sm:$0xff] %v2292
        %2321 = vst [vmem:[#allocation2 + $0xb0] sm:$0xff] %v2293
        %2322 = vst [vmem:[#allocation2 + $0xb8] sm:$0xff] %v2294
        %2323 = vst [vmem:[#allocation2 + $0xc0] sm:$0xff] %v2295
        %2324 = vst [vmem:[#allocation2 + $0xc8] sm:$0xff] %v2296
        %2325 = vst [vmem:[#allocation2 + $0xd0] sm:$0xff] %v2297
        %2326 = vst [vmem:[#allocation2 + $0xd8] sm:$0xff] %v2298
        %v2327 = vld [vmem:[#allocation2] sm:$0xff]
        %s2328 = scalar_lea.vmem [#allocation2], 8
        %v2329 = vld [vmem:[%s2328] sm:$0xff]
        %v2330 = vmax.f32 %v2327, %v2329
        %2331 = vst [vmem:[#allocation3] sm:$0xff] %v2330
        %s2332 = scalar_lea.vmem [#allocation2], 16
        %v2333 = vld [vmem:[%s2332] sm:$0xff]
        %s2334 = scalar_lea.vmem [#allocation2], 24
        %v2335 = vld [vmem:[%s2334] sm:$0xff]
        %v2336 = vmax.f32 %v2333, %v2335
        %s2337 = scalar_lea.vmem [#allocation3], 8
        %2338 = vst [vmem:[%s2337] sm:$0xff] %v2336
        %s2339 = scalar_lea.vmem [#allocation2], 32
        %v2340 = vld [vmem:[%s2339] sm:$0xff]
        %s2341 = scalar_lea.vmem [#allocation2], 40
        %v2342 = vld [vmem:[%s2341] sm:$0xff]
        %v2343 = vmax.f32 %v2340, %v2342
        %s2344 = scalar_lea.vmem [#allocation3], 16
        %2345 = vst [vmem:[%s2344] sm:$0xff] %v2343
        %s2346 = scalar_lea.vmem [#allocation2], 48
        %v2347 = vld [vmem:[%s2346] sm:$0xff]
        %s2348 = scalar_lea.vmem [#allocation2], 56
        %v2349 = vld [vmem:[%s2348] sm:$0xff]
        %v2350 = vmax.f32 %v2347, %v2349
        %s2351 = scalar_lea.vmem [#allocation3], 24
        %2352 = vst [vmem:[%s2351] sm:$0xff] %v2350
        %s2353 = scalar_lea.vmem [#allocation2], 64
        %v2354 = vld [vmem:[%s2353] sm:$0xff]
        %s2355 = scalar_lea.vmem [#allocation2], 72
        %v2356 = vld [vmem:[%s2355] sm:$0xff]
        %v2357 = vmax.f32 %v2354, %v2356
        %s2358 = scalar_lea.vmem [#allocation3], 32
        %2359 = vst [vmem:[%s2358] sm:$0xff] %v2357
        %s2360 = scalar_lea.vmem [#allocation2], 80
        %v2361 = vld [vmem:[%s2360] sm:$0xff]
        %s2362 = scalar_lea.vmem [#allocation2], 88
        %v2363 = vld [vmem:[%s2362] sm:$0xff]
        %v2364 = vmax.f32 %v2361, %v2363
        %s2365 = scalar_lea.vmem [#allocation3], 40
        %2366 = vst [vmem:[%s2365] sm:$0xff] %v2364
        %s2367 = scalar_lea.vmem [#allocation2], 96
        %v2368 = vld [vmem:[%s2367] sm:$0xff]
        %s2369 = scalar_lea.vmem [#allocation2], 104
        %v2370 = vld [vmem:[%s2369] sm:$0xff]
        %v2371 = vmax.f32 %v2368, %v2370
        %s2372 = scalar_lea.vmem [#allocation3], 48
        %2373 = vst [vmem:[%s2372] sm:$0xff] %v2371
        %s2374 = scalar_lea.vmem [#allocation2], 112
        %v2375 = vld [vmem:[%s2374] sm:$0xff]
        %s2376 = scalar_lea.vmem [#allocation2], 120
        %v2377 = vld [vmem:[%s2376] sm:$0xff]
        %v2378 = vmax.f32 %v2375, %v2377
        %s2379 = scalar_lea.vmem [#allocation3], 56
        %2380 = vst [vmem:[%s2379] sm:$0xff] %v2378
        %s2381 = scalar_lea.vmem [#allocation2], 128
        %v2382 = vld [vmem:[%s2381] sm:$0xff]
        %s2383 = scalar_lea.vmem [#allocation2], 136
        %v2384 = vld [vmem:[%s2383] sm:$0xff]
        %v2385 = vmax.f32 %v2382, %v2384
        %s2386 = scalar_lea.vmem [#allocation3], 64
        %2387 = vst [vmem:[%s2386] sm:$0xff] %v2385
        %s2388 = scalar_lea.vmem [#allocation2], 144
        %v2389 = vld [vmem:[%s2388] sm:$0xff]
        %s2390 = scalar_lea.vmem [#allocation2], 152
        %v2391 = vld [vmem:[%s2390] sm:$0xff]
        %v2392 = vmax.f32 %v2389, %v2391
        %s2393 = scalar_lea.vmem [#allocation3], 72
        %2394 = vst [vmem:[%s2393] sm:$0xff] %v2392
        %s2395 = scalar_lea.vmem [#allocation2], 160
        %v2396 = vld [vmem:[%s2395] sm:$0xff]
        %s2397 = scalar_lea.vmem [#allocation2], 168
        %v2398 = vld [vmem:[%s2397] sm:$0xff]
        %v2399 = vmax.f32 %v2396, %v2398
        %s2400 = scalar_lea.vmem [#allocation3], 80
        %2401 = vst [vmem:[%s2400] sm:$0xff] %v2399
        %s2402 = scalar_lea.vmem [#allocation2], 176
        %v2403 = vld [vmem:[%s2402] sm:$0xff]
        %s2404 = scalar_lea.vmem [#allocation2], 184
        %v2405 = vld [vmem:[%s2404] sm:$0xff]
        %v2406 = vmax.f32 %v2403, %v2405
        %s2407 = scalar_lea.vmem [#allocation3], 88
        %2408 = vst [vmem:[%s2407] sm:$0xff] %v2406
        %s2409 = scalar_lea.vmem [#allocation2], 192
        %v2410 = vld [vmem:[%s2409] sm:$0xff]
        %s2411 = scalar_lea.vmem [#allocation2], 200
        %v2412 = vld [vmem:[%s2411] sm:$0xff]
        %v2413 = vmax.f32 %v2410, %v2412
        %s2414 = scalar_lea.vmem [#allocation3], 96
        %2415 = vst [vmem:[%s2414] sm:$0xff] %v2413
        %s2416 = scalar_lea.vmem [#allocation2], 208
        %v2417 = vld [vmem:[%s2416] sm:$0xff]
        %s2418 = scalar_lea.vmem [#allocation2], 216
        %v2419 = vld [vmem:[%s2418] sm:$0xff]
        %v2420 = vmax.f32 %v2417, %v2419
        %s2421 = scalar_lea.vmem [#allocation3], 104
        %2422 = vst [vmem:[%s2421] sm:$0xff] %v2420
        %s2423 = scalar_lea.vmem [#allocation3], 112
        %2424 = vst [vmem:[%s2423] sm:$0xff] 0.0
        %s2425 = scalar_lea.vmem [#allocation3], 120
        %2426 = vst [vmem:[%s2425] sm:$0xff] 0.0
        %v2427 = vld [vmem:[#allocation3] sm:$0xff]
        %v2428 = vld [vmem:[#allocation3 + $0x8] sm:$0xff]
        %v2429 = vld [vmem:[#allocation3 + $0x10] sm:$0xff]
        %v2430 = vld [vmem:[#allocation3 + $0x18] sm:$0xff]
        %v2431 = vld [vmem:[#allocation3 + $0x20] sm:$0xff]
        %v2432 = vld [vmem:[#allocation3 + $0x28] sm:$0xff]
        %v2433 = vld [vmem:[#allocation3 + $0x30] sm:$0xff]
        %v2434 = vld [vmem:[#allocation3 + $0x38] sm:$0xff]
        %v2435 = vld [vmem:[#allocation3 + $0x40] sm:$0xff]
        %v2436 = vld [vmem:[#allocation3 + $0x48] sm:$0xff]
        %v2437 = vld [vmem:[#allocation3 + $0x50] sm:$0xff]
        %v2438 = vld [vmem:[#allocation3 + $0x58] sm:$0xff]
        %v2439 = vld [vmem:[#allocation3 + $0x60] sm:$0xff]
        %v2440 = vld [vmem:[#allocation3 + $0x68] sm:$0xff]
        %v2441 = vld [vmem:[#allocation3 + $0x70] sm:$0xff]
        %v2442 = vld [vmem:[#allocation3 + $0x78] sm:$0xff]
        %v2443 = vpack.c.bf16 %v2428, %v2427
        %v2444 = vpack.c.bf16 %v2430, %v2429
        %v2445 = vpack.c.bf16 %v2432, %v2431
        %v2446 = vpack.c.bf16 %v2434, %v2433
        %v2447 = vpack.c.bf16 %v2436, %v2435
        %v2448 = vpack.c.bf16 %v2438, %v2437
        %v2449 = vpack.c.bf16 %v2440, %v2439
        %v2450 = vpack.c.bf16 %v2442, %v2441
        %v2451 = vld [vmem:[%s3] sm:$0xff]
        %v2452 = vld [vmem:[%s3 + $0x8] sm:$0xff]
        %v2453 = vld [vmem:[%s3 + $0x10] sm:$0xff]
        %v2454 = vld [vmem:[%s3 + $0x18] sm:$0xff]
        %v2455 = vld [vmem:[%s3 + $0x20] sm:$0xff]
        %v2456 = vld [vmem:[%s3 + $0x28] sm:$0xff]
        %v2457 = vld [vmem:[%s3 + $0x30] sm:$0xff]
        %v2458 = vld [vmem:[%s3 + $0x38] sm:$0xff]
        %v2459 = vld [vmem:[%s3 + $0x40] sm:$0xff]
        %v2460 = vld [vmem:[%s3 + $0x48] sm:$0xff]
        %v2461 = vld [vmem:[%s3 + $0x50] sm:$0xff]
        %v2462 = vld [vmem:[%s3 + $0x58] sm:$0xff]
        %v2463 = vld [vmem:[%s3 + $0x60] sm:$0xff]
        %v2464 = vld [vmem:[%s3 + $0x68] sm:$0xff]
        %v2465 = vld [vmem:[%s3 + $0x70] sm:$0xff]
        %v2466 = vld [vmem:[%s3 + $0x78] sm:$0xff]
        %v2483 = vunpack.c.l.b16 %v2451
        %v2484 = vunpack.c.h.b16 %v2451
        %v2485 = vunpack.c.l.b16 %v2452
        %v2486 = vunpack.c.h.b16 %v2452
        %v2487 = vunpack.c.l.b16 %v2453
        %v2488 = vunpack.c.h.b16 %v2453
        %v2489 = vunpack.c.l.b16 %v2454
        %v2490 = vunpack.c.h.b16 %v2454
        %v2491 = vunpack.c.l.b16 %v2455
        %v2492 = vunpack.c.h.b16 %v2455
        %v2493 = vunpack.c.l.b16 %v2456
        %v2494 = vunpack.c.h.b16 %v2456
        %v2495 = vunpack.c.l.b16 %v2457
        %v2496 = vunpack.c.h.b16 %v2457
        %v2497 = vunpack.c.l.b16 %v2458
        %v2498 = vunpack.c.h.b16 %v2458
        %v2499 = vunpack.c.l.b16 %v2459
        %v2500 = vunpack.c.h.b16 %v2459
        %v2501 = vunpack.c.l.b16 %v2460
        %v2502 = vunpack.c.h.b16 %v2460
        %v2503 = vunpack.c.l.b16 %v2461
        %v2504 = vunpack.c.h.b16 %v2461
        %v2505 = vunpack.c.l.b16 %v2462
        %v2506 = vunpack.c.h.b16 %v2462
        %v2507 = vunpack.c.l.b16 %v2463
        %v2508 = vunpack.c.h.b16 %v2463
        %v2509 = vunpack.c.l.b16 %v2464
        %v2510 = vunpack.c.h.b16 %v2464
        %v2511 = vunpack.c.l.b16 %v2465
        %v2512 = vunpack.c.h.b16 %v2465
        %v2513 = vunpack.c.l.b16 %v2466
        %v2514 = vunpack.c.h.b16 %v2466
        %v2515 = vpack.c.b16 %v2485, %v2483
        %v2516 = vpack.c.b16 %v2486, %v2484
        %v2517 = vpack.c.b16 %v2489, %v2487
        %v2518 = vpack.c.b16 %v2490, %v2488
        %v2519 = vpack.c.b16 %v2493, %v2491
        %v2520 = vpack.c.b16 %v2494, %v2492
        %v2521 = vpack.c.b16 %v2497, %v2495
        %v2522 = vpack.c.b16 %v2498, %v2496
        %v2523 = vpack.c.b16 %v2501, %v2499
        %v2524 = vpack.c.b16 %v2502, %v2500
        %v2525 = vpack.c.b16 %v2505, %v2503
        %v2526 = vpack.c.b16 %v2506, %v2504
        %v2527 = vpack.c.b16 %v2509, %v2507
        %v2528 = vpack.c.b16 %v2510, %v2508
        %v2529 = vpack.c.b16 %v2513, %v2511
        %v2530 = vpack.c.b16 %v2514, %v2512
        %2547 = vmatprep.subr.bf16.mxu0 %v2516
        %2548 = vmatpush1.bf16.msra.mxu0 %v2515
        %2549 = vmatprep.subr.bf16.mxu0 %v2518
        %2550 = vmatpush1.bf16.msra.mxu0 %v2517
        %2551 = vmatprep.subr.bf16.mxu0 %v2520
        %2552 = vmatpush1.bf16.msra.mxu0 %v2519
        %2553 = vmatprep.subr.bf16.mxu0 %v2522
        %2554 = vmatpush1.bf16.msra.mxu0 %v2521
        %2555 = vmatprep.subr.bf16.mxu0 %v2524
        %2556 = vmatpush1.bf16.msra.mxu0 %v2523
        %2557 = vmatprep.subr.bf16.mxu0 %v2526
        %2558 = vmatpush1.bf16.msra.mxu0 %v2525
        %2559 = vmatprep.subr.bf16.mxu0 %v2528
        %2560 = vmatpush1.bf16.msra.mxu0 %v2527
        %2561 = vmatprep.subr.bf16.mxu0 %v2530
        %2562 = vmatpush1.bf16.msra.mxu0 %v2529
        %2563 = vmatprep.subr.bf16.mxu0 0
        %2564 = vmatpush1.bf16.msra.mxu0 0
        %2565 = vmatprep.subr.bf16.mxu0 0
        %2566 = vmatpush1.bf16.msra.mxu0 0
        %2567 = vmatprep.subr.bf16.mxu0 0
        %2568 = vmatpush1.bf16.msra.mxu0 0
        %2569 = vmatprep.subr.bf16.mxu0 0
        %2570 = vmatpush1.bf16.msra.mxu0 0
        %2571 = vmatprep.subr.bf16.mxu0 0
        %2572 = vmatpush1.bf16.msra.mxu0 0
        %2573 = vmatprep.subr.bf16.mxu0 0
        %2574 = vmatpush1.bf16.msra.mxu0 0
        %2575 = vmatprep.subr.bf16.mxu0 0
        %2576 = vmatpush1.bf16.msra.mxu0 0
        %2577 = vmatprep.subr.bf16.mxu0 0
        %2578 = vmatpush1.bf16.msra.mxu0 0
        %2579 = vmatprep.mubr.bf16.mxu0 0
        %2580 = vmatmul.mubr.bf16.gmra.mrb[0].mxu0 %v2443
        %v2581 = vpop.f32.mrb[0].mxu0
        %v2582 = vadd.f32 0.0, %v2581
        %v2583 = vpop.f32.mrb[0].mxu0
        %v2584 = vadd.f32 0.0, %v2583
        %v2585 = vpop.f32.mrb[0].mxu0
        %v2586 = vadd.f32 0.0, %v2585
        %v2587 = vpop.f32.mrb[0].mxu0
        %v2588 = vadd.f32 0.0, %v2587
        %2589 = vmatprep.mubr.bf16.mxu0 0
        %2590 = vmatmul.mubr.bf16.gmra.mrb[0].mxu0 %v2444
        %v2591 = vpop.f32.mrb[0].mxu0
        %v2592 = vadd.f32 0.0, %v2591
        %v2593 = vpop.f32.mrb[0].mxu0
        %v2594 = vadd.f32 0.0, %v2593
        %v2595 = vpop.f32.mrb[0].mxu0
        %v2596 = vadd.f32 0.0, %v2595
        %v2597 = vpop.f32.mrb[0].mxu0
        %v2598 = vadd.f32 0.0, %v2597
        %2599 = vmatprep.mubr.bf16.mxu0 0
        %2600 = vmatmul.mubr.bf16.gmra.mrb[0].mxu0 %v2445
        %v2601 = vpop.f32.mrb[0].mxu0
        %v2602 = vadd.f32 0.0, %v2601
        %v2603 = vpop.f32.mrb[0].mxu0
        %v2604 = vadd.f32 0.0, %v2603
        %v2605 = vpop.f32.mrb[0].mxu0
        %v2606 = vadd.f32 0.0, %v2605
        %v2607 = vpop.f32.mrb[0].mxu0
        %v2608 = vadd.f32 0.0, %v2607
        %2609 = vmatprep.mubr.bf16.mxu0 0
        %2610 = vmatmul.mubr.bf16.gmra.mrb[0].mxu0 %v2446
        %v2611 = vpop.f32.mrb[0].mxu0
        %v2612 = vadd.f32 0.0, %v2611
        %v2613 = vpop.f32.mrb[0].mxu0
        %v2614 = vadd.f32 0.0, %v2613
        %v2615 = vpop.f32.mrb[0].mxu0
        %v2616 = vadd.f32 0.0, %v2615
        %v2617 = vpop.f32.mrb[0].mxu0
        %v2618 = vadd.f32 0.0, %v2617
        %2619 = vmatprep.mubr.bf16.mxu0 0
        %2620 = vmatmul.mubr.bf16.gmra.mrb[0].mxu0 %v2447
        %v2621 = vpop.f32.mrb[0].mxu0
        %v2622 = vadd.f32 0.0, %v2621
        %v2623 = vpop.f32.mrb[0].mxu0
        %v2624 = vadd.f32 0.0, %v2623
        %v2625 = vpop.f32.mrb[0].mxu0
        %v2626 = vadd.f32 0.0, %v2625
        %v2627 = vpop.f32.mrb[0].mxu0
        %v2628 = vadd.f32 0.0, %v2627
        %2629 = vmatprep.mubr.bf16.mxu0 0
        %2630 = vmatmul.mubr.bf16.gmra.mrb[0].mxu0 %v2448
        %v2631 = vpop.f32.mrb[0].mxu0
        %v2632 = vpop.f32.mrb[0].mxu0
        %v2633 = vpop.f32.mrb[0].mxu0
        %v2634 = vpop.f32.mrb[0].mxu0
        %2635 = vmatprep.mubr.bf16.mxu0 0
        %2636 = vmatmul.mubr.bf16.gmra.mrb[0].mxu0 %v2449
        %v2637 = vpop.f32.mrb[0].mxu0
        %v2638 = vpop.f32.mrb[0].mxu0
        %v2639 = vpop.f32.mrb[0].mxu0
        %v2640 = vpop.f32.mrb[0].mxu0
        %2641 = vmatprep.mubr.bf16.mxu0 0
        %2642 = vmatmul.mubr.bf16.gmra.mrb[0].mxu0 %v2450
        %v2643 = vpop.f32.mrb[0].mxu0
        %v2644 = vpop.f32.mrb[0].mxu0
        %v2645 = vpop.f32.mrb[0].mxu0
        %v2646 = vpop.f32.mrb[0].mxu0
        %2647 = vdwg.mxu0
        %s2648 = scalar_lea.vmem %s3, 128
        %v2649 = vld [vmem:[%s2648] sm:$0xff]
        %v2650 = vld [vmem:[%s2648 + $0x8] sm:$0xff]
        %v2651 = vld [vmem:[%s2648 + $0x10] sm:$0xff]
        %v2652 = vld [vmem:[%s2648 + $0x18] sm:$0xff]
        %v2653 = vld [vmem:[%s2648 + $0x20] sm:$0xff]
        %v2654 = vld [vmem:[%s2648 + $0x28] sm:$0xff]
        %v2655 = vld [vmem:[%s2648 + $0x30] sm:$0xff]
        %v2656 = vld [vmem:[%s2648 + $0x38] sm:$0xff]
        %v2657 = vld [vmem:[%s2648 + $0x40] sm:$0xff]
        %v2658 = vld [vmem:[%s2648 + $0x48] sm:$0xff]
        %v2659 = vld [vmem:[%s2648 + $0x50] sm:$0xff]
        %v2660 = vld [vmem:[%s2648 + $0x58] sm:$0xff]
        %v2661 = vld [vmem:[%s2648 + $0x60] sm:$0xff]
        %v2662 = vld [vmem:[%s2648 + $0x68] sm:$0xff]
        %v2663 = vld [vmem:[%s2648 + $0x70] sm:$0xff]
        %v2664 = vld [vmem:[%s2648 + $0x78] sm:$0xff]
        %v2681 = vunpack.c.l.b16 %v2649
        %v2682 = vunpack.c.h.b16 %v2649
        %v2683 = vunpack.c.l.b16 %v2650
        %v2684 = vunpack.c.h.b16 %v2650
        %v2685 = vunpack.c.l.b16 %v2651
        %v2686 = vunpack.c.h.b16 %v2651
        %v2687 = vunpack.c.l.b16 %v2652
        %v2688 = vunpack.c.h.b16 %v2652
        %v2689 = vunpack.c.l.b16 %v2653
        %v2690 = vunpack.c.h.b16 %v2653
        %v2691 = vunpack.c.l.b16 %v2654
        %v2692 = vunpack.c.h.b16 %v2654
        %v2693 = vunpack.c.l.b16 %v2655
        %v2694 = vunpack.c.h.b16 %v2655
        %v2695 = vunpack.c.l.b16 %v2656
        %v2696 = vunpack.c.h.b16 %v2656
        %v2697 = vunpack.c.l.b16 %v2657
        %v2698 = vunpack.c.h.b16 %v2657
        %v2699 = vunpack.c.l.b16 %v2658
        %v2700 = vunpack.c.h.b16 %v2658
        %v2701 = vunpack.c.l.b16 %v2659
        %v2702 = vunpack.c.h.b16 %v2659
        %v2703 = vunpack.c.l.b16 %v2660
        %v2704 = vunpack.c.h.b16 %v2660
        %v2705 = vunpack.c.l.b16 %v2661
        %v2706 = vunpack.c.h.b16 %v2661
        %v2707 = vunpack.c.l.b16 %v2662
        %v2708 = vunpack.c.h.b16 %v2662
        %v2709 = vunpack.c.l.b16 %v2663
        %v2710 = vunpack.c.h.b16 %v2663
        %v2711 = vunpack.c.l.b16 %v2664
        %v2712 = vunpack.c.h.b16 %v2664
        %v2713 = vpack.c.b16 %v2683, %v2681
        %v2714 = vpack.c.b16 %v2684, %v2682
        %v2715 = vpack.c.b16 %v2687, %v2685
        %v2716 = vpack.c.b16 %v2688, %v2686
        %v2717 = vpack.c.b16 %v2691, %v2689
        %v2718 = vpack.c.b16 %v2692, %v2690
        %v2719 = vpack.c.b16 %v2695, %v2693
        %v2720 = vpack.c.b16 %v2696, %v2694
        %v2721 = vpack.c.b16 %v2699, %v2697
        %v2722 = vpack.c.b16 %v2700, %v2698
        %v2723 = vpack.c.b16 %v2703, %v2701
        %v2724 = vpack.c.b16 %v2704, %v2702
        %v2725 = vpack.c.b16 %v2707, %v2705
        %v2726 = vpack.c.b16 %v2708, %v2706
        %v2727 = vpack.c.b16 %v2711, %v2709
        %v2728 = vpack.c.b16 %v2712, %v2710
        %2745 = vmatprep.subr.bf16.mxu0 %v2714
        %2746 = vmatpush1.bf16.msra.mxu0 %v2713
        %2747 = vmatprep.subr.bf16.mxu0 %v2716
        %2748 = vmatpush1.bf16.msra.mxu0 %v2715
        %2749 = vmatprep.subr.bf16.mxu0 %v2718
        %2750 = vmatpush1.bf16.msra.mxu0 %v2717
        %2751 = vmatprep.subr.bf16.mxu0 %v2720
        %2752 = vmatpush1.bf16.msra.mxu0 %v2719
        %2753 = vmatprep.subr.bf16.mxu0 %v2722
        %2754 = vmatpush1.bf16.msra.mxu0 %v2721
        %2755 = vmatprep.subr.bf16.mxu0 %v2724
        %2756 = vmatpush1.bf16.msra.mxu0 %v2723
        %2757 = vmatprep.subr.bf16.mxu0 %v2726
        %2758 = vmatpush1.bf16.msra.mxu0 %v2725
        %2759 = vmatprep.subr.bf16.mxu0 %v2728
        %2760 = vmatpush1.bf16.msra.mxu0 %v2727
        %2761 = vmatprep.subr.bf16.mxu0 0
        %2762 = vmatpush1.bf16.msra.mxu0 0
        %2763 = vmatprep.subr.bf16.mxu0 0
        %2764 = vmatpush1.bf16.msra.mxu0 0
        %2765 = vmatprep.subr.bf16.mxu0 0
        %2766 = vmatpush1.bf16.msra.mxu0 0
        %2767 = vmatprep.subr.bf16.mxu0 0
        %2768 = vmatpush1.bf16.msra.mxu0 0
        %2769 = vmatprep.subr.bf16.mxu0 0
        %2770 = vmatpush1.bf16.msra.mxu0 0
        %2771 = vmatprep.subr.bf16.mxu0 0
        %2772 = vmatpush1.bf16.msra.mxu0 0
        %2773 = vmatprep.subr.bf16.mxu0 0
        %2774 = vmatpush1.bf16.msra.mxu0 0
        %2775 = vmatprep.subr.bf16.mxu0 0
        %2776 = vmatpush1.bf16.msra.mxu0 0
        %2777 = vmatprep.mubr.bf16.mxu0 0
        %2778 = vmatmul.mubr.bf16.gmra.mrb[0].mxu0 %v2443
        %v2779 = vpop.f32.mrb[0].mxu0
        %v2780 = vpop.f32.mrb[0].mxu0
        %v2781 = vpop.f32.mrb[0].mxu0
        %v2782 = vadd.f32 0.0, %v2781
        %v2783 = vpop.f32.mrb[0].mxu0
        %v2784 = vadd.f32 0.0, %v2783
        %2785 = vmatprep.mubr.bf16.mxu0 0
        %2786 = vmatmul.mubr.bf16.gmra.mrb[0].mxu0 %v2444
        %v2787 = vpop.f32.mrb[0].mxu0
        %v2788 = vadd.f32 0.0, %v2787
        %v2789 = vpop.f32.mrb[0].mxu0
        %v2790 = vadd.f32 0.0, %v2789
        %v2791 = vpop.f32.mrb[0].mxu0
        %v2792 = vadd.f32 0.0, %v2791
        %v2793 = vpop.f32.mrb[0].mxu0
        %v2794 = vadd.f32 0.0, %v2793
        %2795 = vmatprep.mubr.bf16.mxu0 0
        %2796 = vmatmul.mubr.bf16.gmra.mrb[0].mxu0 %v2445
        %v2797 = vpop.f32.mrb[0].mxu0
        %v2798 = vadd.f32 0.0, %v2797
        %v2799 = vpop.f32.mrb[0].mxu0
        %v2800 = vadd.f32 0.0, %v2799
        %v2801 = vpop.f32.mrb[0].mxu0
        %v2802 = vadd.f32 0.0, %v2801
        %v2803 = vpop.f32.mrb[0].mxu0
        %v2804 = vadd.f32 0.0, %v2803
        %2805 = vmatprep.mubr.bf16.mxu0 0
        %2806 = vmatmul.mubr.bf16.gmra.mrb[0].mxu0 %v2446
        %v2807 = vpop.f32.mrb[0].mxu0
        %v2808 = vadd.f32 0.0, %v2807
        %v2809 = vpop.f32.mrb[0].mxu0
        %v2810 = vadd.f32 0.0, %v2809
        %v2811 = vpop.f32.mrb[0].mxu0
        %v2812 = vadd.f32 0.0, %v2811
        %v2813 = vpop.f32.mrb[0].mxu0
        %v2814 = vadd.f32 0.0, %v2813
        %2815 = vmatprep.mubr.bf16.mxu0 0
        %2816 = vmatmul.mubr.bf16.gmra.mrb[0].mxu0 %v2447
        %v2817 = vpop.f32.mrb[0].mxu0
        %v2818 = vadd.f32 0.0, %v2817
        %v2819 = vpop.f32.mrb[0].mxu0
        %v2820 = vadd.f32 0.0, %v2819
        %v2821 = vpop.f32.mrb[0].mxu0
        %v2822 = vadd.f32 0.0, %v2821
        %v2823 = vpop.f32.mrb[0].mxu0
        %v2824 = vadd.f32 0.0, %v2823
        %2825 = vmatprep.mubr.bf16.mxu0 0
        %2826 = vmatmul.mubr.bf16.gmra.mrb[0].mxu0 %v2448
        %v2827 = vpop.f32.mrb[0].mxu0
        %v2828 = vadd.f32 0.0, %v2827
        %v2829 = vpop.f32.mrb[0].mxu0
        %v2830 = vadd.f32 0.0, %v2829
        %v2831 = vpop.f32.mrb[0].mxu0
        %v2832 = vpop.f32.mrb[0].mxu0
        %2833 = vmatprep.mubr.bf16.mxu0 0
        %2834 = vmatmul.mubr.bf16.gmra.mrb[0].mxu0 %v2449
        %v2835 = vpop.f32.mrb[0].mxu0
        %v2836 = vpop.f32.mrb[0].mxu0
        %v2837 = vpop.f32.mrb[0].mxu0
        %v2838 = vpop.f32.mrb[0].mxu0
        %2839 = vmatprep.mubr.bf16.mxu0 0
        %2840 = vmatmul.mubr.bf16.gmra.mrb[0].mxu0 %v2450
        %v2841 = vpop.f32.mrb[0].mxu0
        %v2842 = vpop.f32.mrb[0].mxu0
        %v2843 = vpop.f32.mrb[0].mxu0
        %v2844 = vpop.f32.mrb[0].mxu0
        %2845 = vdwg.mxu0
        %v2846 = vadd.f32 %v2582, %v2782
        %v2847 = vadd.f32 %v2584, %v2784
        %v2848 = vadd.f32 %v2586, %v2788
        %v2849 = vadd.f32 %v2588, %v2790
        %v2850 = vadd.f32 %v2592, %v2792
        %v2851 = vadd.f32 %v2594, %v2794
        %v2852 = vadd.f32 %v2596, %v2798
        %v2853 = vadd.f32 %v2598, %v2800
        %v2854 = vadd.f32 %v2602, %v2802
        %v2855 = vadd.f32 %v2604, %v2804
        %v2856 = vadd.f32 %v2606, %v2808
        %v2857 = vadd.f32 %v2608, %v2810
        %v2858 = vadd.f32 %v2612, %v2812
        %v2859 = vadd.f32 %v2614, %v2814
        %v2860 = vadd.f32 %v2616, %v2818
        %v2861 = vadd.f32 %v2618, %v2820
        %v2862 = vadd.f32 %v2622, %v2822
        %v2863 = vadd.f32 %v2624, %v2824
        %v2864 = vadd.f32 %v2626, %v2828
        %v2865 = vadd.f32 %v2628, %v2830
        %s2866 = scalar_lea.vmem %s3, 256
        %v2867 = vld [vmem:[%s2866] sm:$0xff]
        %v2868 = vld [vmem:[%s2866 + $0x8] sm:$0xff]
        %v2869 = vld [vmem:[%s2866 + $0x10] sm:$0xff]
        %v2870 = vld [vmem:[%s2866 + $0x18] sm:$0xff]
        %v2871 = vld [vmem:[%s2866 + $0x20] sm:$0xff]
        %v2872 = vld [vmem:[%s2866 + $0x28] sm:$0xff]
        %v2873 = vld [vmem:[%s2866 + $0x30] sm:$0xff]
        %v2874 = vld [vmem:[%s2866 + $0x38] sm:$0xff]
        %v2875 = vld [vmem:[%s2866 + $0x40] sm:$0xff]
        %v2876 = vld [vmem:[%s2866 + $0x48] sm:$0xff]
        %v2877 = vld [vmem:[%s2866 + $0x50] sm:$0xff]
        %v2878 = vld [vmem:[%s2866 + $0x58] sm:$0xff]
        %v2879 = vld [vmem:[%s2866 + $0x60] sm:$0xff]
        %v2880 = vld [vmem:[%s2866 + $0x68] sm:$0xff]
        %v2881 = vld [vmem:[%s2866 + $0x70] sm:$0xff]
        %v2882 = vld [vmem:[%s2866 + $0x78] sm:$0xff]
        %v2899 = vunpack.c.l.b16 %v2867
        %v2900 = vunpack.c.h.b16 %v2867
        %v2901 = vunpack.c.l.b16 %v2868
        %v2902 = vunpack.c.h.b16 %v2868
        %v2903 = vunpack.c.l.b16 %v2869
        %v2904 = vunpack.c.h.b16 %v2869
        %v2905 = vunpack.c.l.b16 %v2870
        %v2906 = vunpack.c.h.b16 %v2870
        %v2907 = vunpack.c.l.b16 %v2871
        %v2908 = vunpack.c.h.b16 %v2871
        %v2909 = vunpack.c.l.b16 %v2872
        %v2910 = vunpack.c.h.b16 %v2872
        %v2911 = vunpack.c.l.b16 %v2873
        %v2912 = vunpack.c.h.b16 %v2873
        %v2913 = vunpack.c.l.b16 %v2874
        %v2914 = vunpack.c.h.b16 %v2874
        %v2915 = vunpack.c.l.b16 %v2875
        %v2916 = vunpack.c.h.b16 %v2875
        %v2917 = vunpack.c.l.b16 %v2876
        %v2918 = vunpack.c.h.b16 %v2876
        %v2919 = vunpack.c.l.b16 %v2877
        %v2920 = vunpack.c.h.b16 %v2877
        %v2921 = vunpack.c.l.b16 %v2878
        %v2922 = vunpack.c.h.b16 %v2878
        %v2923 = vunpack.c.l.b16 %v2879
        %v2924 = vunpack.c.h.b16 %v2879
        %v2925 = vunpack.c.l.b16 %v2880
        %v2926 = vunpack.c.h.b16 %v2880
        %v2927 = vunpack.c.l.b16 %v2881
        %v2928 = vunpack.c.h.b16 %v2881
        %v2929 = vunpack.c.l.b16 %v2882
        %v2930 = vunpack.c.h.b16 %v2882
        %v2931 = vpack.c.b16 %v2901, %v2899
        %v2932 = vpack.c.b16 %v2902, %v2900
        %v2933 = vpack.c.b16 %v2905, %v2903
        %v2934 = vpack.c.b16 %v2906, %v2904
        %v2935 = vpack.c.b16 %v2909, %v2907
        %v2936 = vpack.c.b16 %v2910, %v2908
        %v2937 = vpack.c.b16 %v2913, %v2911
        %v2938 = vpack.c.b16 %v2914, %v2912
        %v2939 = vpack.c.b16 %v2917, %v2915
        %v2940 = vpack.c.b16 %v2918, %v2916
        %v2941 = vpack.c.b16 %v2921, %v2919
        %v2942 = vpack.c.b16 %v2922, %v2920
        %v2943 = vpack.c.b16 %v2925, %v2923
        %v2944 = vpack.c.b16 %v2926, %v2924
        %v2945 = vpack.c.b16 %v2929, %v2927
        %v2946 = vpack.c.b16 %v2930, %v2928
        %2963 = vmatprep.subr.bf16.mxu0 %v2932
        %2964 = vmatpush1.bf16.msra.mxu0 %v2931
        %2965 = vmatprep.subr.bf16.mxu0 %v2934
        %2966 = vmatpush1.bf16.msra.mxu0 %v2933
        %2967 = vmatprep.subr.bf16.mxu0 %v2936
        %2968 = vmatpush1.bf16.msra.mxu0 %v2935
        %2969 = vmatprep.subr.bf16.mxu0 %v2938
        %2970 = vmatpush1.bf16.msra.mxu0 %v2937
        %2971 = vmatprep.subr.bf16.mxu0 %v2940
        %2972 = vmatpush1.bf16.msra.mxu0 %v2939
        %2973 = vmatprep.subr.bf16.mxu0 %v2942
        %2974 = vmatpush1.bf16.msra.mxu0 %v2941
        %2975 = vmatprep.subr.bf16.mxu0 %v2944
        %2976 = vmatpush1.bf16.msra.mxu0 %v2943
        %2977 = vmatprep.subr.bf16.mxu0 %v2946
        %2978 = vmatpush1.bf16.msra.mxu0 %v2945
        %2979 = vmatprep.subr.bf16.mxu0 0
        %2980 = vmatpush1.bf16.msra.mxu0 0
        %2981 = vmatprep.subr.bf16.mxu0 0
        %2982 = vmatpush1.bf16.msra.mxu0 0
        %2983 = vmatprep.subr.bf16.mxu0 0
        %2984 = vmatpush1.bf16.msra.mxu0 0
        %2985 = vmatprep.subr.bf16.mxu0 0
        %2986 = vmatpush1.bf16.msra.mxu0 0
        %2987 = vmatprep.subr.bf16.mxu0 0
        %2988 = vmatpush1.bf16.msra.mxu0 0
        %2989 = vmatprep.subr.bf16.mxu0 0
        %2990 = vmatpush1.bf16.msra.mxu0 0
        %2991 = vmatprep.subr.bf16.mxu0 0
        %2992 = vmatpush1.bf16.msra.mxu0 0
        %2993 = vmatprep.subr.bf16.mxu0 0
        %2994 = vmatpush1.bf16.msra.mxu0 0
        %2995 = vmatprep.mubr.bf16.mxu0 0
        %2996 = vmatmul.mubr.bf16.gmra.mrb[0].mxu0 %v2443
        %v2997 = vpop.f32.mrb[0].mxu0
        %v2998 = vpop.f32.mrb[0].mxu0
        %v2999 = vpop.f32.mrb[0].mxu0
        %v3000 = vpop.f32.mrb[0].mxu0
        %3001 = vmatprep.mubr.bf16.mxu0 0
        %3002 = vmatmul.mubr.bf16.gmra.mrb[0].mxu0 %v2444
        %v3003 = vpop.f32.mrb[0].mxu0
        %v3004 = vadd.f32 0.0, %v3003
        %v3005 = vpop.f32.mrb[0].mxu0
        %v3006 = vadd.f32 0.0, %v3005
        %v3007 = vpop.f32.mrb[0].mxu0
        %v3008 = vadd.f32 0.0, %v3007
        %v3009 = vpop.f32.mrb[0].mxu0
        %v3010 = vadd.f32 0.0, %v3009
        %3011 = vmatprep.mubr.bf16.mxu0 0
        %3012 = vmatmul.mubr.bf16.gmra.mrb[0].mxu0 %v2445
        %v3013 = vpop.f32.mrb[0].mxu0
        %v3014 = vadd.f32 0.0, %v3013
        %v3015 = vpop.f32.mrb[0].mxu0
        %v3016 = vadd.f32 0.0, %v3015
        %v3017 = vpop.f32.mrb[0].mxu0
        %v3018 = vadd.f32 0.0, %v3017
        %v3019 = vpop.f32.mrb[0].mxu0
        %v3020 = vadd.f32 0.0, %v3019
        %3021 = vmatprep.mubr.bf16.mxu0 0
        %3022 = vmatmul.mubr.bf16.gmra.mrb[0].mxu0 %v2446
        %v3023 = vpop.f32.mrb[0].mxu0
        %v3024 = vadd.f32 0.0, %v3023
        %v3025 = vpop.f32.mrb[0].mxu0
        %v3026 = vadd.f32 0.0, %v3025
        %v3027 = vpop.f32.mrb[0].mxu0
        %v3028 = vadd.f32 0.0, %v3027
        %v3029 = vpop.f32.mrb[0].mxu0
        %v3030 = vadd.f32 0.0, %v3029
        %3031 = vmatprep.mubr.bf16.mxu0 0
        %3032 = vmatmul.mubr.bf16.gmra.mrb[0].mxu0 %v2447
        %v3033 = vpop.f32.mrb[0].mxu0
        %v3034 = vadd.f32 0.0, %v3033
        %v3035 = vpop.f32.mrb[0].mxu0
        %v3036 = vadd.f32 0.0, %v3035
        %v3037 = vpop.f32.mrb[0].mxu0
        %v3038 = vadd.f32 0.0, %v3037
        %v3039 = vpop.f32.mrb[0].mxu0
        %v3040 = vadd.f32 0.0, %v3039
        %3041 = vmatprep.mubr.bf16.mxu0 0
        %3042 = vmatmul.mubr.bf16.gmra.mrb[0].mxu0 %v2448
        %v3043 = vpop.f32.mrb[0].mxu0
        %v3044 = vadd.f32 0.0, %v3043
        %v3045 = vpop.f32.mrb[0].mxu0
        %v3046 = vadd.f32 0.0, %v3045
        %v3047 = vpop.f32.mrb[0].mxu0
        %v3048 = vadd.f32 0.0, %v3047
        %v3049 = vpop.f32.mrb[0].mxu0
        %v3050 = vadd.f32 0.0, %v3049
        %3051 = vmatprep.mubr.bf16.mxu0 0
        %3052 = vmatmul.mubr.bf16.gmra.mrb[0].mxu0 %v2449
        %v3053 = vpop.f32.mrb[0].mxu0
        %v3054 = vpop.f32.mrb[0].mxu0
        %v3055 = vpop.f32.mrb[0].mxu0
        %v3056 = vpop.f32.mrb[0].mxu0
        %3057 = vmatprep.mubr.bf16.mxu0 0
        %3058 = vmatmul.mubr.bf16.gmra.mrb[0].mxu0 %v2450
        %v3059 = vpop.f32.mrb[0].mxu0
        %v3060 = vpop.f32.mrb[0].mxu0
        %v3061 = vpop.f32.mrb[0].mxu0
        %v3062 = vpop.f32.mrb[0].mxu0
        %3063 = vdwg.mxu0
        %v3064 = vadd.f32 %v2846, %v3004
        %v3065 = vadd.f32 %v2847, %v3006
        %v3066 = vadd.f32 %v2848, %v3008
        %v3067 = vadd.f32 %v2849, %v3010
        %v3068 = vadd.f32 %v2850, %v3014
        %v3069 = vadd.f32 %v2851, %v3016
        %v3070 = vadd.f32 %v2852, %v3018
        %v3071 = vadd.f32 %v2853, %v3020
        %v3072 = vadd.f32 %v2854, %v3024
        %v3073 = vadd.f32 %v2855, %v3026
        %v3074 = vadd.f32 %v2856, %v3028
        %v3075 = vadd.f32 %v2857, %v3030
        %v3076 = vadd.f32 %v2858, %v3034
        %v3077 = vadd.f32 %v2859, %v3036
        %v3078 = vadd.f32 %v2860, %v3038
        %v3079 = vadd.f32 %v2861, %v3040
        %v3080 = vadd.f32 %v2862, %v3044
        %v3081 = vadd.f32 %v2863, %v3046
        %v3082 = vadd.f32 %v2864, %v3048
        %v3083 = vadd.f32 %v2865, %v3050
        %s3084 = scalar_lea.vmem %s3, 384
        %v3085 = vld [vmem:[%s3084] sm:$0xff]
        %v3086 = vld [vmem:[%s3084 + $0x8] sm:$0xff]
        %v3087 = vld [vmem:[%s3084 + $0x10] sm:$0xff]
        %v3088 = vld [vmem:[%s3084 + $0x18] sm:$0xff]
        %v3089 = vld [vmem:[%s3084 + $0x20] sm:$0xff]
        %v3090 = vld [vmem:[%s3084 + $0x28] sm:$0xff]
        %v3091 = vld [vmem:[%s3084 + $0x30] sm:$0xff]
        %v3092 = vld [vmem:[%s3084 + $0x38] sm:$0xff]
        %v3093 = vld [vmem:[%s3084 + $0x40] sm:$0xff]
        %v3094 = vld [vmem:[%s3084 + $0x48] sm:$0xff]
        %v3095 = vld [vmem:[%s3084 + $0x50] sm:$0xff]
        %v3096 = vld [vmem:[%s3084 + $0x58] sm:$0xff]
        %v3097 = vld [vmem:[%s3084 + $0x60] sm:$0xff]
        %v3098 = vld [vmem:[%s3084 + $0x68] sm:$0xff]
        %v3099 = vld [vmem:[%s3084 + $0x70] sm:$0xff]
        %v3100 = vld [vmem:[%s3084 + $0x78] sm:$0xff]
        %v3117 = vunpack.c.l.b16 %v3085
        %v3118 = vunpack.c.h.b16 %v3085
        %v3119 = vunpack.c.l.b16 %v3086
        %v3120 = vunpack.c.h.b16 %v3086
        %v3121 = vunpack.c.l.b16 %v3087
        %v3122 = vunpack.c.h.b16 %v3087
        %v3123 = vunpack.c.l.b16 %v3088
        %v3124 = vunpack.c.h.b16 %v3088
        %v3125 = vunpack.c.l.b16 %v3089
        %v3126 = vunpack.c.h.b16 %v3089
        %v3127 = vunpack.c.l.b16 %v3090
        %v3128 = vunpack.c.h.b16 %v3090
        %v3129 = vunpack.c.l.b16 %v3091
        %v3130 = vunpack.c.h.b16 %v3091
        %v3131 = vunpack.c.l.b16 %v3092
        %v3132 = vunpack.c.h.b16 %v3092
        %v3133 = vunpack.c.l.b16 %v3093
        %v3134 = vunpack.c.h.b16 %v3093
        %v3135 = vunpack.c.l.b16 %v3094
        %v3136 = vunpack.c.h.b16 %v3094
        %v3137 = vunpack.c.l.b16 %v3095
        %v3138 = vunpack.c.h.b16 %v3095
        %v3139 = vunpack.c.l.b16 %v3096
        %v3140 = vunpack.c.h.b16 %v3096
        %v3141 = vunpack.c.l.b16 %v3097
        %v3142 = vunpack.c.h.b16 %v3097
        %v3143 = vunpack.c.l.b16 %v3098
        %v3144 = vunpack.c.h.b16 %v3098
        %v3145 = vunpack.c.l.b16 %v3099
        %v3146 = vunpack.c.h.b16 %v3099
        %v3147 = vunpack.c.l.b16 %v3100
        %v3148 = vunpack.c.h.b16 %v3100
        %v3149 = vpack.c.b16 %v3119, %v3117
        %v3150 = vpack.c.b16 %v3120, %v3118
        %v3151 = vpack.c.b16 %v3123, %v3121
        %v3152 = vpack.c.b16 %v3124, %v3122
        %v3153 = vpack.c.b16 %v3127, %v3125
        %v3154 = vpack.c.b16 %v3128, %v3126
        %v3155 = vpack.c.b16 %v3131, %v3129
        %v3156 = vpack.c.b16 %v3132, %v3130
        %v3157 = vpack.c.b16 %v3135, %v3133
        %v3158 = vpack.c.b16 %v3136, %v3134
        %v3159 = vpack.c.b16 %v3139, %v3137
        %v3160 = vpack.c.b16 %v3140, %v3138
        %v3161 = vpack.c.b16 %v3143, %v3141
        %v3162 = vpack.c.b16 %v3144, %v3142
        %v3163 = vpack.c.b16 %v3147, %v3145
        %v3164 = vpack.c.b16 %v3148, %v3146
        %3181 = vmatprep.subr.bf16.mxu0 %v3150
        %3182 = vmatpush1.bf16.msra.mxu0 %v3149
        %3183 = vmatprep.subr.bf16.mxu0 %v3152
        %3184 = vmatpush1.bf16.msra.mxu0 %v3151
        %3185 = vmatprep.subr.bf16.mxu0 %v3154
        %3186 = vmatpush1.bf16.msra.mxu0 %v3153
        %3187 = vmatprep.subr.bf16.mxu0 %v3156
        %3188 = vmatpush1.bf16.msra.mxu0 %v3155
        %3189 = vmatprep.subr.bf16.mxu0 %v3158
        %3190 = vmatpush1.bf16.msra.mxu0 %v3157
        %3191 = vmatprep.subr.bf16.mxu0 %v3160
        %3192 = vmatpush1.bf16.msra.mxu0 %v3159
        %3193 = vmatprep.subr.bf16.mxu0 %v3162
        %3194 = vmatpush1.bf16.msra.mxu0 %v3161
        %3195 = vmatprep.subr.bf16.mxu0 %v3164
        %3196 = vmatpush1.bf16.msra.mxu0 %v3163
        %3197 = vmatprep.subr.bf16.mxu0 0
        %3198 = vmatpush1.bf16.msra.mxu0 0
        %3199 = vmatprep.subr.bf16.mxu0 0
        %3200 = vmatpush1.bf16.msra.mxu0 0
        %3201 = vmatprep.subr.bf16.mxu0 0
        %3202 = vmatpush1.bf16.msra.mxu0 0
        %3203 = vmatprep.subr.bf16.mxu0 0
        %3204 = vmatpush1.bf16.msra.mxu0 0
        %3205 = vmatprep.subr.bf16.mxu0 0
        %3206 = vmatpush1.bf16.msra.mxu0 0
        %3207 = vmatprep.subr.bf16.mxu0 0
        %3208 = vmatpush1.bf16.msra.mxu0 0
        %3209 = vmatprep.subr.bf16.mxu0 0
        %3210 = vmatpush1.bf16.msra.mxu0 0
        %3211 = vmatprep.subr.bf16.mxu0 0
        %3212 = vmatpush1.bf16.msra.mxu0 0
        %3213 = vmatprep.mubr.bf16.mxu0 0
        %3214 = vmatmul.mubr.bf16.gmra.mrb[0].mxu0 %v2443
        %v3215 = vpop.f32.mrb[0].mxu0
        %v3216 = vpop.f32.mrb[0].mxu0
        %v3217 = vpop.f32.mrb[0].mxu0
        %v3218 = vpop.f32.mrb[0].mxu0
        %3219 = vmatprep.mubr.bf16.mxu0 0
        %3220 = vmatmul.mubr.bf16.gmra.mrb[0].mxu0 %v2444
        %v3221 = vpop.f32.mrb[0].mxu0
        %v3222 = vpop.f32.mrb[0].mxu0
        %v3223 = vpop.f32.mrb[0].mxu0
        %v3224 = vadd.f32 0.0, %v3223
        %v3225 = vpop.f32.mrb[0].mxu0
        %v3226 = vadd.f32 0.0, %v3225
        %3227 = vmatprep.mubr.bf16.mxu0 0
        %3228 = vmatmul.mubr.bf16.gmra.mrb[0].mxu0 %v2445
        %v3229 = vpop.f32.mrb[0].mxu0
        %v3230 = vadd.f32 0.0, %v3229
        %v3231 = vpop.f32.mrb[0].mxu0
        %v3232 = vadd.f32 0.0, %v3231
        %v3233 = vpop.f32.mrb[0].mxu0
        %v3234 = vadd.f32 0.0, %v3233
        %v3235 = vpop.f32.mrb[0].mxu0
        %v3236 = vadd.f32 0.0, %v3235
        %3237 = vmatprep.mubr.bf16.mxu0 0
        %3238 = vmatmul.mubr.bf16.gmra.mrb[0].mxu0 %v2446
        %v3239 = vpop.f32.mrb[0].mxu0
        %v3240 = vadd.f32 0.0, %v3239
        %v3241 = vpop.f32.mrb[0].mxu0
        %v3242 = vadd.f32 0.0, %v3241
        %v3243 = vpop.f32.mrb[0].mxu0
        %v3244 = vadd.f32 0.0, %v3243
        %v3245 = vpop.f32.mrb[0].mxu0
        %v3246 = vadd.f32 0.0, %v3245
        %3247 = vmatprep.mubr.bf16.mxu0 0
        %3248 = vmatmul.mubr.bf16.gmra.mrb[0].mxu0 %v2447
        %v3249 = vpop.f32.mrb[0].mxu0
        %v3250 = vadd.f32 0.0, %v3249
        %v3251 = vpop.f32.mrb[0].mxu0
        %v3252 = vadd.f32 0.0, %v3251
        %v3253 = vpop.f32.mrb[0].mxu0
        %v3254 = vadd.f32 0.0, %v3253
        %v3255 = vpop.f32.mrb[0].mxu0
        %v3256 = vadd.f32 0.0, %v3255
        %3257 = vmatprep.mubr.bf16.mxu0 0
        %3258 = vmatmul.mubr.bf16.gmra.mrb[0].mxu0 %v2448
        %v3259 = vpop.f32.mrb[0].mxu0
        %v3260 = vadd.f32 0.0, %v3259
        %v3261 = vpop.f32.mrb[0].mxu0
        %v3262 = vadd.f32 0.0, %v3261
        %v3263 = vpop.f32.mrb[0].mxu0
        %v3264 = vadd.f32 0.0, %v3263
        %v3265 = vpop.f32.mrb[0].mxu0
        %v3266 = vadd.f32 0.0, %v3265
        %3267 = vmatprep.mubr.bf16.mxu0 0
        %3268 = vmatmul.mubr.bf16.gmra.mrb[0].mxu0 %v2449
        %v3269 = vpop.f32.mrb[0].mxu0
        %v3270 = vadd.f32 0.0, %v3269
        %v3271 = vpop.f32.mrb[0].mxu0
        %v3272 = vadd.f32 0.0, %v3271
        %v3273 = vpop.f32.mrb[0].mxu0
        %v3274 = vpop.f32.mrb[0].mxu0
        %3275 = vmatprep.mubr.bf16.mxu0 0
        %3276 = vmatmul.mubr.bf16.gmra.mrb[0].mxu0 %v2450
        %v3277 = vpop.f32.mrb[0].mxu0
        %v3278 = vpop.f32.mrb[0].mxu0
        %v3279 = vpop.f32.mrb[0].mxu0
        %v3280 = vpop.f32.mrb[0].mxu0
        %3281 = vdwg.mxu0
        %v3282 = vadd.f32 %v3064, %v3224
        %v3283 = vadd.f32 %v3065, %v3226
        %v3284 = vadd.f32 %v3066, %v3230
        %v3285 = vadd.f32 %v3067, %v3232
        %v3286 = vadd.f32 %v3068, %v3234
        %v3287 = vadd.f32 %v3069, %v3236
        %v3288 = vadd.f32 %v3070, %v3240
        %v3289 = vadd.f32 %v3071, %v3242
        %v3290 = vadd.f32 %v3072, %v3244
        %v3291 = vadd.f32 %v3073, %v3246
        %v3292 = vadd.f32 %v3074, %v3250
        %v3293 = vadd.f32 %v3075, %v3252
        %v3294 = vadd.f32 %v3076, %v3254
        %v3295 = vadd.f32 %v3077, %v3256
        %v3296 = vadd.f32 %v3078, %v3260
        %v3297 = vadd.f32 %v3079, %v3262
        %v3298 = vadd.f32 %v3080, %v3264
        %v3299 = vadd.f32 %v3081, %v3266
        %v3300 = vadd.f32 %v3082, %v3270
        %v3301 = vadd.f32 %v3083, %v3272
        %s3302 = scalar_lea.vmem %s3, 512
        %v3303 = vld [vmem:[%s3302] sm:$0xff]
        %v3304 = vld [vmem:[%s3302 + $0x8] sm:$0xff]
        %v3305 = vld [vmem:[%s3302 + $0x10] sm:$0xff]
        %v3306 = vld [vmem:[%s3302 + $0x18] sm:$0xff]
        %v3307 = vld [vmem:[%s3302 + $0x20] sm:$0xff]
        %v3308 = vld [vmem:[%s3302 + $0x28] sm:$0xff]
        %v3309 = vld [vmem:[%s3302 + $0x30] sm:$0xff]
        %v3310 = vld [vmem:[%s3302 + $0x38] sm:$0xff]
        %v3311 = vld [vmem:[%s3302 + $0x40] sm:$0xff]
        %v3312 = vld [vmem:[%s3302 + $0x48] sm:$0xff]
        %v3313 = vld [vmem:[%s3302 + $0x50] sm:$0xff]
        %v3314 = vld [vmem:[%s3302 + $0x58] sm:$0xff]
        %v3315 = vld [vmem:[%s3302 + $0x60] sm:$0xff]
        %v3316 = vld [vmem:[%s3302 + $0x68] sm:$0xff]
        %v3317 = vld [vmem:[%s3302 + $0x70] sm:$0xff]
        %v3318 = vld [vmem:[%s3302 + $0x78] sm:$0xff]
        %v3335 = vunpack.c.l.b16 %v3303
        %v3336 = vunpack.c.h.b16 %v3303
        %v3337 = vunpack.c.l.b16 %v3304
        %v3338 = vunpack.c.h.b16 %v3304
        %v3339 = vunpack.c.l.b16 %v3305
        %v3340 = vunpack.c.h.b16 %v3305
        %v3341 = vunpack.c.l.b16 %v3306
        %v3342 = vunpack.c.h.b16 %v3306
        %v3343 = vunpack.c.l.b16 %v3307
        %v3344 = vunpack.c.h.b16 %v3307
        %v3345 = vunpack.c.l.b16 %v3308
        %v3346 = vunpack.c.h.b16 %v3308
        %v3347 = vunpack.c.l.b16 %v3309
        %v3348 = vunpack.c.h.b16 %v3309
        %v3349 = vunpack.c.l.b16 %v3310
        %v3350 = vunpack.c.h.b16 %v3310
        %v3351 = vunpack.c.l.b16 %v3311
        %v3352 = vunpack.c.h.b16 %v3311
        %v3353 = vunpack.c.l.b16 %v3312
        %v3354 = vunpack.c.h.b16 %v3312
        %v3355 = vunpack.c.l.b16 %v3313
        %v3356 = vunpack.c.h.b16 %v3313
        %v3357 = vunpack.c.l.b16 %v3314
        %v3358 = vunpack.c.h.b16 %v3314
        %v3359 = vunpack.c.l.b16 %v3315
        %v3360 = vunpack.c.h.b16 %v3315
        %v3361 = vunpack.c.l.b16 %v3316
        %v3362 = vunpack.c.h.b16 %v3316
        %v3363 = vunpack.c.l.b16 %v3317
        %v3364 = vunpack.c.h.b16 %v3317
        %v3365 = vunpack.c.l.b16 %v3318
        %v3366 = vunpack.c.h.b16 %v3318
        %v3367 = vpack.c.b16 %v3337, %v3335
        %v3368 = vpack.c.b16 %v3338, %v3336
        %v3369 = vpack.c.b16 %v3341, %v3339
        %v3370 = vpack.c.b16 %v3342, %v3340
        %v3371 = vpack.c.b16 %v3345, %v3343
        %v3372 = vpack.c.b16 %v3346, %v3344
        %v3373 = vpack.c.b16 %v3349, %v3347
        %v3374 = vpack.c.b16 %v3350, %v3348
        %v3375 = vpack.c.b16 %v3353, %v3351
        %v3376 = vpack.c.b16 %v3354, %v3352
        %v3377 = vpack.c.b16 %v3357, %v3355
        %v3378 = vpack.c.b16 %v3358, %v3356
        %v3379 = vpack.c.b16 %v3361, %v3359
        %v3380 = vpack.c.b16 %v3362, %v3360
        %v3381 = vpack.c.b16 %v3365, %v3363
        %v3382 = vpack.c.b16 %v3366, %v3364
        %3399 = vmatprep.subr.bf16.mxu0 %v3368
        %3400 = vmatpush1.bf16.msra.mxu0 %v3367
        %3401 = vmatprep.subr.bf16.mxu0 %v3370
        %3402 = vmatpush1.bf16.msra.mxu0 %v3369
        %3403 = vmatprep.subr.bf16.mxu0 %v3372
        %3404 = vmatpush1.bf16.msra.mxu0 %v3371
        %3405 = vmatprep.subr.bf16.mxu0 %v3374
        %3406 = vmatpush1.bf16.msra.mxu0 %v3373
        %3407 = vmatprep.subr.bf16.mxu0 %v3376
        %3408 = vmatpush1.bf16.msra.mxu0 %v3375
        %3409 = vmatprep.subr.bf16.mxu0 %v3378
        %3410 = vmatpush1.bf16.msra.mxu0 %v3377
        %3411 = vmatprep.subr.bf16.mxu0 %v3380
        %3412 = vmatpush1.bf16.msra.mxu0 %v3379
        %3413 = vmatprep.subr.bf16.mxu0 %v3382
        %3414 = vmatpush1.bf16.msra.mxu0 %v3381
        %3415 = vmatprep.subr.bf16.mxu0 0
        %3416 = vmatpush1.bf16.msra.mxu0 0
        %3417 = vmatprep.subr.bf16.mxu0 0
        %3418 = vmatpush1.bf16.msra.mxu0 0
        %3419 = vmatprep.subr.bf16.mxu0 0
        %3420 = vmatpush1.bf16.msra.mxu0 0
        %3421 = vmatprep.subr.bf16.mxu0 0
        %3422 = vmatpush1.bf16.msra.mxu0 0
        %3423 = vmatprep.subr.bf16.mxu0 0
        %3424 = vmatpush1.bf16.msra.mxu0 0
        %3425 = vmatprep.subr.bf16.mxu0 0
        %3426 = vmatpush1.bf16.msra.mxu0 0
        %3427 = vmatprep.subr.bf16.mxu0 0
        %3428 = vmatpush1.bf16.msra.mxu0 0
        %3429 = vmatprep.subr.bf16.mxu0 0
        %3430 = vmatpush1.bf16.msra.mxu0 0
        %3431 = vmatprep.mubr.bf16.mxu0 0
        %3432 = vmatmul.mubr.bf16.gmra.mrb[0].mxu0 %v2443
        %v3433 = vpop.f32.mrb[0].mxu0
        %v3434 = vpop.f32.mrb[0].mxu0
        %v3435 = vpop.f32.mrb[0].mxu0
        %v3436 = vpop.f32.mrb[0].mxu0
        %3437 = vmatprep.mubr.bf16.mxu0 0
        %3438 = vmatmul.mubr.bf16.gmra.mrb[0].mxu0 %v2444
        %v3439 = vpop.f32.mrb[0].mxu0
        %v3440 = vpop.f32.mrb[0].mxu0
        %v3441 = vpop.f32.mrb[0].mxu0
        %v3442 = vpop.f32.mrb[0].mxu0
        %3443 = vmatprep.mubr.bf16.mxu0 0
        %3444 = vmatmul.mubr.bf16.gmra.mrb[0].mxu0 %v2445
        %v3445 = vpop.f32.mrb[0].mxu0
        %v3446 = vadd.f32 0.0, %v3445
        %v3447 = vpop.f32.mrb[0].mxu0
        %v3448 = vadd.f32 0.0, %v3447
        %v3449 = vpop.f32.mrb[0].mxu0
        %v3450 = vadd.f32 0.0, %v3449
        %v3451 = vpop.f32.mrb[0].mxu0
        %v3452 = vadd.f32 0.0, %v3451
        %3453 = vmatprep.mubr.bf16.mxu0 0
        %3454 = vmatmul.mubr.bf16.gmra.mrb[0].mxu0 %v2446
        %v3455 = vpop.f32.mrb[0].mxu0
        %v3456 = vadd.f32 0.0, %v3455
        %v3457 = vpop.f32.mrb[0].mxu0
        %v3458 = vadd.f32 0.0, %v3457
        %v3459 = vpop.f32.mrb[0].mxu0
        %v3460 = vadd.f32 0.0, %v3459
        %v3461 = vpop.f32.mrb[0].mxu0
        %v3462 = vadd.f32 0.0, %v3461
        %3463 = vmatprep.mubr.bf16.mxu0 0
        %3464 = vmatmul.mubr.bf16.gmra.mrb[0].mxu0 %v2447
        %v3465 = vpop.f32.mrb[0].mxu0
        %v3466 = vadd.f32 0.0, %v3465
        %v3467 = vpop.f32.mrb[0].mxu0
        %v3468 = vadd.f32 0.0, %v3467
        %v3469 = vpop.f32.mrb[0].mxu0
        %v3470 = vadd.f32 0.0, %v3469
        %v3471 = vpop.f32.mrb[0].mxu0
        %v3472 = vadd.f32 0.0, %v3471
        %3473 = vmatprep.mubr.bf16.mxu0 0
        %3474 = vmatmul.mubr.bf16.gmra.mrb[0].mxu0 %v2448
        %v3475 = vpop.f32.mrb[0].mxu0
        %v3476 = vadd.f32 0.0, %v3475
        %v3477 = vpop.f32.mrb[0].mxu0
        %v3478 = vadd.f32 0.0, %v3477
        %v3479 = vpop.f32.mrb[0].mxu0
        %v3480 = vadd.f32 0.0, %v3479
        %v3481 = vpop.f32.mrb[0].mxu0
        %v3482 = vadd.f32 0.0, %v3481
        %3483 = vmatprep.mubr.bf16.mxu0 0
        %3484 = vmatmul.mubr.bf16.gmra.mrb[0].mxu0 %v2449
        %v3485 = vpop.f32.mrb[0].mxu0
        %v3486 = vadd.f32 0.0, %v3485
        %v3487 = vpop.f32.mrb[0].mxu0
        %v3488 = vadd.f32 0.0, %v3487
        %v3489 = vpop.f32.mrb[0].mxu0
        %v3490 = vadd.f32 0.0, %v3489
        %v3491 = vpop.f32.mrb[0].mxu0
        %v3492 = vadd.f32 0.0, %v3491
        %3493 = vmatprep.mubr.bf16.mxu0 0
        %3494 = vmatmul.mubr.bf16.gmra.mrb[0].mxu0 %v2450
        %v3495 = vpop.f32.mrb[0].mxu0
        %v3496 = vpop.f32.mrb[0].mxu0
        %v3497 = vpop.f32.mrb[0].mxu0
        %v3498 = vpop.f32.mrb[0].mxu0
        %3499 = vdwg.mxu0
        %v3500 = vadd.f32 %v3282, %v3446
        %v3501 = vadd.f32 %v3283, %v3448
        %v3502 = vadd.f32 %v3284, %v3450
        %v3503 = vadd.f32 %v3285, %v3452
        %v3504 = vadd.f32 %v3286, %v3456
        %v3505 = vadd.f32 %v3287, %v3458
        %v3506 = vadd.f32 %v3288, %v3460
        %v3507 = vadd.f32 %v3289, %v3462
        %v3508 = vadd.f32 %v3290, %v3466
        %v3509 = vadd.f32 %v3291, %v3468
        %v3510 = vadd.f32 %v3292, %v3470
        %v3511 = vadd.f32 %v3293, %v3472
        %v3512 = vadd.f32 %v3294, %v3476
        %v3513 = vadd.f32 %v3295, %v3478
        %v3514 = vadd.f32 %v3296, %v3480
        %v3515 = vadd.f32 %v3297, %v3482
        %v3516 = vadd.f32 %v3298, %v3486
        %v3517 = vadd.f32 %v3299, %v3488
        %v3518 = vadd.f32 %v3300, %v3490
        %v3519 = vadd.f32 %v3301, %v3492
        %v3520 = vld [vmem:[%s4] sm:$0x3]
        %v3522 = vlaneseq
        %v3523 = vshrl.u32 %v3522, 7
        %v3524 = vsub.s32 0, %v3523
        %v3525 = vrot.slane %v3520, %v3524
        %v3526 = vlaneseq
        %v3527 = vshrl.u32 %v3526, 7
        %v3528 = vsub.s32 1, %v3527
        %v3529 = vrot.slane %v3520, %v3528
        %v3532 = vadd.f32 %v3500, %v3525
        %v3533 = vadd.f32 %v3501, %v3529
        %v3534 = vadd.f32 %v3502, %v3525
        %v3535 = vadd.f32 %v3503, %v3529
        %v3536 = vadd.f32 %v3504, %v3525
        %v3537 = vadd.f32 %v3505, %v3529
        %v3538 = vadd.f32 %v3506, %v3525
        %v3539 = vadd.f32 %v3507, %v3529
        %v3540 = vadd.f32 %v3508, %v3525
        %v3541 = vadd.f32 %v3509, %v3529
        %v3542 = vadd.f32 %v3510, %v3525
        %v3543 = vadd.f32 %v3511, %v3529
        %v3544 = vadd.f32 %v3512, %v3525
        %v3545 = vadd.f32 %v3513, %v3529
        %v3546 = vadd.f32 %v3514, %v3525
        %v3547 = vadd.f32 %v3515, %v3529
        %v3548 = vadd.f32 %v3516, %v3525
        %v3549 = vadd.f32 %v3517, %v3529
        %v3550 = vadd.f32 %v3518, %v3525
        %v3551 = vadd.f32 %v3519, %v3529
        %v3552 = vmax.f32 %v3532, 0.0
        %v3553 = vmax.f32 %v3533, 0.0
        %v3554 = vmax.f32 %v3534, 0.0
        %v3555 = vmax.f32 %v3535, 0.0
        %v3556 = vmax.f32 %v3536, 0.0
        %v3557 = vmax.f32 %v3537, 0.0
        %v3558 = vmax.f32 %v3538, 0.0
        %v3559 = vmax.f32 %v3539, 0.0
        %v3560 = vmax.f32 %v3540, 0.0
        %v3561 = vmax.f32 %v3541, 0.0
        %v3562 = vmax.f32 %v3542, 0.0
        %v3563 = vmax.f32 %v3543, 0.0
        %v3564 = vmax.f32 %v3544, 0.0
        %v3565 = vmax.f32 %v3545, 0.0
        %v3566 = vmax.f32 %v3546, 0.0
        %v3567 = vmax.f32 %v3547, 0.0
        %v3568 = vmax.f32 %v3548, 0.0
        %v3569 = vmax.f32 %v3549, 0.0
        %v3570 = vmax.f32 %v3550, 0.0
        %v3571 = vmax.f32 %v3551, 0.0
        %v3572 = vmax.f32 %v3552, %v3553
        %v3573 = vmax.f32 %v3554, %v3555
        %v3574 = vmax.f32 %v3556, %v3557
        %v3575 = vmax.f32 %v3558, %v3559
        %v3576 = vmax.f32 %v3560, %v3561
        %v3577 = vmax.f32 %v3562, %v3563
        %v3578 = vmax.f32 %v3564, %v3565
        %v3579 = vmax.f32 %v3566, %v3567
        %v3580 = vmax.f32 %v3568, %v3569
        %v3581 = vmax.f32 %v3570, %v3571
        %3582 = vst [vmem:[#allocation4] sm:$0xff] %v3572
        %3583 = vst [vmem:[#allocation4 + $0x8] sm:$0xff] %v3573
        %3584 = vst [vmem:[#allocation4 + $0x10] sm:$0xff] %v3574
        %3585 = vst [vmem:[#allocation4 + $0x18] sm:$0xff] %v3575
        %3586 = vst [vmem:[#allocation4 + $0x20] sm:$0xff] %v3576
        %3587 = vst [vmem:[#allocation4 + $0x28] sm:$0xff] %v3577
        %3588 = vst [vmem:[#allocation4 + $0x30] sm:$0xff] %v3578
        %3589 = vst [vmem:[#allocation4 + $0x38] sm:$0xff] %v3579
        %3590 = vst [vmem:[#allocation4 + $0x40] sm:$0xff] %v3580
        %3591 = vst [vmem:[#allocation4 + $0x48] sm:$0xff] %v3581
        %v3592 = vld [vmem:[#allocation4] sm:$0xff]
        %s3593 = scalar_lea.vmem [#allocation4], 8
        %v3594 = vld [vmem:[%s3593] sm:$0xff]
        %v3595 = vmax.f32 %v3592, %v3594
        %3596 = vst [vmem:[#allocation5] sm:$0xff] %v3595
        %s3597 = scalar_lea.vmem [#allocation4], 16
        %v3598 = vld [vmem:[%s3597] sm:$0xff]
        %s3599 = scalar_lea.vmem [#allocation4], 24
        %v3600 = vld [vmem:[%s3599] sm:$0xff]
        %v3601 = vmax.f32 %v3598, %v3600
        %3602 = vst [vmem:[#allocation5 + $0x8] sm:$0xff] %v3601
        %s3603 = scalar_lea.vmem [#allocation4], 32
        %v3604 = vld [vmem:[%s3603] sm:$0xff]
        %s3605 = scalar_lea.vmem [#allocation4], 40
        %v3606 = vld [vmem:[%s3605] sm:$0xff]
        %v3607 = vmax.f32 %v3604, %v3606
        %3608 = vst [vmem:[#allocation5 + $0x10] sm:$0xff] %v3607
        %s3609 = scalar_lea.vmem [#allocation4], 48
        %v3610 = vld [vmem:[%s3609] sm:$0xff]
        %s3611 = scalar_lea.vmem [#allocation4], 56
        %v3612 = vld [vmem:[%s3611] sm:$0xff]
        %v3613 = vmax.f32 %v3610, %v3612
        %3614 = vst [vmem:[#allocation5 + $0x18] sm:$0xff] %v3613
        %s3615 = scalar_lea.vmem [#allocation4], 64
        %v3616 = vld [vmem:[%s3615] sm:$0xff]
        %s3617 = scalar_lea.vmem [#allocation4], 72
        %v3618 = vld [vmem:[%s3617] sm:$0xff]
        %v3619 = vmax.f32 %v3616, %v3618
        %3620 = vst [vmem:[#allocation5 + $0x20] sm:$0xff] %v3619
        %v3621 = vld [vmem:[#allocation5] sm:$0xff]
        %v3622 = vld [vmem:[#allocation5 + $0x8] sm:$0xff]
        %v3623 = vld [vmem:[#allocation5 + $0x10] sm:$0xff]
        %v3624 = vld [vmem:[#allocation5 + $0x18] sm:$0xff]
        %v3625 = vld [vmem:[#allocation5 + $0x20] sm:$0xff]
        %v3626 = vpack.c.bf16 %v3621, %v3621
        %v3627 = vpack.c.bf16 %v3622, %v3622
        %v3628 = vpack.c.bf16 %v3623, %v3623
        %v3629 = vpack.c.bf16 %v3624, %v3624
        %v3630 = vpack.c.bf16 %v3625, %v3625
        %v3631 = vld [vmem:[%s5] sm:$0xf]
        %v3632 = vld [vmem:[%s5 + $0x4] sm:$0xf]
        %v3633 = vld [vmem:[%s5 + $0x8] sm:$0xf]
        %v3634 = vld [vmem:[%s5 + $0xc] sm:$0xf]
        %v3635 = vld [vmem:[%s5 + $0x10] sm:$0xf]
        %v3636 = vld [vmem:[%s5 + $0x14] sm:$0xf]
        %v3637 = vld [vmem:[%s5 + $0x18] sm:$0xf]
        %v3638 = vld [vmem:[%s5 + $0x1c] sm:$0xf]
        %v3639 = vld [vmem:[%s5 + $0x20] sm:$0xf]
        %v3640 = vld [vmem:[%s5 + $0x24] sm:$0xf]
        %v3641 = vld [vmem:[%s5 + $0x28] sm:$0xf]
        %v3642 = vld [vmem:[%s5 + $0x2c] sm:$0xf]
        %v3643 = vld [vmem:[%s5 + $0x30] sm:$0xf]
        %v3644 = vld [vmem:[%s5 + $0x34] sm:$0xf]
        %v3645 = vld [vmem:[%s5 + $0x38] sm:$0xf]
        %v3646 = vld [vmem:[%s5 + $0x3c] sm:$0xf]
        %v3647 = vld [vmem:[%s5 + $0x40] sm:$0xf]
        %v3648 = vld [vmem:[%s5 + $0x44] sm:$0xf]
        %v3649 = vld [vmem:[%s5 + $0x48] sm:$0xf]
        %v3650 = vld [vmem:[%s5 + $0x4c] sm:$0xf]
        %v3651 = vld [vmem:[%s5 + $0x50] sm:$0xf]
        %v3652 = vld [vmem:[%s5 + $0x54] sm:$0xf]
        %v3653 = vld [vmem:[%s5 + $0x58] sm:$0xf]
        %v3654 = vld [vmem:[%s5 + $0x5c] sm:$0xf]
        %v3655 = vld [vmem:[%s5 + $0x60] sm:$0xf]
        %v3656 = vld [vmem:[%s5 + $0x64] sm:$0xf]
        %v3657 = vld [vmem:[%s5 + $0x68] sm:$0xf]
        %v3658 = vld [vmem:[%s5 + $0x6c] sm:$0xf]
        %v3659 = vld [vmem:[%s5 + $0x70] sm:$0xf]
        %v3660 = vld [vmem:[%s5 + $0x74] sm:$0xf]
        %v3661 = vld [vmem:[%s5 + $0x78] sm:$0xf]
        %v3662 = vld [vmem:[%s5 + $0x7c] sm:$0xf]
        %v3663 = vld [vmem:[%s5 + $0x80] sm:$0xf]
        %v3664 = vld [vmem:[%s5 + $0x84] sm:$0xf]
        %v3665 = vld [vmem:[%s5 + $0x88] sm:$0xf]
        %v3666 = vld [vmem:[%s5 + $0x8c] sm:$0xf]
        %v3667 = vld [vmem:[%s5 + $0x90] sm:$0xf]
        %v3668 = vld [vmem:[%s5 + $0x94] sm:$0xf]
        %v3669 = vld [vmem:[%s5 + $0x98] sm:$0xf]
        %v3670 = vld [vmem:[%s5 + $0x9c] sm:$0xf]
        %v3671 = vld [vmem:[%s5 + $0xa0] sm:$0xf]
        %v3672 = vld [vmem:[%s5 + $0xa4] sm:$0xf]
        %v3673 = vld [vmem:[%s5 + $0xa8] sm:$0xf]
        %v3674 = vld [vmem:[%s5 + $0xac] sm:$0xf]
        %v3675 = vld [vmem:[%s5 + $0xb0] sm:$0xf]
        %v3676 = vld [vmem:[%s5 + $0xb4] sm:$0xf]
        %v3677 = vld [vmem:[%s5 + $0xb8] sm:$0xf]
        %v3678 = vld [vmem:[%s5 + $0xbc] sm:$0xf]
        %v3679 = vld [vmem:[%s5 + $0xc0] sm:$0xf]
        %v3680 = vld [vmem:[%s5 + $0xc4] sm:$0xf]
        %v3681 = vld [vmem:[%s5 + $0xc8] sm:$0xf]
        %v3682 = vld [vmem:[%s5 + $0xcc] sm:$0xf]
        %v3683 = vld [vmem:[%s5 + $0xd0] sm:$0xf]
        %v3684 = vld [vmem:[%s5 + $0xd4] sm:$0xf]
        %v3685 = vld [vmem:[%s5 + $0xd8] sm:$0xf]
        %v3686 = vld [vmem:[%s5 + $0xdc] sm:$0xf]
        %v3687 = vld [vmem:[%s5 + $0xe0] sm:$0xf]
        %v3688 = vld [vmem:[%s5 + $0xe4] sm:$0xf]
        %v3689 = vld [vmem:[%s5 + $0xe8] sm:$0xf]
        %v3690 = vld [vmem:[%s5 + $0xec] sm:$0xf]
        %v3691 = vld [vmem:[%s5 + $0xf0] sm:$0xf]
        %v3692 = vld [vmem:[%s5 + $0xf4] sm:$0xf]
        %v3693 = vld [vmem:[%s5 + $0xf8] sm:$0xf]
        %v3694 = vld [vmem:[%s5 + $0xfc] sm:$0xf]
        %v3695 = vld [vmem:[%s5 + $0x100] sm:$0xf]
        %v3696 = vld [vmem:[%s5 + $0x104] sm:$0xf]
        %v3697 = vld [vmem:[%s5 + $0x108] sm:$0xf]
        %v3698 = vld [vmem:[%s5 + $0x10c] sm:$0xf]
        %v3699 = vld [vmem:[%s5 + $0x110] sm:$0xf]
        %v3700 = vld [vmem:[%s5 + $0x114] sm:$0xf]
        %v3701 = vld [vmem:[%s5 + $0x118] sm:$0xf]
        %v3702 = vld [vmem:[%s5 + $0x11c] sm:$0xf]
        %v3703 = vld [vmem:[%s5 + $0x120] sm:$0xf]
        %v3704 = vld [vmem:[%s5 + $0x124] sm:$0xf]
        %v3705 = vld [vmem:[%s5 + $0x128] sm:$0xf]
        %v3706 = vld [vmem:[%s5 + $0x12c] sm:$0xf]
        %v3707 = vld [vmem:[%s5 + $0x130] sm:$0xf]
        %v3708 = vld [vmem:[%s5 + $0x134] sm:$0xf]
        %v3709 = vld [vmem:[%s5 + $0x138] sm:$0xf]
        %v3710 = vld [vmem:[%s5 + $0x13c] sm:$0xf]
        %v3711 = vld [vmem:[%s6] sm:$0x1]
        %v3713 = vlaneseq
        %v3714 = vshrl.u32 %v3713, 7
        %v3715 = vsub.s32 0, %v3714
        %v3716 = vrot.slane %v3711, %v3715
        %v3798 = vunpack.c.l.b16 %v3631
        %v3799 = vunpack.c.l.b16 %v3632
        %v3800 = vunpack.c.l.b16 %v3633
        %v3801 = vunpack.c.l.b16 %v3634
        %v3802 = vunpack.c.l.b16 %v3635
        %v3803 = vunpack.c.l.b16 %v3636
        %v3804 = vunpack.c.l.b16 %v3637
        %v3805 = vunpack.c.l.b16 %v3638
        %v3806 = vunpack.c.l.b16 %v3639
        %v3807 = vunpack.c.l.b16 %v3640
        %v3808 = vunpack.c.l.b16 %v3641
        %v3809 = vunpack.c.l.b16 %v3642
        %v3810 = vunpack.c.l.b16 %v3643
        %v3811 = vunpack.c.l.b16 %v3644
        %v3812 = vunpack.c.l.b16 %v3645
        %v3813 = vunpack.c.l.b16 %v3646
        %v3814 = vunpack.c.l.b16 %v3647
        %v3815 = vunpack.c.l.b16 %v3648
        %v3816 = vunpack.c.l.b16 %v3649
        %v3817 = vunpack.c.l.b16 %v3650
        %v3818 = vunpack.c.l.b16 %v3651
        %v3819 = vunpack.c.l.b16 %v3652
        %v3820 = vunpack.c.l.b16 %v3653
        %v3821 = vunpack.c.l.b16 %v3654
        %v3822 = vunpack.c.l.b16 %v3655
        %v3823 = vunpack.c.l.b16 %v3656
        %v3824 = vunpack.c.l.b16 %v3657
        %v3825 = vunpack.c.l.b16 %v3658
        %v3826 = vunpack.c.l.b16 %v3659
        %v3827 = vunpack.c.l.b16 %v3660
        %v3828 = vunpack.c.l.b16 %v3661
        %v3829 = vunpack.c.l.b16 %v3662
        %v3830 = vunpack.c.l.b16 %v3663
        %v3831 = vunpack.c.l.b16 %v3664
        %v3832 = vunpack.c.l.b16 %v3665
        %v3833 = vunpack.c.l.b16 %v3666
        %v3834 = vunpack.c.l.b16 %v3667
        %v3835 = vunpack.c.l.b16 %v3668
        %v3836 = vunpack.c.l.b16 %v3669
        %v3837 = vunpack.c.l.b16 %v3670
        %v3838 = vunpack.c.l.b16 %v3671
        %v3839 = vunpack.c.l.b16 %v3672
        %v3840 = vunpack.c.l.b16 %v3673
        %v3841 = vunpack.c.l.b16 %v3674
        %v3842 = vunpack.c.l.b16 %v3675
        %v3843 = vunpack.c.l.b16 %v3676
        %v3844 = vunpack.c.l.b16 %v3677
        %v3845 = vunpack.c.l.b16 %v3678
        %v3846 = vunpack.c.l.b16 %v3679
        %v3847 = vunpack.c.l.b16 %v3680
        %v3848 = vunpack.c.l.b16 %v3681
        %v3849 = vunpack.c.l.b16 %v3682
        %v3850 = vunpack.c.l.b16 %v3683
        %v3851 = vunpack.c.l.b16 %v3684
        %v3852 = vunpack.c.l.b16 %v3685
        %v3853 = vunpack.c.l.b16 %v3686
        %v3854 = vunpack.c.l.b16 %v3687
        %v3855 = vunpack.c.l.b16 %v3688
        %v3856 = vunpack.c.l.b16 %v3689
        %v3857 = vunpack.c.l.b16 %v3690
        %v3858 = vunpack.c.l.b16 %v3691
        %v3859 = vunpack.c.l.b16 %v3692
        %v3860 = vunpack.c.l.b16 %v3693
        %v3861 = vunpack.c.l.b16 %v3694
        %v3862 = vunpack.c.l.b16 %v3695
        %v3863 = vunpack.c.l.b16 %v3696
        %v3864 = vunpack.c.l.b16 %v3697
        %v3865 = vunpack.c.l.b16 %v3698
        %v3866 = vunpack.c.l.b16 %v3699
        %v3867 = vunpack.c.l.b16 %v3700
        %v3868 = vunpack.c.l.b16 %v3701
        %v3869 = vunpack.c.l.b16 %v3702
        %v3870 = vunpack.c.l.b16 %v3703
        %v3871 = vunpack.c.l.b16 %v3704
        %v3872 = vunpack.c.l.b16 %v3705
        %v3873 = vunpack.c.l.b16 %v3706
        %v3874 = vunpack.c.l.b16 %v3707
        %v3875 = vunpack.c.l.b16 %v3708
        %v3876 = vunpack.c.l.b16 %v3709
        %v3877 = vunpack.c.l.b16 %v3710
        %v3878 = vpack.c.b16 %v3799, %v3798
        %v3879 = vpack.c.b16 %v3801, %v3800
        %v3880 = vpack.c.b16 %v3803, %v3802
        %v3881 = vpack.c.b16 %v3805, %v3804
        %v3882 = vpack.c.b16 %v3807, %v3806
        %v3883 = vpack.c.b16 %v3809, %v3808
        %v3884 = vpack.c.b16 %v3811, %v3810
        %v3885 = vpack.c.b16 %v3813, %v3812
        %v3886 = vpack.c.b16 %v3815, %v3814
        %v3887 = vpack.c.b16 %v3817, %v3816
        %v3888 = vpack.c.b16 %v3819, %v3818
        %v3889 = vpack.c.b16 %v3821, %v3820
        %v3890 = vpack.c.b16 %v3823, %v3822
        %v3891 = vpack.c.b16 %v3825, %v3824
        %v3892 = vpack.c.b16 %v3827, %v3826
        %v3893 = vpack.c.b16 %v3829, %v3828
        %v3894 = vpack.c.b16 %v3831, %v3830
        %v3895 = vpack.c.b16 %v3833, %v3832
        %v3896 = vpack.c.b16 %v3835, %v3834
        %v3897 = vpack.c.b16 %v3837, %v3836
        %v3898 = vpack.c.b16 %v3839, %v3838
        %v3899 = vpack.c.b16 %v3841, %v3840
        %v3900 = vpack.c.b16 %v3843, %v3842
        %v3901 = vpack.c.b16 %v3845, %v3844
        %v3902 = vpack.c.b16 %v3847, %v3846
        %v3903 = vpack.c.b16 %v3849, %v3848
        %v3904 = vpack.c.b16 %v3851, %v3850
        %v3905 = vpack.c.b16 %v3853, %v3852
        %v3906 = vpack.c.b16 %v3855, %v3854
        %v3907 = vpack.c.b16 %v3857, %v3856
        %v3908 = vpack.c.b16 %v3859, %v3858
        %v3909 = vpack.c.b16 %v3861, %v3860
        %v3910 = vpack.c.b16 %v3863, %v3862
        %v3911 = vpack.c.b16 %v3865, %v3864
        %v3912 = vpack.c.b16 %v3867, %v3866
        %v3913 = vpack.c.b16 %v3869, %v3868
        %v3914 = vpack.c.b16 %v3871, %v3870
        %v3915 = vpack.c.b16 %v3873, %v3872
        %v3916 = vpack.c.b16 %v3875, %v3874
        %v3917 = vpack.c.b16 %v3877, %v3876
        %3958 = vmatprep.subr.bf16.mxu0 0
        %3959 = vmatpush1.bf16.msra.mxu0 %v3878
        %3960 = vmatprep.subr.bf16.mxu0 0
        %3961 = vmatpush1.bf16.msra.mxu0 %v3879
        %3962 = vmatprep.subr.bf16.mxu0 0
        %3963 = vmatpush1.bf16.msra.mxu0 %v3880
        %3964 = vmatprep.subr.bf16.mxu0 0
        %3965 = vmatpush1.bf16.msra.mxu0 %v3881
        %3966 = vmatprep.subr.bf16.mxu0 0
        %3967 = vmatpush1.bf16.msra.mxu0 %v3882
        %3968 = vmatprep.subr.bf16.mxu0 0
        %3969 = vmatpush1.bf16.msra.mxu0 %v3883
        %3970 = vmatprep.subr.bf16.mxu0 0
        %3971 = vmatpush1.bf16.msra.mxu0 %v3884
        %3972 = vmatprep.subr.bf16.mxu0 0
        %3973 = vmatpush1.bf16.msra.mxu0 %v3885
        %3974 = vmatprep.subr.bf16.mxu0 0
        %3975 = vmatpush1.bf16.msra.mxu0 %v3886
        %3976 = vmatprep.subr.bf16.mxu0 0
        %3977 = vmatpush1.bf16.msra.mxu0 %v3887
        %3978 = vmatprep.subr.bf16.mxu0 0
        %3979 = vmatpush1.bf16.msra.mxu0 %v3888
        %3980 = vmatprep.subr.bf16.mxu0 0
        %3981 = vmatpush1.bf16.msra.mxu0 %v3889
        %3982 = vmatprep.subr.bf16.mxu0 0
        %3983 = vmatpush1.bf16.msra.mxu0 %v3890
        %3984 = vmatprep.subr.bf16.mxu0 0
        %3985 = vmatpush1.bf16.msra.mxu0 %v3891
        %3986 = vmatprep.subr.bf16.mxu0 0
        %3987 = vmatpush1.bf16.msra.mxu0 %v3892
        %3988 = vmatprep.subr.bf16.mxu0 0
        %3989 = vmatpush1.bf16.msra.mxu0 %v3893
        %3990 = vmatprep.mubr.bf16.mxu0 %v3627
        %3991 = vmatmul.mubr.bf16.gmra.mrb[0].mxu0 %v3626
        %v3992 = vpop.f32.mrb[0].mxu0
        %v3993 = vadd.f32 %v3716, %v3992
        %v3994 = vpop.f32.mrb[0].mxu0
        %v3995 = vpop.f32.mrb[0].mxu0
        %v3996 = vpop.f32.mrb[0].mxu0
        %3997 = vdwg.mxu0
        %3998 = vmatprep.subr.bf16.mxu0 0
        %3999 = vmatpush1.bf16.msra.mxu0 %v3894
        %4000 = vmatprep.subr.bf16.mxu0 0
        %4001 = vmatpush1.bf16.msra.mxu0 %v3895
        %4002 = vmatprep.subr.bf16.mxu0 0
        %4003 = vmatpush1.bf16.msra.mxu0 %v3896
        %4004 = vmatprep.subr.bf16.mxu0 0
        %4005 = vmatpush1.bf16.msra.mxu0 %v3897
        %4006 = vmatprep.subr.bf16.mxu0 0
        %4007 = vmatpush1.bf16.msra.mxu0 %v3898
        %4008 = vmatprep.subr.bf16.mxu0 0
        %4009 = vmatpush1.bf16.msra.mxu0 %v3899
        %4010 = vmatprep.subr.bf16.mxu0 0
        %4011 = vmatpush1.bf16.msra.mxu0 %v3900
        %4012 = vmatprep.subr.bf16.mxu0 0
        %4013 = vmatpush1.bf16.msra.mxu0 %v3901
        %4014 = vmatprep.subr.bf16.mxu0 0
        %4015 = vmatpush1.bf16.msra.mxu0 %v3902
        %4016 = vmatprep.subr.bf16.mxu0 0
        %4017 = vmatpush1.bf16.msra.mxu0 %v3903
        %4018 = vmatprep.subr.bf16.mxu0 0
        %4019 = vmatpush1.bf16.msra.mxu0 %v3904
        %4020 = vmatprep.subr.bf16.mxu0 0
        %4021 = vmatpush1.bf16.msra.mxu0 %v3905
        %4022 = vmatprep.subr.bf16.mxu0 0
        %4023 = vmatpush1.bf16.msra.mxu0 %v3906
        %4024 = vmatprep.subr.bf16.mxu0 0
        %4025 = vmatpush1.bf16.msra.mxu0 %v3907
        %4026 = vmatprep.subr.bf16.mxu0 0
        %4027 = vmatpush1.bf16.msra.mxu0 %v3908
        %4028 = vmatprep.subr.bf16.mxu0 0
        %4029 = vmatpush1.bf16.msra.mxu0 %v3909
        %4030 = vmatprep.mubr.bf16.mxu0 %v3629
        %4031 = vmatmul.mubr.bf16.gmra.mrb[0].mxu0 %v3628
        %v4032 = vpop.f32.mrb[0].mxu0
        %v4033 = vadd.f32 %v3993, %v4032
        %v4034 = vpop.f32.mrb[0].mxu0
        %v4035 = vpop.f32.mrb[0].mxu0
        %v4036 = vpop.f32.mrb[0].mxu0
        %4037 = vdwg.mxu0
        %4038 = vmatprep.subr.bf16.mxu0 0
        %4039 = vmatpush1.bf16.msra.mxu0 %v3910
        %4040 = vmatprep.subr.bf16.mxu0 0
        %4041 = vmatpush1.bf16.msra.mxu0 %v3911
        %4042 = vmatprep.subr.bf16.mxu0 0
        %4043 = vmatpush1.bf16.msra.mxu0 %v3912
        %4044 = vmatprep.subr.bf16.mxu0 0
        %4045 = vmatpush1.bf16.msra.mxu0 %v3913
        %4046 = vmatprep.subr.bf16.mxu0 0
        %4047 = vmatpush1.bf16.msra.mxu0 %v3914
        %4048 = vmatprep.subr.bf16.mxu0 0
        %4049 = vmatpush1.bf16.msra.mxu0 %v3915
        %4050 = vmatprep.subr.bf16.mxu0 0
        %4051 = vmatpush1.bf16.msra.mxu0 %v3916
        %4052 = vmatprep.subr.bf16.mxu0 0
        %4053 = vmatpush1.bf16.msra.mxu0 %v3917
        %4054 = vmatprep.subr.bf16.mxu0 0
        %4055 = vmatpush1.bf16.msra.mxu0 0
        %4056 = vmatprep.subr.bf16.mxu0 0
        %4057 = vmatpush1.bf16.msra.mxu0 0
        %4058 = vmatprep.subr.bf16.mxu0 0
        %4059 = vmatpush1.bf16.msra.mxu0 0
        %4060 = vmatprep.subr.bf16.mxu0 0
        %4061 = vmatpush1.bf16.msra.mxu0 0
        %4062 = vmatprep.subr.bf16.mxu0 0
        %4063 = vmatpush1.bf16.msra.mxu0 0
        %4064 = vmatprep.subr.bf16.mxu0 0
        %4065 = vmatpush1.bf16.msra.mxu0 0
        %4066 = vmatprep.subr.bf16.mxu0 0
        %4067 = vmatpush1.bf16.msra.mxu0 0
        %4068 = vmatprep.subr.bf16.mxu0 0
        %4069 = vmatpush1.bf16.msra.mxu0 0
        %4070 = vmatprep.mubr.bf16.mxu0 0
        %4071 = vmatmul.mubr.bf16.gmra.mrb[0].mxu0 %v3630
        %v4072 = vpop.f32.mrb[0].mxu0
        %v4073 = vadd.f32 %v4033, %v4072
        %v4074 = vpop.f32.mrb[0].mxu0
        %v4075 = vpop.f32.mrb[0].mxu0
        %v4076 = vpop.f32.mrb[0].mxu0
        %4077 = vdwg.mxu0
        %v4078 = vmax.f32 %v4073, 0.0
        %v4079 = vpack.c.bf16 %v4078, %v4078
        %v4080 = vld [vmem:[%s7] sm:$0xf]
        %v4081 = vld [vmem:[%s7 + $0x4] sm:$0xf]
        %v4082 = vld [vmem:[%s7 + $0x8] sm:$0xf]
        %v4083 = vld [vmem:[%s7 + $0xc] sm:$0xf]
        %v4084 = vld [vmem:[%s7 + $0x10] sm:$0xf]
        %v4085 = vld [vmem:[%s7 + $0x14] sm:$0xf]
        %v4086 = vld [vmem:[%s7 + $0x18] sm:$0xf]
        %v4087 = vld [vmem:[%s7 + $0x1c] sm:$0xf]
        %v4088 = vld [vmem:[%s7 + $0x20] sm:$0xf]
        %v4089 = vld [vmem:[%s7 + $0x24] sm:$0xf]
        %v4090 = vld [vmem:[%s7 + $0x28] sm:$0xf]
        %v4091 = vld [vmem:[%s7 + $0x2c] sm:$0xf]
        %v4092 = vld [vmem:[%s7 + $0x30] sm:$0xf]
        %v4093 = vld [vmem:[%s7 + $0x34] sm:$0xf]
        %v4094 = vld [vmem:[%s7 + $0x38] sm:$0xf]
        %v4095 = vld [vmem:[%s7 + $0x3c] sm:$0xf]
        %v4096 = vld [vmem:[%s8] sm:$0x1]
        %v4098 = vlaneseq
        %v4099 = vshrl.u32 %v4098, 7
        %v4100 = vsub.s32 0, %v4099
        %v4101 = vrot.slane %v4096, %v4100
        %v4119 = vunpack.c.l.b16 %v4080
        %v4120 = vunpack.c.l.b16 %v4081
        %v4121 = vunpack.c.l.b16 %v4082
        %v4122 = vunpack.c.l.b16 %v4083
        %v4123 = vunpack.c.l.b16 %v4084
        %v4124 = vunpack.c.l.b16 %v4085
        %v4125 = vunpack.c.l.b16 %v4086
        %v4126 = vunpack.c.l.b16 %v4087
        %v4127 = vunpack.c.l.b16 %v4088
        %v4128 = vunpack.c.l.b16 %v4089
        %v4129 = vunpack.c.l.b16 %v4090
        %v4130 = vunpack.c.l.b16 %v4091
        %v4131 = vunpack.c.l.b16 %v4092
        %v4132 = vunpack.c.l.b16 %v4093
        %v4133 = vunpack.c.l.b16 %v4094
        %v4134 = vunpack.c.l.b16 %v4095
        %v4135 = vpack.c.b16 %v4120, %v4119
        %v4136 = vpack.c.b16 %v4122, %v4121
        %v4137 = vpack.c.b16 %v4124, %v4123
        %v4138 = vpack.c.b16 %v4126, %v4125
        %v4139 = vpack.c.b16 %v4128, %v4127
        %v4140 = vpack.c.b16 %v4130, %v4129
        %v4141 = vpack.c.b16 %v4132, %v4131
        %v4142 = vpack.c.b16 %v4134, %v4133
        %4151 = vmatprep.subr.bf16.mxu0 0
        %4152 = vmatpush1.bf16.msra.mxu0 %v4135
        %4153 = vmatprep.subr.bf16.mxu0 0
        %4154 = vmatpush1.bf16.msra.mxu0 %v4136
        %4155 = vmatprep.subr.bf16.mxu0 0
        %4156 = vmatpush1.bf16.msra.mxu0 %v4137
        %4157 = vmatprep.subr.bf16.mxu0 0
        %4158 = vmatpush1.bf16.msra.mxu0 %v4138
        %4159 = vmatprep.subr.bf16.mxu0 0
        %4160 = vmatpush1.bf16.msra.mxu0 %v4139
        %4161 = vmatprep.subr.bf16.mxu0 0
        %4162 = vmatpush1.bf16.msra.mxu0 %v4140
        %4163 = vmatprep.subr.bf16.mxu0 0
        %4164 = vmatpush1.bf16.msra.mxu0 %v4141
        %4165 = vmatprep.subr.bf16.mxu0 0
        %4166 = vmatpush1.bf16.msra.mxu0 %v4142
        %4167 = vmatprep.subr.bf16.mxu0 0
        %4168 = vmatpush1.bf16.msra.mxu0 0
        %4169 = vmatprep.subr.bf16.mxu0 0
        %4170 = vmatpush1.bf16.msra.mxu0 0
        %4171 = vmatprep.subr.bf16.mxu0 0
        %4172 = vmatpush1.bf16.msra.mxu0 0
        %4173 = vmatprep.subr.bf16.mxu0 0
        %4174 = vmatpush1.bf16.msra.mxu0 0
        %4175 = vmatprep.subr.bf16.mxu0 0
        %4176 = vmatpush1.bf16.msra.mxu0 0
        %4177 = vmatprep.subr.bf16.mxu0 0
        %4178 = vmatpush1.bf16.msra.mxu0 0
        %4179 = vmatprep.subr.bf16.mxu0 0
        %4180 = vmatpush1.bf16.msra.mxu0 0
        %4181 = vmatprep.subr.bf16.mxu0 0
        %4182 = vmatpush1.bf16.msra.mxu0 0
        %4183 = vmatprep.mubr.bf16.mxu0 0
        %4184 = vmatmul.mubr.bf16.gmra.mrb[0].mxu0 %v4079
        %v4185 = vpop.f32.mrb[0].mxu0
        %v4186 = vadd.f32 %v4101, %v4185
        %v4187 = vpop.f32.mrb[0].mxu0
        %v4188 = vpop.f32.mrb[0].mxu0
        %v4189 = vpop.f32.mrb[0].mxu0
        %4190 = vdwg.mxu0
        %v4191 = vmax.f32 %v4186, 0.0
        %v4192 = vpack.c.bf16 %v4191, %v4191
        %v4193 = vld [vmem:[%s9] sm:$0xf]
        %v4194 = vld [vmem:[%s9 + $0x4] sm:$0xf]
        %v4195 = vld [vmem:[%s9 + $0x8] sm:$0xf]
        %v4196 = vld [vmem:[%s9 + $0xc] sm:$0xf]
        %v4197 = vld [vmem:[%s9 + $0x10] sm:$0xf]
        %v4198 = vld [vmem:[%s9 + $0x14] sm:$0xf]
        %v4199 = vld [vmem:[%s9 + $0x18] sm:$0xf]
        %v4200 = vld [vmem:[%s9 + $0x1c] sm:$0xf]
        %v4201 = vld [vmem:[%s9 + $0x20] sm:$0xf]
        %v4202 = vld [vmem:[%s9 + $0x24] sm:$0xf]
        %v4203 = vld [vmem:[%s9 + $0x28] sm:$0xf]
        %v4204 = vld [vmem:[%s9 + $0x2c] sm:$0xf]
        %v4205 = vld [vmem:[%s9 + $0x30] sm:$0xf]
        %v4206 = vld [vmem:[%s9 + $0x34] sm:$0xf]
        %v4207 = vld [vmem:[%s9 + $0x38] sm:$0xf]
        %v4208 = vld [vmem:[%s9 + $0x3c] sm:$0xf]
        %v4209 = vld [vmem:[%s10] sm:$0x1]
        %v4211 = vlaneseq
        %v4212 = vshrl.u32 %v4211, 7
        %v4213 = vsub.s32 0, %v4212
        %v4214 = vrot.slane %v4209, %v4213
        %v4232 = vunpack.c.l.b16 %v4193
        %v4233 = vunpack.c.l.b16 %v4194
        %v4234 = vunpack.c.l.b16 %v4195
        %v4235 = vunpack.c.l.b16 %v4196
        %v4236 = vunpack.c.l.b16 %v4197
        %v4237 = vunpack.c.l.b16 %v4198
        %v4238 = vunpack.c.l.b16 %v4199
        %v4239 = vunpack.c.l.b16 %v4200
        %v4240 = vunpack.c.l.b16 %v4201
        %v4241 = vunpack.c.l.b16 %v4202
        %v4242 = vunpack.c.l.b16 %v4203
        %v4243 = vunpack.c.l.b16 %v4204
        %v4244 = vunpack.c.l.b16 %v4205
        %v4245 = vunpack.c.l.b16 %v4206
        %v4246 = vunpack.c.l.b16 %v4207
        %v4247 = vunpack.c.l.b16 %v4208
        %v4248 = vpack.c.b16 %v4233, %v4232
        %v4249 = vpack.c.b16 %v4235, %v4234
        %v4250 = vpack.c.b16 %v4237, %v4236
        %v4251 = vpack.c.b16 %v4239, %v4238
        %v4252 = vpack.c.b16 %v4241, %v4240
        %v4253 = vpack.c.b16 %v4243, %v4242
        %v4254 = vpack.c.b16 %v4245, %v4244
        %v4255 = vpack.c.b16 %v4247, %v4246
        %4264 = vmatprep.subr.bf16.mxu0 0
        %4265 = vmatpush1.bf16.msra.mxu0 %v4248
        %4266 = vmatprep.subr.bf16.mxu0 0
        %4267 = vmatpush1.bf16.msra.mxu0 %v4249
        %4268 = vmatprep.subr.bf16.mxu0 0
        %4269 = vmatpush1.bf16.msra.mxu0 %v4250
        %4270 = vmatprep.subr.bf16.mxu0 0
        %4271 = vmatpush1.bf16.msra.mxu0 %v4251
        %4272 = vmatprep.subr.bf16.mxu0 0
        %4273 = vmatpush1.bf16.msra.mxu0 %v4252
        %4274 = vmatprep.subr.bf16.mxu0 0
        %4275 = vmatpush1.bf16.msra.mxu0 %v4253
        %4276 = vmatprep.subr.bf16.mxu0 0
        %4277 = vmatpush1.bf16.msra.mxu0 %v4254
        %4278 = vmatprep.subr.bf16.mxu0 0
        %4279 = vmatpush1.bf16.msra.mxu0 %v4255
        %4280 = vmatprep.subr.bf16.mxu0 0
        %4281 = vmatpush1.bf16.msra.mxu0 0
        %4282 = vmatprep.subr.bf16.mxu0 0
        %4283 = vmatpush1.bf16.msra.mxu0 0
        %4284 = vmatprep.subr.bf16.mxu0 0
        %4285 = vmatpush1.bf16.msra.mxu0 0
        %4286 = vmatprep.subr.bf16.mxu0 0
        %4287 = vmatpush1.bf16.msra.mxu0 0
        %4288 = vmatprep.subr.bf16.mxu0 0
        %4289 = vmatpush1.bf16.msra.mxu0 0
        %4290 = vmatprep.subr.bf16.mxu0 0
        %4291 = vmatpush1.bf16.msra.mxu0 0
        %4292 = vmatprep.subr.bf16.mxu0 0
        %4293 = vmatpush1.bf16.msra.mxu0 0
        %4294 = vmatprep.subr.bf16.mxu0 0
        %4295 = vmatpush1.bf16.msra.mxu0 0
        %4296 = vmatprep.mubr.bf16.mxu0 0
        %4297 = vmatmul.mubr.bf16.gmra.mrb[0].mxu0 %v4192
        %v4298 = vpop.f32.mrb[0].mxu0
        %v4299 = vadd.f32 %v4214, %v4298
        %v4300 = vpop.f32.mrb[0].mxu0
        %v4301 = vpop.f32.mrb[0].mxu0
        %v4302 = vpop.f32.mrb[0].mxu0
        %4303 = vdwg.mxu0
        %4304 = vst [vmem:[%s379] sm:$0xff] %v4299
        %s4305 = sand.u32 %s269, 1
        %s4306 = scalar_lea.sflag [#allocation7], %s4305
        %s4307 = sand.u32 %s269, 1
        %s4308 = smul.addr %s4307, 8
        %s4309 = scalar_lea.vmem [#allocation6], %s4308
        // Predicated region
        $region65: #{convnet_forward.1} parent=63 // pred_check
          %p4310 = pneg %p279
        $region66: #{convnet_forward.1} parent=63 // pred_check_branch
          %4312 = sbr.rel (%p4310) target = $region68
        $region67: #{convnet_forward.1} parent=63 // pred_region
          %s4314 = ssub.s32 128, 128
          %4315 = vsyncadd %s4306, %s4314
          %s4316 = smul.addr %s25, 128
          %s4317 = scalar_lea.hbm %s11, %s4316
          %s4319 = sshll.u32 %s4309, 4
          %s4320 = int_to_ptr.vmem [resolvable:$true] %s4319
          %4322 = dma.vmem_to_hbm [thread:$0]  %s4320, 128, %s4317, %s4306
        $region68: #{convnet_forward.1} parent=63 // pred_fallthru
          _
      $region64: #{convnet_forward.1} parent=5 // pred_fallthru
        _
      %p4323 = scmp.le.s32.totalorder 2, %s20
      // Predicated region
      $region69: #{convnet_forward.1} parent=5 // pred_check
        %p4324 = pneg %p4323
      $region70: #{convnet_forward.1} parent=5 // pred_check_branch
        %4326 = sbr.rel (%p4324) target = $region72
      $region71: #{convnet_forward.1} parent=5 // pred_region
        %s4327 = ssub.s32 %s20, 2
        // Predicated region
        $region73: #{convnet_forward.1} parent=71 // pred_check
          %p4328 = pneg %p285
        $region74: #{convnet_forward.1} parent=71 // pred_check_branch
          %4330 = sbr.rel (%p4328) target = $region76
        $region75: #{convnet_forward.1} parent=71 // pred_region
          %s4331 = sand.u32 %s270, 1
          %s4332 = scalar_lea.sflag [#allocation7], %s4331
          %s4333 = sand.u32 %s270, 1
          %s4334 = smul.addr %s4333, 8
          %s4335 = scalar_lea.vmem [#allocation6], %s4334
          %4336 = dma.done %s4332, 128
        $region76: #{convnet_forward.1} parent=71 // pred_fallthru
          _
      $region72: #{convnet_forward.1} parent=5 // pred_fallthru
        _
    $region6: #{convnet_forward.1} parent=1 // loop_footer
      %s24 = sadd.s32 1, %s20
    $region7: #{convnet_forward.1} parent=1 // loop_footer_branch
      %19 = sbr.rel target = $region3
    $region8: #{convnet_forward.1} parent=1 // loop_exit
      _
    %4337 = vsyncpa [#allocation7], 1
    %s4338 = scalar_lea.sflag [#allocation7], 1
    %4339 = vsyncpa %s4338, 1

</llo_original>
